<compile_context>
chip_gen: v5e
topology: v5e:2x2
jax: 0.10.0
libtpu: 0.0.40
codegen_flags: <defaults>
</compile_context>

<pallas_src>
import numpy as np
import jax
import jax.numpy as jnp
from jax.experimental import pallas as pl
from jax.experimental.pallas import tpu as pltpu

jax.config.update("jax_default_matmul_precision", "highest")


# ----------------------------------------------------------------------------
# Fused kernel: NaN mask + input_fc + 2-layer tanh RNN + batched trend RNNs
#               + BandedFourierLayer (season), all per sequential grid step.
# ----------------------------------------------------------------------------
def _cost_encoder_kernel(x_ref, wfc_ref, bfc_ref,
                         wih0_ref, whh0_ref, b0_ref,
                         wih1_ref, whh1_ref, b1_ref,
                         wih_t_ref, whh_t_ref,
                         fc_ref, fs_ref, wr_t_ref, wi_t_ref, br_ref, bi_ref,
                         icr_t_ref, ici_t_ref,
                         trend_ref, season_ref,
                         h0_scr, h1_scr, ht_scr):
    s = pl.program_id(0)

    @pl.when(s == 0)
    def _init():
        h0_scr[...] = jnp.zeros_like(h0_scr)
        h1_scr[...] = jnp.zeros_like(h1_scr)
        ht_scr[...] = jnp.zeros_like(ht_scr)

    xv = x_ref[0]                                                   # (N, Din)
    # nan_mask = ~x.isnan().any(-1);  x[~nan_mask] = 0
    nan_row = jnp.max((xv != xv).astype(jnp.float32), axis=-1, keepdims=True) > 0.0
    valid = jnp.logical_not(nan_row)                                # (N, 1)
    xv = jnp.where(valid, xv, 0.0)

    # input_fc Linear; mask == 'all_true' & nan_mask -> zero NaN rows again.
    h = jnp.dot(xv, wfc_ref[...], preferred_element_type=jnp.float32) + bfc_ref[...]
    h = jnp.where(valid, h, 0.0)

    # 2-layer tanh RNN (nn.RNN(hidden, output, num_layers=2)); hidden states
    # carried across the sequential grid steps in VMEM scratch.
    h0 = jnp.tanh(jnp.dot(h, wih0_ref[...], preferred_element_type=jnp.float32)
                  + jnp.dot(h0_scr[...], whh0_ref[...], preferred_element_type=jnp.float32)
                  + b0_ref[...])
    h1 = jnp.tanh(jnp.dot(h0, wih1_ref[...], preferred_element_type=jnp.float32)
                  + jnp.dot(h1_scr[...], whh1_ref[...], preferred_element_type=jnp.float32)
                  + b1_ref[...])
    h0_scr[...] = h0
    h1_scr[...] = h1

    # ---- trend: K bias-free tanh RNNs batched into exactly two matmuls ----
    # (W_ih concatenated along output axis, W_hh block-diagonal).
    ht = jnp.tanh(jnp.dot(h1, wih_t_ref[...], preferred_element_type=jnp.float32)
                  + jnp.dot(ht_scr[...], whh_t_ref[...], preferred_element_type=jnp.float32))
    ht_scr[...] = ht
    C = trend_ref.shape[-1]
    K = ht.shape[-1] // C
    acc = ht[:, 0:C]
    for k in range(1, K):                                           # static lane slices
        acc = acc + ht[:, k * C:(k + 1) * C]
    trend_ref[0] = acc * (1.0 / K)

    # ---- season: BandedFourierLayer (band 0 of 1 == all frequencies) ----
    # rfft along the time axis of feats[s] == h1 as two (F, T) @ (T, Dout) matmuls.
    xr = jnp.dot(fc_ref[...], h1, preferred_element_type=jnp.float32)   # (F, Dout)
    xi = jnp.dot(fs_ref[...], h1, preferred_element_type=jnp.float32)
    # Per-frequency complex linear map O[f,c] = sum_d X[f,d] * W[f,d,c] + b[f,c]
    # done as VPU broadcast-multiply + minor-dim (lane) reduce; weights are
    # pre-transposed to (F, C, Dout) so no tiny per-frequency MXU matmuls.
    o_r = (jnp.sum(xr[:, None, :] * wr_t_ref[...], axis=-1)
           - jnp.sum(xi[:, None, :] * wi_t_ref[...], axis=-1) + br_ref[...])    # (F, C)
    o_i = (jnp.sum(xr[:, None, :] * wi_t_ref[...], axis=-1)
           + jnp.sum(xi[:, None, :] * wr_t_ref[...], axis=-1) + bi_ref[...])
    # irfft along the time axis as one (T, F) @ (F, C) matmul pair.
    season_ref[0] = (jnp.dot(icr_t_ref[...], o_r, preferred_element_type=jnp.float32)
                     + jnp.dot(ici_t_ref[...], o_i, preferred_element_type=jnp.float32))


# ----------------------------------------------------------------------------
# Wrapper
# ----------------------------------------------------------------------------
def cost_recurrent_encoder_forward(x, p):
    S, N, Din = x.shape
    H = p["wfc_t"].shape[1]
    Dout = p["wih0_t"].shape[1]
    K, _, C = p["wih_tfd_t"].shape
    F = p["fc"].shape[0]

    # One-time parameter re-layouts (constant-folded under jit):
    #  * K trend RNNs -> concatenated W_ih (Dout, K*C) + block-diagonal W_hh.
    #  * BandedFourier weights transposed to (F, C, Dout) for the in-kernel
    #    lane-dim contraction.
    wih_t_cat = jnp.transpose(p["wih_tfd_t"], (1, 0, 2)).reshape(Dout, K * C)
    whh_t_bd = jnp.zeros((K * C, K * C), jnp.float32)
    for k in range(K):
        whh_t_bd = whh_t_bd.at[k * C:(k + 1) * C, k * C:(k + 1) * C].set(p["whh_tfd_t"][k])
    wr_t = jnp.transpose(p["wr"], (0, 2, 1))
    wi_t = jnp.transpose(p["wi"], (0, 2, 1))

    trend, season = pl.pallas_call(
        _cost_encoder_kernel,
        grid=(S,),
        in_specs=[
            pl.BlockSpec((1, N, Din), lambda s: (s, 0, 0)),
            pl.BlockSpec((Din, H), lambda s: (0, 0)),
            pl.BlockSpec((1, H), lambda s: (0, 0)),
            pl.BlockSpec((H, Dout), lambda s: (0, 0)),
            pl.BlockSpec((Dout, Dout), lambda s: (0, 0)),
            pl.BlockSpec((1, Dout), lambda s: (0, 0)),
            pl.BlockSpec((Dout, Dout), lambda s: (0, 0)),
            pl.BlockSpec((Dout, Dout), lambda s: (0, 0)),
            pl.BlockSpec((1, Dout), lambda s: (0, 0)),
            pl.BlockSpec((Dout, K * C), lambda s: (0, 0)),
            pl.BlockSpec((K * C, K * C), lambda s: (0, 0)),
            pl.BlockSpec((F, N), lambda s: (0, 0)),
            pl.BlockSpec((F, N), lambda s: (0, 0)),
            pl.BlockSpec((F, C, Dout), lambda s: (0, 0, 0)),
            pl.BlockSpec((F, C, Dout), lambda s: (0, 0, 0)),
            pl.BlockSpec((F, C), lambda s: (0, 0)),
            pl.BlockSpec((F, C), lambda s: (0, 0)),
            pl.BlockSpec((N, F), lambda s: (0, 0)),
            pl.BlockSpec((N, F), lambda s: (0, 0)),
        ],
        out_specs=(
            pl.BlockSpec((1, N, C), lambda s: (s, 0, 0)),
            pl.BlockSpec((1, N, C), lambda s: (s, 0, 0)),
        ),
        out_shape=(
            jax.ShapeDtypeStruct((S, N, C), jnp.float32),
            jax.ShapeDtypeStruct((S, N, C), jnp.float32),
        ),
        scratch_shapes=[
            pltpu.VMEM((N, Dout), jnp.float32),     # layer-0 hidden
            pltpu.VMEM((N, Dout), jnp.float32),     # layer-1 hidden (feats[s])
            pltpu.VMEM((N, K * C), jnp.float32),    # batched tfd hiddens
        ],
        # NOTE: must stay "arbitrary" (sequential) — the recurrence is carried
        # in scratch; never mark this axis "parallel".
        compiler_params=pltpu.CompilerParams(dimension_semantics=("arbitrary",)),
    )(x, p["wfc_t"], p["bfc"], p["wih0_t"], p["whh0_t"], p["b0"],
      p["wih1_t"], p["whh1_t"], p["b1"], wih_t_cat, whh_t_bd,
      p["fc"], p["fs"], wr_t, wi_t, p["br"], p["bi"],
      p["icr_t"], p["ici_t"])

    # repr_dropout (p=0.1) is the identity in eval mode.
    # TODO(synk): training-mode dropout / binomial|continuous mask generation,
    # the tcn_output early-return and the lstm/gru architecture variants are
    # not implemented (this covers architecture='rnn' inference).
    return trend, season


# ----------------------------------------------------------------------------
# Deterministic parameter construction (shapes per the module __init__)
# ----------------------------------------------------------------------------
def init_params(key, input_dims, hidden_dims, output_dims, component_dims,
                num_kernels, length):
    ks = jax.random.split(key, 16)

    def u(k, shape, fan_in):
        s = 1.0 / np.sqrt(fan_in)
        return jax.random.uniform(k, shape, jnp.float32, -s, s)

    Din, H, Dout, C, K = input_dims, hidden_dims, output_dims, component_dims, num_kernels
    p = {}
    # nn.Linear(input_dims, hidden_dims) -- stored transposed (Din, H)
    p["wfc_t"] = u(ks[0], (Din, H), Din)
    p["bfc"] = u(ks[1], (1, H), Din)
    # nn.RNN(hidden_dims, output_dims, num_layers=2), tanh, bias=True
    p["wih0_t"] = u(ks[2], (H, Dout), Dout)
    p["whh0_t"] = u(ks[3], (Dout, Dout), Dout)
    p["b0"] = u(ks[4], (1, Dout), Dout) + u(ks[5], (1, Dout), Dout)   # b_ih + b_hh
    p["wih1_t"] = u(ks[6], (Dout, Dout), Dout)
    p["whh1_t"] = u(ks[7], (Dout, Dout), Dout)
    p["b1"] = u(ks[8], (1, Dout), Dout) + u(ks[9], (1, Dout), Dout)
    # tfd: one single-layer bias-free tanh RNN per entry of `kernels`
    # (nn.RNN(output_dims, component_dims, 1, False))
    p["wih_tfd_t"] = u(ks[10], (K, Dout, C), C)
    p["whh_tfd_t"] = u(ks[11], (K, C, C), C)
    # sfd[0]: BandedFourierLayer(output_dims, component_dims, 0, 1, length)
    F = length // 2 + 1
    p["wr"] = u(ks[12], (F, Dout, C), Dout)
    p["wi"] = u(ks[13], (F, Dout, C), Dout)
    p["br"] = u(ks[14], (F, C), Dout)
    p["bi"] = u(ks[15], (F, C), Dout)
    # Fixed DFT matrices implementing rfft / irfft (length == T).
    t = np.arange(length)[None, :]
    f = np.arange(F)[:, None]
    ang = 2.0 * np.pi * f * t / length                     # (F, T)
    p["fc"] = jnp.asarray(np.cos(ang), jnp.float32)        # Re of forward DFT
    p["fs"] = jnp.asarray(-np.sin(ang), jnp.float32)       # Im of forward DFT
    w = np.full((F, 1), 2.0)
    w[0, 0] = 1.0
    if length % 2 == 0:
        w[-1, 0] = 1.0
    p["icr_t"] = jnp.asarray((w / length * np.cos(ang)).T, jnp.float32)    # (T, F)
    p["ici_t"] = jnp.asarray((-w / length * np.sin(ang)).T, jnp.float32)   # (T, F)
    return p


# ----------------------------------------------------------------------------
# Pure-JAX reference (mirrors the PyTorch forward, eval mode)
# ----------------------------------------------------------------------------
def _rnn_ref(x_seq, wih_t, whh_t, b):
    S, N, _ = x_seq.shape
    Dh = wih_t.shape[1]
    h = jnp.zeros((N, Dh), jnp.float32)
    outs = []
    for s in range(S):
        h = jnp.tanh(x_seq[s] @ wih_t + h @ whh_t + b)
        outs.append(h)
    return jnp.stack(outs, axis=0)


def reference_forward(x, p):
    nan_row = jnp.any(jnp.isnan(x), axis=-1, keepdims=True)
    x0 = jnp.where(nan_row, 0.0, x)
    h = x0 @ p["wfc_t"] + p["bfc"]
    h = jnp.where(nan_row, 0.0, h)
    l0 = _rnn_ref(h, p["wih0_t"], p["whh0_t"], p["b0"])
    feats = _rnn_ref(l0, p["wih1_t"], p["whh1_t"], p["b1"])
    K = p["wih_tfd_t"].shape[0]
    trends = [_rnn_ref(feats, p["wih_tfd_t"][k], p["whh_tfd_t"][k], 0.0) for k in range(K)]
    trend = jnp.mean(jnp.stack(trends, 0), axis=0)
    T = feats.shape[1]
    Xf = jnp.fft.rfft(feats, axis=1)
    Wc = p["wr"] + 1j * p["wi"]
    Bc = p["br"] + 1j * p["bi"]
    Of = jnp.einsum("bfi,fio->bfo", Xf, Wc) + Bc
    season = jnp.fft.irfft(Of, n=T, axis=1)
    return trend, season


if __name__ == "__main__":
    # Module config (small): input_dims=8, output_dims=16 -> component_dims=8,
    # hidden_dims=32, kernels=[1,2,4], length=T=8, architecture='rnn'.
    B, T = 2, 8
    input_dims, hidden_dims, output_dims = 8, 32, 16
    component_dims = output_dims // 2
    kernels = [1, 2, 4]
    length = T

    root = jax.random.PRNGKey(0)
    k_params, k_x = jax.random.split(root)
    params = init_params(k_params, input_dims, hidden_dims, output_dims,
                         component_dims, len(kernels), length)

    x = jax.random.normal(k_x, (B, T, input_dims), jnp.float32)
    # exercise the NaN-masking path
    x = x.at[0, 3, 2].set(jnp.nan)
    x = x.at[1, 6, :].set(jnp.nan)

    fwd = jax.jit(lambda xx: cost_recurrent_encoder_forward(xx, params))
    trend, season = fwd(x)
    jax.block_until_ready((trend, season))

    t_ref, s_ref = reference_forward(x, params)
    assert trend.shape == (B, T, component_dims)
    assert season.shape == (B, T, component_dims)
    np.testing.assert_allclose(np.asarray(trend), np.asarray(t_ref), rtol=2e-2, atol=2e-2)
    np.testing.assert_allclose(np.asarray(season), np.asarray(s_ref), rtol=2e-2, atol=2e-2)
    print("KERNEL_OK")
</pallas_src>

<mosaic_0001>
module attributes {stable_mosaic.version = 11 : i64} {
  func.func @_cost_encoder_kernel(%arg0: i32, %arg1: memref<1x8x8xf32, #tpu.memory_space<vmem>>, %arg2: memref<8x32xf32, #tpu.memory_space<vmem>>, %arg3: memref<1x32xf32, #tpu.memory_space<vmem>>, %arg4: memref<32x16xf32, #tpu.memory_space<vmem>>, %arg5: memref<16x16xf32, #tpu.memory_space<vmem>>, %arg6: memref<1x16xf32, #tpu.memory_space<vmem>>, %arg7: memref<16x16xf32, #tpu.memory_space<vmem>>, %arg8: memref<16x16xf32, #tpu.memory_space<vmem>>, %arg9: memref<1x16xf32, #tpu.memory_space<vmem>>, %arg10: memref<16x24xf32, #tpu.memory_space<vmem>>, %arg11: memref<24x24xf32, #tpu.memory_space<vmem>>, %arg12: memref<5x8xf32, #tpu.memory_space<vmem>>, %arg13: memref<5x8xf32, #tpu.memory_space<vmem>>, %arg14: memref<5x8x16xf32, #tpu.memory_space<vmem>>, %arg15: memref<5x8x16xf32, #tpu.memory_space<vmem>>, %arg16: memref<5x8xf32, #tpu.memory_space<vmem>>, %arg17: memref<5x8xf32, #tpu.memory_space<vmem>>, %arg18: memref<8x5xf32, #tpu.memory_space<vmem>>, %arg19: memref<8x5xf32, #tpu.memory_space<vmem>>, %arg20: memref<1x8x8xf32, #tpu.memory_space<vmem>>, %arg21: memref<1x8x8xf32, #tpu.memory_space<vmem>>, %arg22: memref<8x16xf32, #tpu.memory_space<vmem>>, %arg23: memref<8x16xf32, #tpu.memory_space<vmem>>, %arg24: memref<8x24xf32, #tpu.memory_space<vmem>>) attributes {dimension_semantics = [#tpu.dimension_semantics<arbitrary>], iteration_bounds = array<i64: 2>, scalar_prefetch = 0 : i64, scratch_operands = 3 : i64, tpu.core_type = #tpu.core_type<tc>, window_params = [{transform_indices = @transform_0, window_bounds = array<i64: 1, 8, 8>}, {pipeline_mode = #tpu.pipeline_mode<synchronous>, transform_indices = @transform_1, window_bounds = array<i64: 8, 32>}, {pipeline_mode = #tpu.pipeline_mode<synchronous>, transform_indices = @transform_2, window_bounds = array<i64: 1, 32>}, {pipeline_mode = #tpu.pipeline_mode<synchronous>, transform_indices = @transform_3, window_bounds = array<i64: 32, 16>}, {pipeline_mode = #tpu.pipeline_mode<synchronous>, transform_indices = @transform_4, window_bounds = array<i64: 16, 16>}, {pipeline_mode = #tpu.pipeline_mode<synchronous>, transform_indices = @transform_5, window_bounds = array<i64: 1, 16>}, {pipeline_mode = #tpu.pipeline_mode<synchronous>, transform_indices = @transform_6, window_bounds = array<i64: 16, 16>}, {pipeline_mode = #tpu.pipeline_mode<synchronous>, transform_indices = @transform_7, window_bounds = array<i64: 16, 16>}, {pipeline_mode = #tpu.pipeline_mode<synchronous>, transform_indices = @transform_8, window_bounds = array<i64: 1, 16>}, {pipeline_mode = #tpu.pipeline_mode<synchronous>, transform_indices = @transform_9, window_bounds = array<i64: 16, 24>}, {pipeline_mode = #tpu.pipeline_mode<synchronous>, transform_indices = @transform_10, window_bounds = array<i64: 24, 24>}, {pipeline_mode = #tpu.pipeline_mode<synchronous>, transform_indices = @transform_11, window_bounds = array<i64: 5, 8>}, {pipeline_mode = #tpu.pipeline_mode<synchronous>, transform_indices = @transform_12, window_bounds = array<i64: 5, 8>}, {pipeline_mode = #tpu.pipeline_mode<synchronous>, transform_indices = @transform_13, window_bounds = array<i64: 5, 8, 16>}, {pipeline_mode = #tpu.pipeline_mode<synchronous>, transform_indices = @transform_14, window_bounds = array<i64: 5, 8, 16>}, {pipeline_mode = #tpu.pipeline_mode<synchronous>, transform_indices = @transform_15, window_bounds = array<i64: 5, 8>}, {pipeline_mode = #tpu.pipeline_mode<synchronous>, transform_indices = @transform_16, window_bounds = array<i64: 5, 8>}, {pipeline_mode = #tpu.pipeline_mode<synchronous>, transform_indices = @transform_17, window_bounds = array<i64: 8, 5>}, {pipeline_mode = #tpu.pipeline_mode<synchronous>, transform_indices = @transform_18, window_bounds = array<i64: 8, 5>}, {transform_indices = @transform_19, window_bounds = array<i64: 1, 8, 8>}, {transform_indices = @transform_20, window_bounds = array<i64: 1, 8, 8>}]} {
    %c0_i32 = arith.constant 0 : i32
    %0 = arith.cmpi eq, %arg0, %c0_i32 : i32
    %1 = arith.extui %0 : i1 to i32
    %c0_i32_0 = arith.constant 0 : i32
    %2 = arith.cmpi ne, %1, %c0_i32_0 : i32
    scf.if %2 {
      %cst_85 = arith.constant 0.000000e+00 : f32
      %104 = vector.broadcast %cst_85 : f32 to vector<8x16xf32>
      %c0_86 = arith.constant 0 : index
      %c0_87 = arith.constant 0 : index
      %105 = vector.load %arg22[%c0_86, %c0_87] : memref<8x16xf32, #tpu.memory_space<vmem>>, vector<8x16xf32>
      tpu.vector_store %arg22[%c0_86, %c0_87], %104 {strides = array<i32>} : memref<8x16xf32, #tpu.memory_space<vmem>>, vector<8x16xf32>,
      %cst_88 = arith.constant 0.000000e+00 : f32
      %106 = vector.broadcast %cst_88 : f32 to vector<8x16xf32>
      %c0_89 = arith.constant 0 : index
      %c0_90 = arith.constant 0 : index
      %107 = vector.load %arg23[%c0_89, %c0_90] : memref<8x16xf32, #tpu.memory_space<vmem>>, vector<8x16xf32>
      tpu.vector_store %arg23[%c0_89, %c0_90], %106 {strides = array<i32>} : memref<8x16xf32, #tpu.memory_space<vmem>>, vector<8x16xf32>,
      %cst_91 = arith.constant 0.000000e+00 : f32
      %108 = vector.broadcast %cst_91 : f32 to vector<8x24xf32>
      %c0_92 = arith.constant 0 : index
      %c0_93 = arith.constant 0 : index
      %109 = vector.load %arg24[%c0_92, %c0_93] : memref<8x24xf32, #tpu.memory_space<vmem>>, vector<8x24xf32>
      tpu.vector_store %arg24[%c0_92, %c0_93], %108 {strides = array<i32>} : memref<8x24xf32, #tpu.memory_space<vmem>>, vector<8x24xf32>,
    } else {
    }
    %c0 = arith.constant 0 : index
    %c0_1 = arith.constant 0 : index
    %c0_2 = arith.constant 0 : index
    %3 = vector.load %arg1[%c0, %c0_1, %c0_2] : memref<1x8x8xf32, #tpu.memory_space<vmem>>, vector<1x8x8xf32>
    %4 = vector.shape_cast %3 : vector<1x8x8xf32> to vector<8x8xf32>
    %5 = arith.cmpf one, %4, %4 : vector<8x8xf32>
    %6 = arith.extui %5 : vector<8x8xi1> to vector<8x8xi32>
    %7 = arith.sitofp %6 : vector<8x8xi32> to vector<8x8xf32>
    %cst = arith.constant dense<0xFF800000> : vector<8xf32>
    %8 = vector.multi_reduction <maximumf>, %7, %cst [1] : vector<8x8xf32> to vector<8xf32>
    %9 = vector.shape_cast %8 : vector<8xf32> to vector<8x1xf32>
    %cst_3 = arith.constant 0.000000e+00 : f32
    %10 = vector.broadcast %cst_3 : f32 to vector<8x1xf32>
    %11 = arith.cmpf ogt, %9, %10 : vector<8x1xf32>
    %cst_4 = arith.constant dense<true> : vector<8x1xi1>
    %12 = arith.xori %11, %cst_4 : vector<8x1xi1>
    %cst_5 = arith.constant 0.000000e+00 : f32
    %13 = vector.shape_cast %12 : vector<8x1xi1> to vector<8x1xi1>
    %14 = vector.broadcast %13 : vector<8x1xi1> to vector<8x8xi1>
    %15 = vector.broadcast %cst_5 : f32 to vector<8x8xf32>
    %16 = arith.select %14, %4, %15 : vector<8x8xi1>, vector<8x8xf32>
    %c0_6 = arith.constant 0 : index
    %c0_7 = arith.constant 0 : index
    %17 = vector.load %arg2[%c0_6, %c0_7] : memref<8x32xf32, #tpu.memory_space<vmem>>, vector<8x32xf32>
    %cst_8 = arith.constant dense<0.000000e+00> : vector<8x32xf32>
    %18 = tpu.matmul %16, %17, %cst_8 {dimension_numbers = #tpu.dot_dimension_numbers<[1], [0], [0], [1], [0, 0, 1, 1], [], []>, precision = #tpu.contract_precision<fp32>} : vector<8x8xf32>, vector<8x32xf32>, vector<8x32xf32> -> vector<8x32xf32>
    %c0_9 = arith.constant 0 : index
    %c0_10 = arith.constant 0 : index
    %19 = vector.load %arg3[%c0_9, %c0_10] : memref<1x32xf32, #tpu.memory_space<vmem>>, vector<1x32xf32>
    %20 = vector.broadcast %19 : vector<1x32xf32> to vector<8x32xf32>
    %21 = arith.addf %18, %20 : vector<8x32xf32>
    %cst_11 = arith.constant 0.000000e+00 : f32
    %22 = vector.shape_cast %12 : vector<8x1xi1> to vector<8x1xi1>
    %23 = vector.broadcast %22 : vector<8x1xi1> to vector<8x32xi1>
    %24 = vector.broadcast %cst_11 : f32 to vector<8x32xf32>
    %25 = arith.select %23, %21, %24 : vector<8x32xi1>, vector<8x32xf32>
    %c0_12 = arith.constant 0 : index
    %c0_13 = arith.constant 0 : index
    %26 = vector.load %arg4[%c0_12, %c0_13] : memref<32x16xf32, #tpu.memory_space<vmem>>, vector<32x16xf32>
    %cst_14 = arith.constant dense<0.000000e+00> : vector<8x16xf32>
    %27 = tpu.matmul %25, %26, %cst_14 {dimension_numbers = #tpu.dot_dimension_numbers<[1], [0], [0], [1], [0, 0, 1, 1], [], []>, precision = #tpu.contract_precision<fp32>} : vector<8x32xf32>, vector<32x16xf32>, vector<8x16xf32> -> vector<8x16xf32>
    %c0_15 = arith.constant 0 : index
    %c0_16 = arith.constant 0 : index
    %28 = vector.load %arg22[%c0_15, %c0_16] : memref<8x16xf32, #tpu.memory_space<vmem>>, vector<8x16xf32>
    %c0_17 = arith.constant 0 : index
    %c0_18 = arith.constant 0 : index
    %29 = vector.load %arg5[%c0_17, %c0_18] : memref<16x16xf32, #tpu.memory_space<vmem>>, vector<16x16xf32>
    %cst_19 = arith.constant dense<0.000000e+00> : vector<8x16xf32>
    %30 = tpu.matmul %28, %29, %cst_19 {dimension_numbers = #tpu.dot_dimension_numbers<[1], [0], [0], [1], [0, 0, 1, 1], [], []>, precision = #tpu.contract_precision<fp32>} : vector<8x16xf32>, vector<16x16xf32>, vector<8x16xf32> -> vector<8x16xf32>
    %31 = arith.addf %27, %30 : vector<8x16xf32>
    %c0_20 = arith.constant 0 : index
    %c0_21 = arith.constant 0 : index
    %32 = vector.load %arg6[%c0_20, %c0_21] : memref<1x16xf32, #tpu.memory_space<vmem>>, vector<1x16xf32>
    %33 = vector.broadcast %32 : vector<1x16xf32> to vector<8x16xf32>
    %34 = arith.addf %31, %33 : vector<8x16xf32>
    %35 = math.tanh %34 : vector<8x16xf32>
    %c0_22 = arith.constant 0 : index
    %c0_23 = arith.constant 0 : index
    %36 = vector.load %arg7[%c0_22, %c0_23] : memref<16x16xf32, #tpu.memory_space<vmem>>, vector<16x16xf32>
    %cst_24 = arith.constant dense<0.000000e+00> : vector<8x16xf32>
    %37 = tpu.matmul %35, %36, %cst_24 {dimension_numbers = #tpu.dot_dimension_numbers<[1], [0], [0], [1], [0, 0, 1, 1], [], []>, precision = #tpu.contract_precision<fp32>} : vector<8x16xf32>, vector<16x16xf32>, vector<8x16xf32> -> vector<8x16xf32>
    %c0_25 = arith.constant 0 : index
    %c0_26 = arith.constant 0 : index
    %38 = vector.load %arg23[%c0_25, %c0_26] : memref<8x16xf32, #tpu.memory_space<vmem>>, vector<8x16xf32>
    %c0_27 = arith.constant 0 : index
    %c0_28 = arith.constant 0 : index
    %39 = vector.load %arg8[%c0_27, %c0_28] : memref<16x16xf32, #tpu.memory_space<vmem>>, vector<16x16xf32>
    %cst_29 = arith.constant dense<0.000000e+00> : vector<8x16xf32>
    %40 = tpu.matmul %38, %39, %cst_29 {dimension_numbers = #tpu.dot_dimension_numbers<[1], [0], [0], [1], [0, 0, 1, 1], [], []>, precision = #tpu.contract_precision<fp32>} : vector<8x16xf32>, vector<16x16xf32>, vector<8x16xf32> -> vector<8x16xf32>
    %41 = arith.addf %37, %40 : vector<8x16xf32>
    %c0_30 = arith.constant 0 : index
    %c0_31 = arith.constant 0 : index
    %42 = vector.load %arg9[%c0_30, %c0_31] : memref<1x16xf32, #tpu.memory_space<vmem>>, vector<1x16xf32>
    %43 = vector.broadcast %42 : vector<1x16xf32> to vector<8x16xf32>
    %44 = arith.addf %41, %43 : vector<8x16xf32>
    %45 = math.tanh %44 : vector<8x16xf32>
    %c0_32 = arith.constant 0 : index
    %c0_33 = arith.constant 0 : index
    %46 = vector.load %arg22[%c0_32, %c0_33] : memref<8x16xf32, #tpu.memory_space<vmem>>, vector<8x16xf32>
    tpu.vector_store %arg22[%c0_32, %c0_33], %35 {strides = array<i32>} : memref<8x16xf32, #tpu.memory_space<vmem>>, vector<8x16xf32>,
    %c0_34 = arith.constant 0 : index
    %c0_35 = arith.constant 0 : index
    %47 = vector.load %arg23[%c0_34, %c0_35] : memref<8x16xf32, #tpu.memory_space<vmem>>, vector<8x16xf32>
    tpu.vector_store %arg23[%c0_34, %c0_35], %45 {strides = array<i32>} : memref<8x16xf32, #tpu.memory_space<vmem>>, vector<8x16xf32>,
    %c0_36 = arith.constant 0 : index
    %c0_37 = arith.constant 0 : index
    %48 = vector.load %arg10[%c0_36, %c0_37] : memref<16x24xf32, #tpu.memory_space<vmem>>, vector<16x24xf32>
    %cst_38 = arith.constant dense<0.000000e+00> : vector<8x24xf32>
    %49 = tpu.matmul %45, %48, %cst_38 {dimension_numbers = #tpu.dot_dimension_numbers<[1], [0], [0], [1], [0, 0, 1, 1], [], []>, precision = #tpu.contract_precision<fp32>} : vector<8x16xf32>, vector<16x24xf32>, vector<8x24xf32> -> vector<8x24xf32>
    %c0_39 = arith.constant 0 : index
    %c0_40 = arith.constant 0 : index
    %50 = vector.load %arg24[%c0_39, %c0_40] : memref<8x24xf32, #tpu.memory_space<vmem>>, vector<8x24xf32>
    %c0_41 = arith.constant 0 : index
    %c0_42 = arith.constant 0 : index
    %51 = vector.load %arg11[%c0_41, %c0_42] : memref<24x24xf32, #tpu.memory_space<vmem>>, vector<24x24xf32>
    %cst_43 = arith.constant dense<0.000000e+00> : vector<8x24xf32>
    %52 = tpu.matmul %50, %51, %cst_43 {dimension_numbers = #tpu.dot_dimension_numbers<[1], [0], [0], [1], [0, 0, 1, 1], [], []>, precision = #tpu.contract_precision<fp32>} : vector<8x24xf32>, vector<24x24xf32>, vector<8x24xf32> -> vector<8x24xf32>
    %53 = arith.addf %49, %52 : vector<8x24xf32>
    %54 = math.tanh %53 : vector<8x24xf32>
    %c0_44 = arith.constant 0 : index
    %c0_45 = arith.constant 0 : index
    %55 = vector.load %arg24[%c0_44, %c0_45] : memref<8x24xf32, #tpu.memory_space<vmem>>, vector<8x24xf32>
    tpu.vector_store %arg24[%c0_44, %c0_45], %54 {strides = array<i32>} : memref<8x24xf32, #tpu.memory_space<vmem>>, vector<8x24xf32>,
    %56 = vector.extract_strided_slice %54 {offsets = [0, 0], sizes = [8, 8], strides = [1, 1]} : vector<8x24xf32> to vector<8x8xf32>
    %57 = vector.extract_strided_slice %54 {offsets = [0, 8], sizes = [8, 8], strides = [1, 1]} : vector<8x24xf32> to vector<8x8xf32>
    %58 = arith.addf %56, %57 : vector<8x8xf32>
    %59 = vector.extract_strided_slice %54 {offsets = [0, 16], sizes = [8, 8], strides = [1, 1]} : vector<8x24xf32> to vector<8x8xf32>
    %60 = arith.addf %58, %59 : vector<8x8xf32>
    %cst_46 = arith.constant 0.333333343 : f32
    %61 = vector.broadcast %cst_46 : f32 to vector<8x8xf32>
    %62 = arith.mulf %60, %61 : vector<8x8xf32>
    %c0_47 = arith.constant 0 : index
    %c0_48 = arith.constant 0 : index
    %c0_49 = arith.constant 0 : index
    %63 = vector.load %arg20[%c0_47, %c0_48, %c0_49] : memref<1x8x8xf32, #tpu.memory_space<vmem>>, vector<1x8x8xf32>
    %64 = vector.shape_cast %63 : vector<1x8x8xf32> to vector<8x8xf32>
    %65 = vector.shape_cast %62 : vector<8x8xf32> to vector<1x8x8xf32>
    tpu.vector_store %arg20[%c0_47, %c0_48, %c0_49], %65 {strides = array<i32>} : memref<1x8x8xf32, #tpu.memory_space<vmem>>, vector<1x8x8xf32>,
    %c0_50 = arith.constant 0 : index
    %c0_51 = arith.constant 0 : index
    %66 = vector.load %arg12[%c0_50, %c0_51] : memref<5x8xf32, #tpu.memory_space<vmem>>, vector<5x8xf32>
    %cst_52 = arith.constant dense<0.000000e+00> : vector<5x16xf32>
    %67 = tpu.matmul %66, %45, %cst_52 {dimension_numbers = #tpu.dot_dimension_numbers<[1], [0], [0], [1], [0, 0, 1, 1], [], []>, precision = #tpu.contract_precision<fp32>} : vector<5x8xf32>, vector<8x16xf32>, vector<5x16xf32> -> vector<5x16xf32>
    %c0_53 = arith.constant 0 : index
    %c0_54 = arith.constant 0 : index
    %68 = vector.load %arg13[%c0_53, %c0_54] : memref<5x8xf32, #tpu.memory_space<vmem>>, vector<5x8xf32>
    %cst_55 = arith.constant dense<0.000000e+00> : vector<5x16xf32>
    %69 = tpu.matmul %68, %45, %cst_55 {dimension_numbers = #tpu.dot_dimension_numbers<[1], [0], [0], [1], [0, 0, 1, 1], [], []>, precision = #tpu.contract_precision<fp32>} : vector<5x8xf32>, vector<8x16xf32>, vector<5x16xf32> -> vector<5x16xf32>
    %70 = vector.shape_cast %67 : vector<5x16xf32> to vector<5x1x16xf32>
    %c0_56 = arith.constant 0 : index
    %c0_57 = arith.constant 0 : index
    %c0_58 = arith.constant 0 : index
    %71 = vector.load %arg14[%c0_56, %c0_57, %c0_58] : memref<5x8x16xf32, #tpu.memory_space<vmem>>, vector<5x8x16xf32>
    %72 = vector.broadcast %70 : vector<5x1x16xf32> to vector<5x8x16xf32>
    %73 = arith.mulf %72, %71 : vector<5x8x16xf32>
    %cst_59 = arith.constant dense<0.000000e+00> : vector<5x8xf32>
    %74 = vector.multi_reduction <add>, %73, %cst_59 [2] : vector<5x8x16xf32> to vector<5x8xf32>
    %75 = vector.shape_cast %69 : vector<5x16xf32> to vector<5x1x16xf32>
    %c0_60 = arith.constant 0 : index
    %c0_61 = arith.constant 0 : index
    %c0_62 = arith.constant 0 : index
    %76 = vector.load %arg15[%c0_60, %c0_61, %c0_62] : memref<5x8x16xf32, #tpu.memory_space<vmem>>, vector<5x8x16xf32>
    %77 = vector.broadcast %75 : vector<5x1x16xf32> to vector<5x8x16xf32>
    %78 = arith.mulf %77, %76 : vector<5x8x16xf32>
    %cst_63 = arith.constant dense<0.000000e+00> : vector<5x8xf32>
    %79 = vector.multi_reduction <add>, %78, %cst_63 [2] : vector<5x8x16xf32> to vector<5x8xf32>
    %80 = arith.subf %74, %79 : vector<5x8xf32>
    %c0_64 = arith.constant 0 : index
    %c0_65 = arith.constant 0 : index
    %81 = vector.load %arg16[%c0_64, %c0_65] : memref<5x8xf32, #tpu.memory_space<vmem>>, vector<5x8xf32>
    %82 = arith.addf %80, %81 : vector<5x8xf32>
    %83 = vector.shape_cast %67 : vector<5x16xf32> to vector<5x1x16xf32>
    %c0_66 = arith.constant 0 : index
    %c0_67 = arith.constant 0 : index
    %c0_68 = arith.constant 0 : index
    %84 = vector.load %arg15[%c0_66, %c0_67, %c0_68] : memref<5x8x16xf32, #tpu.memory_space<vmem>>, vector<5x8x16xf32>
    %85 = vector.broadcast %83 : vector<5x1x16xf32> to vector<5x8x16xf32>
    %86 = arith.mulf %85, %84 : vector<5x8x16xf32>
    %cst_69 = arith.constant dense<0.000000e+00> : vector<5x8xf32>
    %87 = vector.multi_reduction <add>, %86, %cst_69 [2] : vector<5x8x16xf32> to vector<5x8xf32>
    %88 = vector.shape_cast %69 : vector<5x16xf32> to vector<5x1x16xf32>
    %c0_70 = arith.constant 0 : index
    %c0_71 = arith.constant 0 : index
    %c0_72 = arith.constant 0 : index
    %89 = vector.load %arg14[%c0_70, %c0_71, %c0_72] : memref<5x8x16xf32, #tpu.memory_space<vmem>>, vector<5x8x16xf32>
    %90 = vector.broadcast %88 : vector<5x1x16xf32> to vector<5x8x16xf32>
    %91 = arith.mulf %90, %89 : vector<5x8x16xf32>
    %cst_73 = arith.constant dense<0.000000e+00> : vector<5x8xf32>
    %92 = vector.multi_reduction <add>, %91, %cst_73 [2] : vector<5x8x16xf32> to vector<5x8xf32>
    %93 = arith.addf %87, %92 : vector<5x8xf32>
    %c0_74 = arith.constant 0 : index
    %c0_75 = arith.constant 0 : index
    %94 = vector.load %arg17[%c0_74, %c0_75] : memref<5x8xf32, #tpu.memory_space<vmem>>, vector<5x8xf32>
    %95 = arith.addf %93, %94 : vector<5x8xf32>
    %c0_76 = arith.constant 0 : index
    %c0_77 = arith.constant 0 : index
    %96 = vector.load %arg18[%c0_76, %c0_77] : memref<8x5xf32, #tpu.memory_space<vmem>>, vector<8x5xf32>
    %cst_78 = arith.constant dense<0.000000e+00> : vector<8x8xf32>
    %97 = tpu.matmul %96, %82, %cst_78 {dimension_numbers = #tpu.dot_dimension_numbers<[1], [0], [0], [1], [0, 0, 1, 1], [], []>, precision = #tpu.contract_precision<fp32>} : vector<8x5xf32>, vector<5x8xf32>, vector<8x8xf32> -> vector<8x8xf32>
    %c0_79 = arith.constant 0 : index
    %c0_80 = arith.constant 0 : index
    %98 = vector.load %arg19[%c0_79, %c0_80] : memref<8x5xf32, #tpu.memory_space<vmem>>, vector<8x5xf32>
    %cst_81 = arith.constant dense<0.000000e+00> : vector<8x8xf32>
    %99 = tpu.matmul %98, %95, %cst_81 {dimension_numbers = #tpu.dot_dimension_numbers<[1], [0], [0], [1], [0, 0, 1, 1], [], []>, precision = #tpu.contract_precision<fp32>} : vector<8x5xf32>, vector<5x8xf32>, vector<8x8xf32> -> vector<8x8xf32>
    %100 = arith.addf %97, %99 : vector<8x8xf32>
    %c0_82 = arith.constant 0 : index
    %c0_83 = arith.constant 0 : index
    %c0_84 = arith.constant 0 : index
    %101 = vector.load %arg21[%c0_82, %c0_83, %c0_84] : memref<1x8x8xf32, #tpu.memory_space<vmem>>, vector<1x8x8xf32>
    %102 = vector.shape_cast %101 : vector<1x8x8xf32> to vector<8x8xf32>
    %103 = vector.shape_cast %100 : vector<8x8xf32> to vector<1x8x8xf32>
    tpu.vector_store %arg21[%c0_82, %c0_83, %c0_84], %103 {strides = array<i32>} : memref<1x8x8xf32, #tpu.memory_space<vmem>>, vector<1x8x8xf32>,
    return
  }
  func.func @transform_0(%arg0: i32) -> (i32, i32, i32) {
    %c0_i32 = arith.constant 0 : i32
    %c0_i32_0 = arith.constant 0 : i32
    %c0_i32_1 = arith.constant 0 : i32
    return %arg0, %c0_i32, %c0_i32_0 : i32, i32, i32
  }
  func.func @transform_1(%arg0: i32) -> (i32, i32) {
    %c0_i32 = arith.constant 0 : i32
    %c0_i32_0 = arith.constant 0 : i32
    %c0_i32_1 = arith.constant 0 : i32
    return %c0_i32, %c0_i32_0 : i32, i32
  }
  func.func @transform_2(%arg0: i32) -> (i32, i32) {
    %c0_i32 = arith.constant 0 : i32
    %c0_i32_0 = arith.constant 0 : i32
    %c0_i32_1 = arith.constant 0 : i32
    return %c0_i32, %c0_i32_0 : i32, i32
  }
  func.func @transform_3(%arg0: i32) -> (i32, i32) {
    %c0_i32 = arith.constant 0 : i32
    %c0_i32_0 = arith.constant 0 : i32
    %c0_i32_1 = arith.constant 0 : i32
    return %c0_i32, %c0_i32_0 : i32, i32
  }
  func.func @transform_4(%arg0: i32) -> (i32, i32) {
    %c0_i32 = arith.constant 0 : i32
    %c0_i32_0 = arith.constant 0 : i32
    %c0_i32_1 = arith.constant 0 : i32
    return %c0_i32, %c0_i32_0 : i32, i32
  }
  func.func @transform_5(%arg0: i32) -> (i32, i32) {
    %c0_i32 = arith.constant 0 : i32
    %c0_i32_0 = arith.constant 0 : i32
    %c0_i32_1 = arith.constant 0 : i32
    return %c0_i32, %c0_i32_0 : i32, i32
  }
  func.func @transform_6(%arg0: i32) -> (i32, i32) {
    %c0_i32 = arith.constant 0 : i32
    %c0_i32_0 = arith.constant 0 : i32
    %c0_i32_1 = arith.constant 0 : i32
    return %c0_i32, %c0_i32_0 : i32, i32
  }
  func.func @transform_7(%arg0: i32) -> (i32, i32) {
    %c0_i32 = arith.constant 0 : i32
    %c0_i32_0 = arith.constant 0 : i32
    %c0_i32_1 = arith.constant 0 : i32
    return %c0_i32, %c0_i32_0 : i32, i32
  }
  func.func @transform_8(%arg0: i32) -> (i32, i32) {
    %c0_i32 = arith.constant 0 : i32
    %c0_i32_0 = arith.constant 0 : i32
    %c0_i32_1 = arith.constant 0 : i32
    return %c0_i32, %c0_i32_0 : i32, i32
  }
  func.func @transform_9(%arg0: i32) -> (i32, i32) {
    %c0_i32 = arith.constant 0 : i32
    %c0_i32_0 = arith.constant 0 : i32
    %c0_i32_1 = arith.constant 0 : i32
    return %c0_i32, %c0_i32_0 : i32, i32
  }
  func.func @transform_10(%arg0: i32) -> (i32, i32) {
    %c0_i32 = arith.constant 0 : i32
    %c0_i32_0 = arith.constant 0 : i32
    %c0_i32_1 = arith.constant 0 : i32
    return %c0_i32, %c0_i32_0 : i32, i32
  }
  func.func @transform_11(%arg0: i32) -> (i32, i32) {
    %c0_i32 = arith.constant 0 : i32
    %c0_i32_0 = arith.constant 0 : i32
    %c0_i32_1 = arith.constant 0 : i32
    return %c0_i32, %c0_i32_0 : i32, i32
  }
  func.func @transform_12(%arg0: i32) -> (i32, i32) {
    %c0_i32 = arith.constant 0 : i32
    %c0_i32_0 = arith.constant 0 : i32
    %c0_i32_1 = arith.constant 0 : i32
    return %c0_i32, %c0_i32_0 : i32, i32
  }
  func.func @transform_13(%arg0: i32) -> (i32, i32, i32) {
    %c0_i32 = arith.constant 0 : i32
    %c0_i32_0 = arith.constant 0 : i32
    %c0_i32_1 = arith.constant 0 : i32
    %c0_i32_2 = arith.constant 0 : i32
    return %c0_i32, %c0_i32_0, %c0_i32_1 : i32, i32, i32
  }
  func.func @transform_14(%arg0: i32) -> (i32, i32, i32) {
    %c0_i32 = arith.constant 0 : i32
    %c0_i32_0 = arith.constant 0 : i32
    %c0_i32_1 = arith.constant 0 : i32
    %c0_i32_2 = arith.constant 0 : i32
    return %c0_i32, %c0_i32_0, %c0_i32_1 : i32, i32, i32
  }
  func.func @transform_15(%arg0: i32) -> (i32, i32) {
    %c0_i32 = arith.constant 0 : i32
    %c0_i32_0 = arith.constant 0 : i32
    %c0_i32_1 = arith.constant 0 : i32
    return %c0_i32, %c0_i32_0 : i32, i32
  }
  func.func @transform_16(%arg0: i32) -> (i32, i32) {
    %c0_i32 = arith.constant 0 : i32
    %c0_i32_0 = arith.constant 0 : i32
    %c0_i32_1 = arith.constant 0 : i32
    return %c0_i32, %c0_i32_0 : i32, i32
  }
  func.func @transform_17(%arg0: i32) -> (i32, i32) {
    %c0_i32 = arith.constant 0 : i32
    %c0_i32_0 = arith.constant 0 : i32
    %c0_i32_1 = arith.constant 0 : i32
    return %c0_i32, %c0_i32_0 : i32, i32
  }
  func.func @transform_18(%arg0: i32) -> (i32, i32) {
    %c0_i32 = arith.constant 0 : i32
    %c0_i32_0 = arith.constant 0 : i32
    %c0_i32_1 = arith.constant 0 : i32
    return %c0_i32, %c0_i32_0 : i32, i32
  }
  func.func @transform_19(%arg0: i32) -> (i32, i32, i32) {
    %c0_i32 = arith.constant 0 : i32
    %c0_i32_0 = arith.constant 0 : i32
    %c0_i32_1 = arith.constant 0 : i32
    return %arg0, %c0_i32, %c0_i32_0 : i32, i32, i32
  }
  func.func @transform_20(%arg0: i32) -> (i32, i32, i32) {
    %c0_i32 = arith.constant 0 : i32
    %c0_i32_0 = arith.constant 0 : i32
    %c0_i32_1 = arith.constant 0 : i32
    return %arg0, %c0_i32, %c0_i32_0 : i32, i32, i32
  }
}

</mosaic_0001>

<llo_original>
// kernel: _lambda_.1
$region0: #{_lambda_.1}
  #allocation0 [shape = 'u32[]', space=smem, size = 0x4, offset = 0x4, fixed_abs, tag = 'smem constant byte address 0x4 - core index']
  #allocation1 [shape = 'u32[72,128]{1,0:T(1,128)}', space=vmem, size = 0x9000, scoped, tag = 'internal scratch']
  #allocation2 [shape = 'f32[8,16]{1,0:T(8,128)}', space=vmem, size = 0x1000, scoped, tag = 'scratch operand']
  #allocation3 [shape = 'f32[8,16]{1,0:T(8,128)}', space=vmem, size = 0x1000, scoped, tag = 'scratch operand']
  #allocation4 [shape = 'f32[8,24]{1,0:T(8,128)}', space=vmem, size = 0x1000, scoped, tag = 'scratch operand']
  %s0 = inlined_call_operand.hbm [shape: f32[2,8,8], index: 0, kind: input, shape index: {}]
  %s1 = inlined_call_operand.hbm [shape: f32[8,32], index: 1, kind: input, shape index: {}]
  %s2 = inlined_call_operand.hbm [shape: f32[1,32], index: 2, kind: input, shape index: {}]
  %s3 = inlined_call_operand.hbm [shape: f32[32,16], index: 3, kind: input, shape index: {}]
  %s4 = inlined_call_operand.hbm [shape: f32[16,16], index: 4, kind: input, shape index: {}]
  %s5 = inlined_call_operand.hbm [shape: f32[1,16], index: 5, kind: input, shape index: {}]
  %s6 = inlined_call_operand.hbm [shape: f32[16,16], index: 6, kind: input, shape index: {}]
  %s7 = inlined_call_operand.hbm [shape: f32[16,16], index: 7, kind: input, shape index: {}]
  %s8 = inlined_call_operand.hbm [shape: f32[1,16], index: 8, kind: input, shape index: {}]
  %s9 = inlined_call_operand.vmem [shape: f32[16,24], index: 9, kind: input, shape index: {}]
  %s10 = inlined_call_operand.hbm [shape: f32[24,24], index: 10, kind: input, shape index: {}]
  %s11 = inlined_call_operand.hbm [shape: f32[5,8], index: 11, kind: input, shape index: {}]
  %s12 = inlined_call_operand.hbm [shape: f32[5,8], index: 12, kind: input, shape index: {}]
  %s13 = inlined_call_operand.hbm [shape: f32[5,8,16], index: 13, kind: input, shape index: {}]
  %s14 = inlined_call_operand.hbm [shape: f32[5,8,16], index: 14, kind: input, shape index: {}]
  %s15 = inlined_call_operand.hbm [shape: f32[5,8], index: 15, kind: input, shape index: {}]
  %s16 = inlined_call_operand.hbm [shape: f32[5,8], index: 16, kind: input, shape index: {}]
  %s17 = inlined_call_operand.hbm [shape: f32[8,5], index: 17, kind: input, shape index: {}]
  %s18 = inlined_call_operand.hbm [shape: f32[8,5], index: 18, kind: input, shape index: {}]
  %s19 = inlined_call_operand.hbm [shape: f32[2,8,8], index: 19, kind: output, shape index: {0}]
  %s20 = inlined_call_operand.hbm [shape: f32[2,8,8], index: 20, kind: output, shape index: {1}]
  %21 = xla_tuple %s19, %s20
  %s22 = sld [smem:[#allocation0]]
  $region193: #{_lambda_.1} parent=0
    _
  %s24 = ssub.s32 1, %s22
  %s25 = scalar_select 0, %s24, %s22
  $region1: #{_lambda_.1} parent=0
    #allocation5 [shape = 'u8[8192]{0}', space=vmem, size = 0x2000, scoped, tag = 'input window, operand 0']
    #allocation6 [shape = 's32[2]{0}', space=sflag, size = 0x8, scoped, tag = 'scoped memory for _lambda_.1']
    #allocation7 [shape = 's32[2]{0}', space=sflag, size = 0x8, scoped, tag = 'scoped memory for _lambda_.1']
    #allocation8 [shape = 'u8[4096]{0}', space=vmem, size = 0x1000, scoped, tag = 'input window, operand 1, single buffered']
    #allocation9 [shape = 's32[1]{0}', space=sflag, size = 0x4, scoped, tag = 'scoped memory for _lambda_.1']
    #allocation10 [shape = 'u8[512]{0}', space=vmem, size = 0x400, scoped, tag = 'input window, operand 2, single buffered']
    #allocation11 [shape = 'u8[16384]{0}', space=vmem, size = 0x4000, scoped, tag = 'input window, operand 3, single buffered']
    #allocation12 [shape = 's32[1]{0}', space=sflag, size = 0x4, scoped, tag = 'scoped memory for _lambda_.1']
    #allocation13 [shape = 'u8[8192]{0}', space=vmem, size = 0x2000, scoped, tag = 'input window, operand 4, single buffered']
    #allocation14 [shape = 'u8[512]{0}', space=vmem, size = 0x400, scoped, tag = 'input window, operand 5, single buffered']
    #allocation15 [shape = 's32[1]{0}', space=sflag, size = 0x4, scoped, tag = 'scoped memory for _lambda_.1']
    #allocation16 [shape = 'u8[8192]{0}', space=vmem, size = 0x2000, scoped, tag = 'input window, operand 6, single buffered']
    #allocation17 [shape = 'u8[8192]{0}', space=vmem, size = 0x2000, scoped, tag = 'input window, operand 7, single buffered']
    #allocation18 [shape = 's32[1]{0}', space=sflag, size = 0x4, scoped, tag = 'scoped memory for _lambda_.1']
    #allocation19 [shape = 'u8[512]{0}', space=vmem, size = 0x400, scoped, tag = 'input window, operand 8, single buffered']
    #allocation20 [shape = 'u8[12288]{0}', space=vmem, size = 0x3000, scoped, tag = 'input window, operand 10, single buffered']
    #allocation21 [shape = 's32[1]{0}', space=sflag, size = 0x4, scoped, tag = 'scoped memory for _lambda_.1']
    #allocation22 [shape = 'u8[4096]{0}', space=vmem, size = 0x1000, scoped, tag = 'input window, operand 11, single buffered']
    #allocation23 [shape = 'u8[4096]{0}', space=vmem, size = 0x1000, scoped, tag = 'input window, operand 12, single buffered']
    #allocation24 [shape = 's32[1]{0}', space=sflag, size = 0x4, scoped, tag = 'scoped memory for _lambda_.1']
    #allocation25 [shape = 'u8[20480]{0}', space=vmem, size = 0x5000, scoped, tag = 'input window, operand 13, single buffered']
    #allocation26 [shape = 'u8[20480]{0}', space=vmem, size = 0x5000, scoped, tag = 'input window, operand 14, single buffered']
    #allocation27 [shape = 's32[1]{0}', space=sflag, size = 0x4, scoped, tag = 'scoped memory for _lambda_.1']
    #allocation28 [shape = 'u8[4096]{0}', space=vmem, size = 0x1000, scoped, tag = 'input window, operand 15, single buffered']
    #allocation29 [shape = 'u8[4096]{0}', space=vmem, size = 0x1000, scoped, tag = 'input window, operand 16, single buffered']
    #allocation30 [shape = 's32[1]{0}', space=sflag, size = 0x4, scoped, tag = 'scoped memory for _lambda_.1']
    #allocation31 [shape = 'u8[4096]{0}', space=vmem, size = 0x1000, scoped, tag = 'input window, operand 17, single buffered']
    #allocation32 [shape = 'u8[4096]{0}', space=vmem, size = 0x1000, scoped, tag = 'input window, operand 18, single buffered']
    #allocation33 [shape = 's32[1]{0}', space=sflag, size = 0x4, scoped, tag = 'scoped memory for _lambda_.1']
    #allocation34 [shape = 'u8[8192]{0}', space=vmem, size = 0x2000, scoped, tag = 'output window, operand 0']
    #allocation35 [shape = 'u8[8192]{0}', space=vmem, size = 0x2000, scoped, tag = 'output window, operand 1']
    #allocation36 [shape = 's32[2]{0}', space=sflag, size = 0x8, scoped, tag = 'scoped memory for _lambda_.1']
    %26 = vsyncpa [#allocation6], 0
    %s27 = scalar_lea.sflag [#allocation6], 1
    %28 = vsyncpa %s27, 0
    %29 = vsyncpa [#allocation9], 0
    %30 = vsyncpa [#allocation12], 0
    %31 = vsyncpa [#allocation15], 0
    %32 = vsyncpa [#allocation18], 0
    %33 = vsyncpa [#allocation21], 0
    %34 = vsyncpa [#allocation24], 0
    %35 = vsyncpa [#allocation27], 0
    %36 = vsyncpa [#allocation30], 0
    %37 = vsyncpa [#allocation33], 0
    %38 = vsyncpa [#allocation7], 0
    %s39 = scalar_lea.sflag [#allocation7], 1
    %40 = vsyncpa %s39, 0
    %41 = vsyncpa [#allocation36], 0
    %s42 = scalar_lea.sflag [#allocation36], 1
    %43 = vsyncpa %s42, 0
    loop: start=0, step=1, limit=4
    $region2: #{_lambda_.1} parent=1 // loop_pre_header
      _
    $region3: #{_lambda_.1} parent=1 // loop_header
      %s45 = sphi 0, %s49
      %p46 = scmp.ge.s32.totalorder %s45, 4
      %s55 = sphi 0, %s57
      %s58 = sphi 0, %s55
      %s59 = sphi 0, %s58
      %s75 = sphi 0, %s59
      %s79 = sphi 0, %s79
      %s81 = sphi 0, %s79
      %s82 = sphi 0, %s81
      %s96 = sphi 0, %s82
      %s100 = sphi 0, %s100
      %s102 = sphi 0, %s100
      %s103 = sphi 0, %s102
      %s117 = sphi 0, %s103
      %s121 = sphi 0, %s121
      %s123 = sphi 0, %s121
      %s124 = sphi 0, %s123
      %s138 = sphi 0, %s124
      %s142 = sphi 0, %s142
      %s144 = sphi 0, %s142
      %s145 = sphi 0, %s144
      %s159 = sphi 0, %s145
      %s163 = sphi 0, %s163
      %s165 = sphi 0, %s163
      %s166 = sphi 0, %s165
      %s180 = sphi 0, %s166
      %s184 = sphi 0, %s184
      %s186 = sphi 0, %s184
      %s187 = sphi 0, %s186
      %s201 = sphi 0, %s187
      %s205 = sphi 0, %s205
      %s207 = sphi 0, %s205
      %s208 = sphi 0, %s207
      %s222 = sphi 0, %s208
      %s226 = sphi 0, %s226
      %s228 = sphi 0, %s226
      %s229 = sphi 0, %s228
      %s243 = sphi 0, %s229
      %s247 = sphi 0, %s247
      %s249 = sphi 0, %s247
      %s250 = sphi 0, %s249
      %s264 = sphi 0, %s250
      %s268 = sphi 0, %s268
      %s270 = sphi 0, %s268
      %s271 = sphi 0, %s270
      %s285 = sphi 0, %s271
      %s289 = sphi 0, %s289
      %s291 = sphi 0, %s289
      %s292 = sphi 0, %s291
      %s306 = sphi 0, %s292
      %s310 = sphi 0, %s310
      %s312 = sphi 0, %s310
      %s313 = sphi 0, %s312
      %s327 = sphi 0, %s313
      %s331 = sphi 0, %s331
      %s333 = sphi 0, %s331
      %s334 = sphi 0, %s333
      %s348 = sphi 0, %s334
      %s352 = sphi 0, %s352
      %s354 = sphi 0, %s352
      %s355 = sphi 0, %s354
      %s369 = sphi 0, %s355
      %s373 = sphi 0, %s373
      %s375 = sphi 0, %s373
      %s376 = sphi 0, %s375
      %s390 = sphi 0, %s376
      %s394 = sphi 0, %s394
      %s396 = sphi 0, %s394
      %s397 = sphi 0, %s396
      %s411 = sphi 0, %s397
      %s415 = sphi 0, %s415
      %s417 = sphi 0, %s415
      %s418 = sphi 0, %s417
      %s432 = sphi 0, %s418
      %s436 = sphi 0, %s436
      %s438 = sphi 0, %s436
      %s439 = sphi 0, %s438
      %s453 = sphi 0, %s439
      %s459 = sphi 0, %s461
      %s462 = sphi 0, %s459
      %s463 = sphi 0, %s462
      %s479 = sphi 0, %s463
      %s485 = sphi 0, %s487
      %s488 = sphi 0, %s485
      %s489 = sphi 0, %s488
      %s505 = sphi 0, %s489
    $region4: #{_lambda_.1} parent=1 // loop_header_branch
      %48 = sbr.rel (%p46) target = $region8
    $region5: #{_lambda_.1} parent=1 // loop_body
      %s50 = ssub.s32 %s45, 1
      %s51 = ssub.s32 %s45, 2
      %s52 = sadd.s32 %s45, 1
      %s53 = ssub.s32 %s45, %s52
      %p54 = scmp.eq.s32.totalorder %s53, 0
      %s56 = sadd.s32 %s55, 1
      %s57 = scalar_select %p54, %s55, %s56
      %p60 = pneg %p54
      %p61 = scmp.eq.s32.totalorder %s45, 1
      %p62 = por %p60, %p61
      %p63 = scmp.ne.s32.totalorder %s55, %s58
      %p64 = scmp.eq.s32.totalorder %s45, 0
      %p65 = por %p63, %p64
      %p66 = scmp.ne.s32.totalorder %s55, %s58
      %p67 = scmp.eq.s32.totalorder %s50, 1
      %p68 = por %p66, %p67
      %p69 = scmp.ne.s32.totalorder %s58, %s59
      %p70 = scmp.eq.s32.totalorder %s50, 0
      %p71 = por %p69, %p70
      %p72 = scmp.ne.s32.totalorder %s58, %s59
      %p73 = scmp.eq.s32.totalorder %s51, 1
      %p74 = por %p72, %p73
      %p76 = scmp.ne.s32.totalorder %s59, %s75
      %p77 = scmp.eq.s32.totalorder %s51, 0
      %p78 = por %p76, %p77
      %s80 = sadd.s32 %s79, 1
      %p83 = scmp.eq.s32.totalorder %s45, 1
      %p84 = scmp.ne.s32.totalorder %s79, %s81
      %p85 = scmp.eq.s32.totalorder %s45, 0
      %p86 = por %p84, %p85
      %p87 = scmp.ne.s32.totalorder %s79, %s81
      %p88 = scmp.eq.s32.totalorder %s50, 1
      %p89 = por %p87, %p88
      %p90 = scmp.ne.s32.totalorder %s81, %s82
      %p91 = scmp.eq.s32.totalorder %s50, 0
      %p92 = por %p90, %p91
      %p93 = scmp.ne.s32.totalorder %s81, %s82
      %p94 = scmp.eq.s32.totalorder %s51, 1
      %p95 = por %p93, %p94
      %p97 = scmp.ne.s32.totalorder %s82, %s96
      %p98 = scmp.eq.s32.totalorder %s51, 0
      %p99 = por %p97, %p98
      %s101 = sadd.s32 %s100, 1
      %p104 = scmp.eq.s32.totalorder %s45, 1
      %p105 = scmp.ne.s32.totalorder %s100, %s102
      %p106 = scmp.eq.s32.totalorder %s45, 0
      %p107 = por %p105, %p106
      %p108 = scmp.ne.s32.totalorder %s100, %s102
      %p109 = scmp.eq.s32.totalorder %s50, 1
      %p110 = por %p108, %p109
      %p111 = scmp.ne.s32.totalorder %s102, %s103
      %p112 = scmp.eq.s32.totalorder %s50, 0
      %p113 = por %p111, %p112
      %p114 = scmp.ne.s32.totalorder %s102, %s103
      %p115 = scmp.eq.s32.totalorder %s51, 1
      %p116 = por %p114, %p115
      %p118 = scmp.ne.s32.totalorder %s103, %s117
      %p119 = scmp.eq.s32.totalorder %s51, 0
      %p120 = por %p118, %p119
      %s122 = sadd.s32 %s121, 1
      %p125 = scmp.eq.s32.totalorder %s45, 1
      %p126 = scmp.ne.s32.totalorder %s121, %s123
      %p127 = scmp.eq.s32.totalorder %s45, 0
      %p128 = por %p126, %p127
      %p129 = scmp.ne.s32.totalorder %s121, %s123
      %p130 = scmp.eq.s32.totalorder %s50, 1
      %p131 = por %p129, %p130
      %p132 = scmp.ne.s32.totalorder %s123, %s124
      %p133 = scmp.eq.s32.totalorder %s50, 0
      %p134 = por %p132, %p133
      %p135 = scmp.ne.s32.totalorder %s123, %s124
      %p136 = scmp.eq.s32.totalorder %s51, 1
      %p137 = por %p135, %p136
      %p139 = scmp.ne.s32.totalorder %s124, %s138
      %p140 = scmp.eq.s32.totalorder %s51, 0
      %p141 = por %p139, %p140
      %s143 = sadd.s32 %s142, 1
      %p146 = scmp.eq.s32.totalorder %s45, 1
      %p147 = scmp.ne.s32.totalorder %s142, %s144
      %p148 = scmp.eq.s32.totalorder %s45, 0
      %p149 = por %p147, %p148
      %p150 = scmp.ne.s32.totalorder %s142, %s144
      %p151 = scmp.eq.s32.totalorder %s50, 1
      %p152 = por %p150, %p151
      %p153 = scmp.ne.s32.totalorder %s144, %s145
      %p154 = scmp.eq.s32.totalorder %s50, 0
      %p155 = por %p153, %p154
      %p156 = scmp.ne.s32.totalorder %s144, %s145
      %p157 = scmp.eq.s32.totalorder %s51, 1
      %p158 = por %p156, %p157
      %p160 = scmp.ne.s32.totalorder %s145, %s159
      %p161 = scmp.eq.s32.totalorder %s51, 0
      %p162 = por %p160, %p161
      %s164 = sadd.s32 %s163, 1
      %p167 = scmp.eq.s32.totalorder %s45, 1
      %p168 = scmp.ne.s32.totalorder %s163, %s165
      %p169 = scmp.eq.s32.totalorder %s45, 0
      %p170 = por %p168, %p169
      %p171 = scmp.ne.s32.totalorder %s163, %s165
      %p172 = scmp.eq.s32.totalorder %s50, 1
      %p173 = por %p171, %p172
      %p174 = scmp.ne.s32.totalorder %s165, %s166
      %p175 = scmp.eq.s32.totalorder %s50, 0
      %p176 = por %p174, %p175
      %p177 = scmp.ne.s32.totalorder %s165, %s166
      %p178 = scmp.eq.s32.totalorder %s51, 1
      %p179 = por %p177, %p178
      %p181 = scmp.ne.s32.totalorder %s166, %s180
      %p182 = scmp.eq.s32.totalorder %s51, 0
      %p183 = por %p181, %p182
      %s185 = sadd.s32 %s184, 1
      %p188 = scmp.eq.s32.totalorder %s45, 1
      %p189 = scmp.ne.s32.totalorder %s184, %s186
      %p190 = scmp.eq.s32.totalorder %s45, 0
      %p191 = por %p189, %p190
      %p192 = scmp.ne.s32.totalorder %s184, %s186
      %p193 = scmp.eq.s32.totalorder %s50, 1
      %p194 = por %p192, %p193
      %p195 = scmp.ne.s32.totalorder %s186, %s187
      %p196 = scmp.eq.s32.totalorder %s50, 0
      %p197 = por %p195, %p196
      %p198 = scmp.ne.s32.totalorder %s186, %s187
      %p199 = scmp.eq.s32.totalorder %s51, 1
      %p200 = por %p198, %p199
      %p202 = scmp.ne.s32.totalorder %s187, %s201
      %p203 = scmp.eq.s32.totalorder %s51, 0
      %p204 = por %p202, %p203
      %s206 = sadd.s32 %s205, 1
      %p209 = scmp.eq.s32.totalorder %s45, 1
      %p210 = scmp.ne.s32.totalorder %s205, %s207
      %p211 = scmp.eq.s32.totalorder %s45, 0
      %p212 = por %p210, %p211
      %p213 = scmp.ne.s32.totalorder %s205, %s207
      %p214 = scmp.eq.s32.totalorder %s50, 1
      %p215 = por %p213, %p214
      %p216 = scmp.ne.s32.totalorder %s207, %s208
      %p217 = scmp.eq.s32.totalorder %s50, 0
      %p218 = por %p216, %p217
      %p219 = scmp.ne.s32.totalorder %s207, %s208
      %p220 = scmp.eq.s32.totalorder %s51, 1
      %p221 = por %p219, %p220
      %p223 = scmp.ne.s32.totalorder %s208, %s222
      %p224 = scmp.eq.s32.totalorder %s51, 0
      %p225 = por %p223, %p224
      %s227 = sadd.s32 %s226, 1
      %p230 = scmp.eq.s32.totalorder %s45, 1
      %p231 = scmp.ne.s32.totalorder %s226, %s228
      %p232 = scmp.eq.s32.totalorder %s45, 0
      %p233 = por %p231, %p232
      %p234 = scmp.ne.s32.totalorder %s226, %s228
      %p235 = scmp.eq.s32.totalorder %s50, 1
      %p236 = por %p234, %p235
      %p237 = scmp.ne.s32.totalorder %s228, %s229
      %p238 = scmp.eq.s32.totalorder %s50, 0
      %p239 = por %p237, %p238
      %p240 = scmp.ne.s32.totalorder %s228, %s229
      %p241 = scmp.eq.s32.totalorder %s51, 1
      %p242 = por %p240, %p241
      %p244 = scmp.ne.s32.totalorder %s229, %s243
      %p245 = scmp.eq.s32.totalorder %s51, 0
      %p246 = por %p244, %p245
      %s248 = sadd.s32 %s247, 1
      %p251 = scmp.eq.s32.totalorder %s45, 1
      %p252 = scmp.ne.s32.totalorder %s247, %s249
      %p253 = scmp.eq.s32.totalorder %s45, 0
      %p254 = por %p252, %p253
      %p255 = scmp.ne.s32.totalorder %s247, %s249
      %p256 = scmp.eq.s32.totalorder %s50, 1
      %p257 = por %p255, %p256
      %p258 = scmp.ne.s32.totalorder %s249, %s250
      %p259 = scmp.eq.s32.totalorder %s50, 0
      %p260 = por %p258, %p259
      %p261 = scmp.ne.s32.totalorder %s249, %s250
      %p262 = scmp.eq.s32.totalorder %s51, 1
      %p263 = por %p261, %p262
      %p265 = scmp.ne.s32.totalorder %s250, %s264
      %p266 = scmp.eq.s32.totalorder %s51, 0
      %p267 = por %p265, %p266
      %s269 = sadd.s32 %s268, 1
      %p272 = scmp.eq.s32.totalorder %s45, 1
      %p273 = scmp.ne.s32.totalorder %s268, %s270
      %p274 = scmp.eq.s32.totalorder %s45, 0
      %p275 = por %p273, %p274
      %p276 = scmp.ne.s32.totalorder %s268, %s270
      %p277 = scmp.eq.s32.totalorder %s50, 1
      %p278 = por %p276, %p277
      %p279 = scmp.ne.s32.totalorder %s270, %s271
      %p280 = scmp.eq.s32.totalorder %s50, 0
      %p281 = por %p279, %p280
      %p282 = scmp.ne.s32.totalorder %s270, %s271
      %p283 = scmp.eq.s32.totalorder %s51, 1
      %p284 = por %p282, %p283
      %p286 = scmp.ne.s32.totalorder %s271, %s285
      %p287 = scmp.eq.s32.totalorder %s51, 0
      %p288 = por %p286, %p287
      %s290 = sadd.s32 %s289, 1
      %p293 = scmp.eq.s32.totalorder %s45, 1
      %p294 = scmp.ne.s32.totalorder %s289, %s291
      %p295 = scmp.eq.s32.totalorder %s45, 0
      %p296 = por %p294, %p295
      %p297 = scmp.ne.s32.totalorder %s289, %s291
      %p298 = scmp.eq.s32.totalorder %s50, 1
      %p299 = por %p297, %p298
      %p300 = scmp.ne.s32.totalorder %s291, %s292
      %p301 = scmp.eq.s32.totalorder %s50, 0
      %p302 = por %p300, %p301
      %p303 = scmp.ne.s32.totalorder %s291, %s292
      %p304 = scmp.eq.s32.totalorder %s51, 1
      %p305 = por %p303, %p304
      %p307 = scmp.ne.s32.totalorder %s292, %s306
      %p308 = scmp.eq.s32.totalorder %s51, 0
      %p309 = por %p307, %p308
      %s311 = sadd.s32 %s310, 1
      %p314 = scmp.eq.s32.totalorder %s45, 1
      %p315 = scmp.ne.s32.totalorder %s310, %s312
      %p316 = scmp.eq.s32.totalorder %s45, 0
      %p317 = por %p315, %p316
      %p318 = scmp.ne.s32.totalorder %s310, %s312
      %p319 = scmp.eq.s32.totalorder %s50, 1
      %p320 = por %p318, %p319
      %p321 = scmp.ne.s32.totalorder %s312, %s313
      %p322 = scmp.eq.s32.totalorder %s50, 0
      %p323 = por %p321, %p322
      %p324 = scmp.ne.s32.totalorder %s312, %s313
      %p325 = scmp.eq.s32.totalorder %s51, 1
      %p326 = por %p324, %p325
      %p328 = scmp.ne.s32.totalorder %s313, %s327
      %p329 = scmp.eq.s32.totalorder %s51, 0
      %p330 = por %p328, %p329
      %s332 = sadd.s32 %s331, 1
      %p335 = scmp.eq.s32.totalorder %s45, 1
      %p336 = scmp.ne.s32.totalorder %s331, %s333
      %p337 = scmp.eq.s32.totalorder %s45, 0
      %p338 = por %p336, %p337
      %p339 = scmp.ne.s32.totalorder %s331, %s333
      %p340 = scmp.eq.s32.totalorder %s50, 1
      %p341 = por %p339, %p340
      %p342 = scmp.ne.s32.totalorder %s333, %s334
      %p343 = scmp.eq.s32.totalorder %s50, 0
      %p344 = por %p342, %p343
      %p345 = scmp.ne.s32.totalorder %s333, %s334
      %p346 = scmp.eq.s32.totalorder %s51, 1
      %p347 = por %p345, %p346
      %p349 = scmp.ne.s32.totalorder %s334, %s348
      %p350 = scmp.eq.s32.totalorder %s51, 0
      %p351 = por %p349, %p350
      %s353 = sadd.s32 %s352, 1
      %p356 = scmp.eq.s32.totalorder %s45, 1
      %p357 = scmp.ne.s32.totalorder %s352, %s354
      %p358 = scmp.eq.s32.totalorder %s45, 0
      %p359 = por %p357, %p358
      %p360 = scmp.ne.s32.totalorder %s352, %s354
      %p361 = scmp.eq.s32.totalorder %s50, 1
      %p362 = por %p360, %p361
      %p363 = scmp.ne.s32.totalorder %s354, %s355
      %p364 = scmp.eq.s32.totalorder %s50, 0
      %p365 = por %p363, %p364
      %p366 = scmp.ne.s32.totalorder %s354, %s355
      %p367 = scmp.eq.s32.totalorder %s51, 1
      %p368 = por %p366, %p367
      %p370 = scmp.ne.s32.totalorder %s355, %s369
      %p371 = scmp.eq.s32.totalorder %s51, 0
      %p372 = por %p370, %p371
      %s374 = sadd.s32 %s373, 1
      %p377 = scmp.eq.s32.totalorder %s45, 1
      %p378 = scmp.ne.s32.totalorder %s373, %s375
      %p379 = scmp.eq.s32.totalorder %s45, 0
      %p380 = por %p378, %p379
      %p381 = scmp.ne.s32.totalorder %s373, %s375
      %p382 = scmp.eq.s32.totalorder %s50, 1
      %p383 = por %p381, %p382
      %p384 = scmp.ne.s32.totalorder %s375, %s376
      %p385 = scmp.eq.s32.totalorder %s50, 0
      %p386 = por %p384, %p385
      %p387 = scmp.ne.s32.totalorder %s375, %s376
      %p388 = scmp.eq.s32.totalorder %s51, 1
      %p389 = por %p387, %p388
      %p391 = scmp.ne.s32.totalorder %s376, %s390
      %p392 = scmp.eq.s32.totalorder %s51, 0
      %p393 = por %p391, %p392
      %s395 = sadd.s32 %s394, 1
      %p398 = scmp.eq.s32.totalorder %s45, 1
      %p399 = scmp.ne.s32.totalorder %s394, %s396
      %p400 = scmp.eq.s32.totalorder %s45, 0
      %p401 = por %p399, %p400
      %p402 = scmp.ne.s32.totalorder %s394, %s396
      %p403 = scmp.eq.s32.totalorder %s50, 1
      %p404 = por %p402, %p403
      %p405 = scmp.ne.s32.totalorder %s396, %s397
      %p406 = scmp.eq.s32.totalorder %s50, 0
      %p407 = por %p405, %p406
      %p408 = scmp.ne.s32.totalorder %s396, %s397
      %p409 = scmp.eq.s32.totalorder %s51, 1
      %p410 = por %p408, %p409
      %p412 = scmp.ne.s32.totalorder %s397, %s411
      %p413 = scmp.eq.s32.totalorder %s51, 0
      %p414 = por %p412, %p413
      %s416 = sadd.s32 %s415, 1
      %p419 = scmp.eq.s32.totalorder %s45, 1
      %p420 = scmp.ne.s32.totalorder %s415, %s417
      %p421 = scmp.eq.s32.totalorder %s45, 0
      %p422 = por %p420, %p421
      %p423 = scmp.ne.s32.totalorder %s415, %s417
      %p424 = scmp.eq.s32.totalorder %s50, 1
      %p425 = por %p423, %p424
      %p426 = scmp.ne.s32.totalorder %s417, %s418
      %p427 = scmp.eq.s32.totalorder %s50, 0
      %p428 = por %p426, %p427
      %p429 = scmp.ne.s32.totalorder %s417, %s418
      %p430 = scmp.eq.s32.totalorder %s51, 1
      %p431 = por %p429, %p430
      %p433 = scmp.ne.s32.totalorder %s418, %s432
      %p434 = scmp.eq.s32.totalorder %s51, 0
      %p435 = por %p433, %p434
      %s437 = sadd.s32 %s436, 1
      %p440 = scmp.eq.s32.totalorder %s45, 1
      %p441 = scmp.ne.s32.totalorder %s436, %s438
      %p442 = scmp.eq.s32.totalorder %s45, 0
      %p443 = por %p441, %p442
      %p444 = scmp.ne.s32.totalorder %s436, %s438
      %p445 = scmp.eq.s32.totalorder %s50, 1
      %p446 = por %p444, %p445
      %p447 = scmp.ne.s32.totalorder %s438, %s439
      %p448 = scmp.eq.s32.totalorder %s50, 0
      %p449 = por %p447, %p448
      %p450 = scmp.ne.s32.totalorder %s438, %s439
      %p451 = scmp.eq.s32.totalorder %s51, 1
      %p452 = por %p450, %p451
      %p454 = scmp.ne.s32.totalorder %s439, %s453
      %p455 = scmp.eq.s32.totalorder %s51, 0
      %p456 = por %p454, %p455
      %s457 = ssub.s32 %s45, %s52
      %p458 = scmp.eq.s32.totalorder %s457, 0
      %s460 = sadd.s32 %s459, 1
      %s461 = scalar_select %p458, %s459, %s460
      %p464 = pneg %p458
      %p465 = scmp.eq.s32.totalorder %s45, 1
      %p466 = por %p464, %p465
      %p467 = scmp.ne.s32.totalorder %s459, %s462
      %p468 = scmp.eq.s32.totalorder %s45, 0
      %p469 = por %p467, %p468
      %p470 = scmp.ne.s32.totalorder %s459, %s462
      %p471 = scmp.eq.s32.totalorder %s50, 1
      %p472 = por %p470, %p471
      %p473 = scmp.ne.s32.totalorder %s462, %s463
      %p474 = scmp.eq.s32.totalorder %s50, 0
      %p475 = por %p473, %p474
      %p476 = scmp.ne.s32.totalorder %s462, %s463
      %p477 = scmp.eq.s32.totalorder %s51, 1
      %p478 = por %p476, %p477
      %p480 = scmp.ne.s32.totalorder %s463, %s479
      %p481 = scmp.eq.s32.totalorder %s51, 0
      %p482 = por %p480, %p481
      %s483 = ssub.s32 %s45, %s52
      %p484 = scmp.eq.s32.totalorder %s483, 0
      %s486 = sadd.s32 %s485, 1
      %s487 = scalar_select %p484, %s485, %s486
      %p490 = pneg %p484
      %p491 = scmp.eq.s32.totalorder %s45, 1
      %p492 = por %p490, %p491
      %p493 = scmp.ne.s32.totalorder %s485, %s488
      %p494 = scmp.eq.s32.totalorder %s45, 0
      %p495 = por %p493, %p494
      %p496 = scmp.ne.s32.totalorder %s485, %s488
      %p497 = scmp.eq.s32.totalorder %s50, 1
      %p498 = por %p496, %p497
      %p499 = scmp.ne.s32.totalorder %s488, %s489
      %p500 = scmp.eq.s32.totalorder %s50, 0
      %p501 = por %p499, %p500
      %p502 = scmp.ne.s32.totalorder %s488, %s489
      %p503 = scmp.eq.s32.totalorder %s51, 1
      %p504 = por %p502, %p503
      %p506 = scmp.ne.s32.totalorder %s489, %s505
      %p507 = scmp.eq.s32.totalorder %s51, 0
      %p508 = por %p506, %p507
      %p509 = scmp.le.s32.totalorder 1, %s45
      %p510 = scmp.lt.s32.totalorder %s45, 3
      %p511 = pnand %p509, %p510
      %p512 = pneg %p511
      // Predicated region
      $region9: #{_lambda_.1} parent=5 // pred_check
        _
      $region10: #{_lambda_.1} parent=5 // pred_check_branch
        %514 = sbr.rel (%p511) target = $region12
      $region11: #{_lambda_.1} parent=5 // pred_region
        %s515 = ssub.s32 %s45, 1
        // Predicated region
        $region13: #{_lambda_.1} parent=11 // pred_check
          %p516 = pneg %p92
        $region14: #{_lambda_.1} parent=11 // pred_check_branch
          %518 = sbr.rel (%p516) target = $region16
        $region15: #{_lambda_.1} parent=11 // pred_region
          %520 = vsyncadd [#allocation9], 0
          %s522 = sshll.u32 %s1, 4
          %s523 = int_to_ptr.hbm [resolvable:$true] %s522
          %s524 = sshll.u32 [#allocation8], 4
          %s525 = int_to_ptr.vmem [resolvable:$true] %s524
          %527 = dma.hbm_to_vmem [thread:$0]  %s523, 128, %s525, [#allocation9]
        $region16: #{_lambda_.1} parent=11 // pred_fallthru
          _
        // Predicated region
        $region17: #{_lambda_.1} parent=11 // pred_check
          %p528 = pneg %p113
        $region18: #{_lambda_.1} parent=11 // pred_check_branch
          %530 = sbr.rel (%p528) target = $region20
        $region19: #{_lambda_.1} parent=11 // pred_region
          %532 = vsyncadd [#allocation9], 0
          %s534 = sshll.u32 %s2, 4
          %s535 = int_to_ptr.hbm [resolvable:$true] %s534
          %s536 = sshll.u32 [#allocation10], 4
          %s537 = int_to_ptr.vmem [resolvable:$true] %s536
          %539 = dma.hbm_to_vmem [thread:$0]  %s535, 16, %s537, [#allocation9]
        $region20: #{_lambda_.1} parent=11 // pred_fallthru
          _
        // Predicated region
        $region21: #{_lambda_.1} parent=11 // pred_check
          %p540 = pneg %p134
        $region22: #{_lambda_.1} parent=11 // pred_check_branch
          %542 = sbr.rel (%p540) target = $region24
        $region23: #{_lambda_.1} parent=11 // pred_region
          %544 = vsyncadd [#allocation12], 0
          %s545 = sshll.u32 %s3, 4
          %s546 = int_to_ptr.hbm [resolvable:$true] %s545
          %s547 = sshll.u32 [#allocation11], 4
          %s548 = int_to_ptr.vmem [resolvable:$true] %s547
          %553 = dma.hbm_to_vmem [thread:$0]  %s546, 512, %s548, [#allocation12], 128, 128, 8
        $region24: #{_lambda_.1} parent=11 // pred_fallthru
          _
        // Predicated region
        $region25: #{_lambda_.1} parent=11 // pred_check
          %p554 = pneg %p155
        $region26: #{_lambda_.1} parent=11 // pred_check_branch
          %556 = sbr.rel (%p554) target = $region28
        $region27: #{_lambda_.1} parent=11 // pred_region
          %558 = vsyncadd [#allocation12], 0
          %s559 = sshll.u32 %s4, 4
          %s560 = int_to_ptr.hbm [resolvable:$true] %s559
          %s561 = sshll.u32 [#allocation13], 4
          %s562 = int_to_ptr.vmem [resolvable:$true] %s561
          %567 = dma.hbm_to_vmem [thread:$0]  %s560, 256, %s562, [#allocation12], 128, 128, 8
        $region28: #{_lambda_.1} parent=11 // pred_fallthru
          _
        // Predicated region
        $region29: #{_lambda_.1} parent=11 // pred_check
          %p568 = pneg %p176
        $region30: #{_lambda_.1} parent=11 // pred_check_branch
          %570 = sbr.rel (%p568) target = $region32
        $region31: #{_lambda_.1} parent=11 // pred_region
          %572 = vsyncadd [#allocation15], 0
          %s574 = sshll.u32 %s5, 4
          %s575 = int_to_ptr.hbm [resolvable:$true] %s574
          %s576 = sshll.u32 [#allocation14], 4
          %s577 = int_to_ptr.vmem [resolvable:$true] %s576
          %579 = dma.hbm_to_vmem [thread:$0]  %s575, 16, %s577, [#allocation15]
        $region32: #{_lambda_.1} parent=11 // pred_fallthru
          _
        // Predicated region
        $region33: #{_lambda_.1} parent=11 // pred_check
          %p580 = pneg %p197
        $region34: #{_lambda_.1} parent=11 // pred_check_branch
          %582 = sbr.rel (%p580) target = $region36
        $region35: #{_lambda_.1} parent=11 // pred_region
          %584 = vsyncadd [#allocation15], 0
          %s585 = sshll.u32 %s6, 4
          %s586 = int_to_ptr.hbm [resolvable:$true] %s585
          %s587 = sshll.u32 [#allocation16], 4
          %s588 = int_to_ptr.vmem [resolvable:$true] %s587
          %593 = dma.hbm_to_vmem [thread:$0]  %s586, 256, %s588, [#allocation15], 128, 128, 8
        $region36: #{_lambda_.1} parent=11 // pred_fallthru
          _
        // Predicated region
        $region37: #{_lambda_.1} parent=11 // pred_check
          %p594 = pneg %p218
        $region38: #{_lambda_.1} parent=11 // pred_check_branch
          %596 = sbr.rel (%p594) target = $region40
        $region39: #{_lambda_.1} parent=11 // pred_region
          %598 = vsyncadd [#allocation18], 0
          %s599 = sshll.u32 %s7, 4
          %s600 = int_to_ptr.hbm [resolvable:$true] %s599
          %s601 = sshll.u32 [#allocation17], 4
          %s602 = int_to_ptr.vmem [resolvable:$true] %s601
          %607 = dma.hbm_to_vmem [thread:$0]  %s600, 256, %s602, [#allocation18], 128, 128, 8
        $region40: #{_lambda_.1} parent=11 // pred_fallthru
          _
        // Predicated region
        $region41: #{_lambda_.1} parent=11 // pred_check
          %p608 = pneg %p239
        $region42: #{_lambda_.1} parent=11 // pred_check_branch
          %610 = sbr.rel (%p608) target = $region44
        $region43: #{_lambda_.1} parent=11 // pred_region
          %612 = vsyncadd [#allocation18], 0
          %s614 = sshll.u32 %s8, 4
          %s615 = int_to_ptr.hbm [resolvable:$true] %s614
          %s616 = sshll.u32 [#allocation19], 4
          %s617 = int_to_ptr.vmem [resolvable:$true] %s616
          %619 = dma.hbm_to_vmem [thread:$0]  %s615, 16, %s617, [#allocation18]
        $region44: #{_lambda_.1} parent=11 // pred_fallthru
          _
        // Predicated region
        $region45: #{_lambda_.1} parent=11 // pred_check
          %p620 = pneg %p260
        $region46: #{_lambda_.1} parent=11 // pred_check_branch
          %622 = sbr.rel (%p620) target = $region48
        $region47: #{_lambda_.1} parent=11 // pred_region
          _
        $region48: #{_lambda_.1} parent=11 // pred_fallthru
          _
        // Predicated region
        $region49: #{_lambda_.1} parent=11 // pred_check
          %p623 = pneg %p281
        $region50: #{_lambda_.1} parent=11 // pred_check_branch
          %625 = sbr.rel (%p623) target = $region52
        $region51: #{_lambda_.1} parent=11 // pred_region
          %627 = vsyncadd [#allocation21], 0
          %s628 = sshll.u32 %s10, 4
          %s629 = int_to_ptr.hbm [resolvable:$true] %s628
          %s630 = sshll.u32 [#allocation20], 4
          %s631 = int_to_ptr.vmem [resolvable:$true] %s630
          %636 = dma.hbm_to_vmem [thread:$0]  %s629, 384, %s631, [#allocation21], 128, 128, 8
        $region52: #{_lambda_.1} parent=11 // pred_fallthru
          _
        // Predicated region
        $region53: #{_lambda_.1} parent=11 // pred_check
          %p637 = pneg %p302
        $region54: #{_lambda_.1} parent=11 // pred_check_branch
          %639 = sbr.rel (%p637) target = $region56
        $region55: #{_lambda_.1} parent=11 // pred_region
          %641 = vsyncadd [#allocation21], 0
          %s643 = sshll.u32 %s11, 4
          %s644 = int_to_ptr.hbm [resolvable:$true] %s643
          %s645 = sshll.u32 [#allocation22], 4
          %s646 = int_to_ptr.vmem [resolvable:$true] %s645
          %648 = dma.hbm_to_vmem [thread:$0]  %s644, 128, %s646, [#allocation21]
        $region56: #{_lambda_.1} parent=11 // pred_fallthru
          _
        // Predicated region
        $region57: #{_lambda_.1} parent=11 // pred_check
          %p649 = pneg %p323
        $region58: #{_lambda_.1} parent=11 // pred_check_branch
          %651 = sbr.rel (%p649) target = $region60
        $region59: #{_lambda_.1} parent=11 // pred_region
          %653 = vsyncadd [#allocation24], 0
          %s655 = sshll.u32 %s12, 4
          %s656 = int_to_ptr.hbm [resolvable:$true] %s655
          %s657 = sshll.u32 [#allocation23], 4
          %s658 = int_to_ptr.vmem [resolvable:$true] %s657
          %660 = dma.hbm_to_vmem [thread:$0]  %s656, 128, %s658, [#allocation24]
        $region60: #{_lambda_.1} parent=11 // pred_fallthru
          _
        // Predicated region
        $region61: #{_lambda_.1} parent=11 // pred_check
          %p661 = pneg %p344
        $region62: #{_lambda_.1} parent=11 // pred_check_branch
          %663 = sbr.rel (%p661) target = $region64
        $region63: #{_lambda_.1} parent=11 // pred_region
          %665 = vsyncadd [#allocation24], 0
          %s666 = sshll.u32 %s13, 4
          %s667 = int_to_ptr.hbm [resolvable:$true] %s666
          %s668 = sshll.u32 [#allocation25], 4
          %s669 = int_to_ptr.vmem [resolvable:$true] %s668
          %674 = dma.hbm_to_vmem [thread:$0]  %s667, 640, %s669, [#allocation24], 128, 128, 8
        $region64: #{_lambda_.1} parent=11 // pred_fallthru
          _
        // Predicated region
        $region65: #{_lambda_.1} parent=11 // pred_check
          %p675 = pneg %p365
        $region66: #{_lambda_.1} parent=11 // pred_check_branch
          %677 = sbr.rel (%p675) target = $region68
        $region67: #{_lambda_.1} parent=11 // pred_region
          %679 = vsyncadd [#allocation27], 0
          %s680 = sshll.u32 %s14, 4
          %s681 = int_to_ptr.hbm [resolvable:$true] %s680
          %s682 = sshll.u32 [#allocation26], 4
          %s683 = int_to_ptr.vmem [resolvable:$true] %s682
          %688 = dma.hbm_to_vmem [thread:$0]  %s681, 640, %s683, [#allocation27], 128, 128, 8
        $region68: #{_lambda_.1} parent=11 // pred_fallthru
          _
        // Predicated region
        $region69: #{_lambda_.1} parent=11 // pred_check
          %p689 = pneg %p386
        $region70: #{_lambda_.1} parent=11 // pred_check_branch
          %691 = sbr.rel (%p689) target = $region72
        $region71: #{_lambda_.1} parent=11 // pred_region
          %693 = vsyncadd [#allocation27], 0
          %s695 = sshll.u32 %s15, 4
          %s696 = int_to_ptr.hbm [resolvable:$true] %s695
          %s697 = sshll.u32 [#allocation28], 4
          %s698 = int_to_ptr.vmem [resolvable:$true] %s697
          %700 = dma.hbm_to_vmem [thread:$0]  %s696, 128, %s698, [#allocation27]
        $region72: #{_lambda_.1} parent=11 // pred_fallthru
          _
        // Predicated region
        $region73: #{_lambda_.1} parent=11 // pred_check
          %p701 = pneg %p407
        $region74: #{_lambda_.1} parent=11 // pred_check_branch
          %703 = sbr.rel (%p701) target = $region76
        $region75: #{_lambda_.1} parent=11 // pred_region
          %705 = vsyncadd [#allocation30], 0
          %s707 = sshll.u32 %s16, 4
          %s708 = int_to_ptr.hbm [resolvable:$true] %s707
          %s709 = sshll.u32 [#allocation29], 4
          %s710 = int_to_ptr.vmem [resolvable:$true] %s709
          %712 = dma.hbm_to_vmem [thread:$0]  %s708, 128, %s710, [#allocation30]
        $region76: #{_lambda_.1} parent=11 // pred_fallthru
          _
        // Predicated region
        $region77: #{_lambda_.1} parent=11 // pred_check
          %p713 = pneg %p428
        $region78: #{_lambda_.1} parent=11 // pred_check_branch
          %715 = sbr.rel (%p713) target = $region80
        $region79: #{_lambda_.1} parent=11 // pred_region
          %717 = vsyncadd [#allocation30], 0
          %s719 = sshll.u32 %s17, 4
          %s720 = int_to_ptr.hbm [resolvable:$true] %s719
          %s721 = sshll.u32 [#allocation31], 4
          %s722 = int_to_ptr.vmem [resolvable:$true] %s721
          %724 = dma.hbm_to_vmem [thread:$0]  %s720, 128, %s722, [#allocation30]
        $region80: #{_lambda_.1} parent=11 // pred_fallthru
          _
        // Predicated region
        $region81: #{_lambda_.1} parent=11 // pred_check
          %p725 = pneg %p449
        $region82: #{_lambda_.1} parent=11 // pred_check_branch
          %727 = sbr.rel (%p725) target = $region84
        $region83: #{_lambda_.1} parent=11 // pred_region
          %729 = vsyncadd [#allocation33], 0
          %s731 = sshll.u32 %s18, 4
          %s732 = int_to_ptr.hbm [resolvable:$true] %s731
          %s733 = sshll.u32 [#allocation32], 4
          %s734 = int_to_ptr.vmem [resolvable:$true] %s733
          %736 = dma.hbm_to_vmem [thread:$0]  %s732, 128, %s734, [#allocation33]
        $region84: #{_lambda_.1} parent=11 // pred_fallthru
          _
      $region12: #{_lambda_.1} parent=5 // pred_fallthru
        _
      %p737 = scmp.lt.s32.totalorder %s45, 2
      // Predicated region
      $region85: #{_lambda_.1} parent=5 // pred_check
        %p738 = pneg %p737
      $region86: #{_lambda_.1} parent=5 // pred_check_branch
        %740 = sbr.rel (%p738) target = $region88
      $region87: #{_lambda_.1} parent=5 // pred_region
        // Predicated region
        $region89: #{_lambda_.1} parent=87 // pred_check
          %p741 = pneg %p65
        $region90: #{_lambda_.1} parent=87 // pred_check_branch
          %743 = sbr.rel (%p741) target = $region92
        $region91: #{_lambda_.1} parent=87 // pred_region
          %s744 = sand.u32 %s55, 1
          %s745 = scalar_lea.sflag [#allocation6], %s744
          %s746 = sand.u32 %s55, 1
          %s747 = smul.addr %s746, 8
          %s748 = scalar_lea.vmem [#allocation5], %s747
          %750 = vsyncadd %s745, 0
          %s751 = smul.addr %s45, 8
          %s752 = scalar_lea.hbm %s0, %s751
          %s754 = sshll.u32 %s752, 4
          %s755 = int_to_ptr.hbm [resolvable:$true] %s754
          %s756 = sshll.u32 %s748, 4
          %s757 = int_to_ptr.vmem [resolvable:$true] %s756
          %759 = dma.hbm_to_vmem [thread:$0]  %s755, 128, %s757, %s745
        $region92: #{_lambda_.1} parent=87 // pred_fallthru
          _
      $region88: #{_lambda_.1} parent=5 // pred_fallthru
        _
      %p760 = scmp.le.s32.totalorder 1, %s45
      %p761 = scmp.lt.s32.totalorder %s45, 3
      %p762 = pnand %p760, %p761
      %p763 = pneg %p762
      // Predicated region
      $region93: #{_lambda_.1} parent=5 // pred_check
        _
      $region94: #{_lambda_.1} parent=5 // pred_check_branch
        %765 = sbr.rel (%p762) target = $region96
      $region95: #{_lambda_.1} parent=5 // pred_region
        %s766 = ssub.s32 %s45, 1
        %s767 = sand.u32 %s58, 1
        %s768 = scalar_lea.sflag [#allocation6], %s767
        %s769 = sand.u32 %s58, 1
        %s770 = smul.addr %s769, 8
        %s771 = scalar_lea.vmem [#allocation5], %s770
        // Predicated region
        $region97: #{_lambda_.1} parent=95 // pred_check
          %p772 = pneg %p71
        $region98: #{_lambda_.1} parent=95 // pred_check_branch
          %774 = sbr.rel (%p772) target = $region100
        $region99: #{_lambda_.1} parent=95 // pred_region
          %776 = dma.done %s768, 128
        $region100: #{_lambda_.1} parent=95 // pred_fallthru
          _
        // Predicated region
        $region101: #{_lambda_.1} parent=95 // pred_check
          %p777 = pneg %p92
        $region102: #{_lambda_.1} parent=95 // pred_check_branch
          %779 = sbr.rel (%p777) target = $region104
        $region103: #{_lambda_.1} parent=95 // pred_region
          %781 = dma.done [#allocation9], 128
        $region104: #{_lambda_.1} parent=95 // pred_fallthru
          _
        // Predicated region
        $region105: #{_lambda_.1} parent=95 // pred_check
          %p782 = pneg %p113
        $region106: #{_lambda_.1} parent=95 // pred_check_branch
          %784 = sbr.rel (%p782) target = $region108
        $region107: #{_lambda_.1} parent=95 // pred_region
          %786 = dma.done [#allocation9], 16
        $region108: #{_lambda_.1} parent=95 // pred_fallthru
          _
        // Predicated region
        $region109: #{_lambda_.1} parent=95 // pred_check
          %p787 = pneg %p134
        $region110: #{_lambda_.1} parent=95 // pred_check_branch
          %789 = sbr.rel (%p787) target = $region112
        $region111: #{_lambda_.1} parent=95 // pred_region
          %791 = dma.done [#allocation12], 512
        $region112: #{_lambda_.1} parent=95 // pred_fallthru
          _
        // Predicated region
        $region113: #{_lambda_.1} parent=95 // pred_check
          %p792 = pneg %p155
        $region114: #{_lambda_.1} parent=95 // pred_check_branch
          %794 = sbr.rel (%p792) target = $region116
        $region115: #{_lambda_.1} parent=95 // pred_region
          %796 = dma.done [#allocation12], 256
        $region116: #{_lambda_.1} parent=95 // pred_fallthru
          _
        // Predicated region
        $region117: #{_lambda_.1} parent=95 // pred_check
          %p797 = pneg %p176
        $region118: #{_lambda_.1} parent=95 // pred_check_branch
          %799 = sbr.rel (%p797) target = $region120
        $region119: #{_lambda_.1} parent=95 // pred_region
          %801 = dma.done [#allocation15], 16
        $region120: #{_lambda_.1} parent=95 // pred_fallthru
          _
        // Predicated region
        $region121: #{_lambda_.1} parent=95 // pred_check
          %p802 = pneg %p197
        $region122: #{_lambda_.1} parent=95 // pred_check_branch
          %804 = sbr.rel (%p802) target = $region124
        $region123: #{_lambda_.1} parent=95 // pred_region
          %806 = dma.done [#allocation15], 256
        $region124: #{_lambda_.1} parent=95 // pred_fallthru
          _
        // Predicated region
        $region125: #{_lambda_.1} parent=95 // pred_check
          %p807 = pneg %p218
        $region126: #{_lambda_.1} parent=95 // pred_check_branch
          %809 = sbr.rel (%p807) target = $region128
        $region127: #{_lambda_.1} parent=95 // pred_region
          %811 = dma.done [#allocation18], 256
        $region128: #{_lambda_.1} parent=95 // pred_fallthru
          _
        // Predicated region
        $region129: #{_lambda_.1} parent=95 // pred_check
          %p812 = pneg %p239
        $region130: #{_lambda_.1} parent=95 // pred_check_branch
          %814 = sbr.rel (%p812) target = $region132
        $region131: #{_lambda_.1} parent=95 // pred_region
          %816 = dma.done [#allocation18], 16
        $region132: #{_lambda_.1} parent=95 // pred_fallthru
          _
        // Predicated region
        $region133: #{_lambda_.1} parent=95 // pred_check
          %p817 = pneg %p281
        $region134: #{_lambda_.1} parent=95 // pred_check_branch
          %819 = sbr.rel (%p817) target = $region136
        $region135: #{_lambda_.1} parent=95 // pred_region
          %821 = dma.done [#allocation21], 384
        $region136: #{_lambda_.1} parent=95 // pred_fallthru
          _
        // Predicated region
        $region137: #{_lambda_.1} parent=95 // pred_check
          %p822 = pneg %p302
        $region138: #{_lambda_.1} parent=95 // pred_check_branch
          %824 = sbr.rel (%p822) target = $region140
        $region139: #{_lambda_.1} parent=95 // pred_region
          %826 = dma.done [#allocation21], 128
        $region140: #{_lambda_.1} parent=95 // pred_fallthru
          _
        // Predicated region
        $region141: #{_lambda_.1} parent=95 // pred_check
          %p827 = pneg %p323
        $region142: #{_lambda_.1} parent=95 // pred_check_branch
          %829 = sbr.rel (%p827) target = $region144
        $region143: #{_lambda_.1} parent=95 // pred_region
          %831 = dma.done [#allocation24], 128
        $region144: #{_lambda_.1} parent=95 // pred_fallthru
          _
        // Predicated region
        $region145: #{_lambda_.1} parent=95 // pred_check
          %p832 = pneg %p344
        $region146: #{_lambda_.1} parent=95 // pred_check_branch
          %834 = sbr.rel (%p832) target = $region148
        $region147: #{_lambda_.1} parent=95 // pred_region
          %836 = dma.done [#allocation24], 640
        $region148: #{_lambda_.1} parent=95 // pred_fallthru
          _
        // Predicated region
        $region149: #{_lambda_.1} parent=95 // pred_check
          %p837 = pneg %p365
        $region150: #{_lambda_.1} parent=95 // pred_check_branch
          %839 = sbr.rel (%p837) target = $region152
        $region151: #{_lambda_.1} parent=95 // pred_region
          %841 = dma.done [#allocation27], 640
        $region152: #{_lambda_.1} parent=95 // pred_fallthru
          _
        // Predicated region
        $region153: #{_lambda_.1} parent=95 // pred_check
          %p842 = pneg %p386
        $region154: #{_lambda_.1} parent=95 // pred_check_branch
          %844 = sbr.rel (%p842) target = $region156
        $region155: #{_lambda_.1} parent=95 // pred_region
          %846 = dma.done [#allocation27], 128
        $region156: #{_lambda_.1} parent=95 // pred_fallthru
          _
        // Predicated region
        $region157: #{_lambda_.1} parent=95 // pred_check
          %p847 = pneg %p407
        $region158: #{_lambda_.1} parent=95 // pred_check_branch
          %849 = sbr.rel (%p847) target = $region160
        $region159: #{_lambda_.1} parent=95 // pred_region
          %851 = dma.done [#allocation30], 128
        $region160: #{_lambda_.1} parent=95 // pred_fallthru
          _
        // Predicated region
        $region161: #{_lambda_.1} parent=95 // pred_check
          %p852 = pneg %p428
        $region162: #{_lambda_.1} parent=95 // pred_check_branch
          %854 = sbr.rel (%p852) target = $region164
        $region163: #{_lambda_.1} parent=95 // pred_region
          %856 = dma.done [#allocation30], 128
        $region164: #{_lambda_.1} parent=95 // pred_fallthru
          _
        // Predicated region
        $region165: #{_lambda_.1} parent=95 // pred_check
          %p857 = pneg %p449
        $region166: #{_lambda_.1} parent=95 // pred_check_branch
          %859 = sbr.rel (%p857) target = $region168
        $region167: #{_lambda_.1} parent=95 // pred_region
          %861 = dma.done [#allocation33], 128
        $region168: #{_lambda_.1} parent=95 // pred_fallthru
          _
        %s862 = sand.u32 %s58, 1
        %s863 = scalar_lea.sflag [#allocation6], %s862
        %s864 = sand.u32 %s58, 1
        %s865 = smul.addr %s864, 8
        %s866 = scalar_lea.vmem [#allocation5], %s865
        %p867 = pneg %p71
        %p868 = pneg %p68
        %p869 = pneg %p92
        %p870 = pneg %p89
        %p871 = pneg %p113
        %p872 = pneg %p110
        %p873 = pneg %p134
        %p874 = pneg %p131
        %p875 = pneg %p155
        %p876 = pneg %p152
        %p877 = pneg %p176
        %p878 = pneg %p173
        %p879 = pneg %p197
        %p880 = pneg %p194
        %p881 = pneg %p218
        %p882 = pneg %p215
        %p883 = pneg %p239
        %p884 = pneg %p236
        %p885 = pneg %p260
        %p886 = pneg %p257
        %p887 = pneg %p281
        %p888 = pneg %p278
        %p889 = pneg %p302
        %p890 = pneg %p299
        %p891 = pneg %p323
        %p892 = pneg %p320
        %p893 = pneg %p344
        %p894 = pneg %p341
        %p895 = pneg %p365
        %p896 = pneg %p362
        %p897 = pneg %p386
        %p898 = pneg %p383
        %p899 = pneg %p407
        %p900 = pneg %p404
        %p901 = pneg %p428
        %p902 = pneg %p425
        %p903 = pneg %p449
        %p904 = pneg %p446
        %p905 = pneg %p475
        %p906 = pneg %p472
        %s907 = sand.u32 %s462, 1
        %s908 = scalar_lea.sflag [#allocation7], %s907
        %s909 = sand.u32 %s462, 1
        %s910 = smul.addr %s909, 8
        %s911 = scalar_lea.vmem [#allocation34], %s910
        %p912 = pneg %p501
        %p913 = pneg %p498
        %s914 = sand.u32 %s488, 1
        %s915 = scalar_lea.sflag [#allocation36], %s914
        %s916 = sand.u32 %s488, 1
        %s917 = smul.addr %s916, 8
        %s918 = scalar_lea.vmem [#allocation35], %s917
        %p919 = scmp.eq.s32.totalorder %s50, 0
        // Predicated region
        $region169: #{_lambda_.1} parent=95 // pred_check
          %p920 = pneg %p919
        $region170: #{_lambda_.1} parent=95 // pred_check_branch
          %922 = sbr.rel (%p920) target = $region172
        $region171: #{_lambda_.1} parent=95 // pred_region
          %vm923 = vcmask 130048
          %924 = vst.msk [vmem:[#allocation2] sm:$0xff] %vm923, 0.0
          %925 = vst.msk [vmem:[#allocation3] sm:$0xff] %vm923, 0.0
          %vm926 = vcmask 195584
          %927 = vst.msk [vmem:[#allocation4] sm:$0xff] %vm926, 0.0
        $region172: #{_lambda_.1} parent=95 // pred_fallthru
          _
        %v928 = vld [vmem:[%s771] sm:$0xff]
        %vm929 = vcmp.ne.f32.partialorder %v928, %v928
        %v930 = vsel %vm929, 1, 0
        %v931 = vcvt.s32.f32 %v930
        %vm932 = vcmask 64512
        %v933 = vsel %vm932, %v931, -inf
        %934 = vmax.xlane.f32.xlu0 %v933
        %v935 = vpop.xlane.xlu0 %934
        %vm936 = vcmp.gt.f32.partialorder %v935, 0.0
        %vm937 = vmxor %vm936, 1
        %v938 = vsel %vm937, 1, 0
        %vm939 = vcmp.eq.s32.totalorder %v938, 1
        %v940 = vsel %vm939, %v928, 0.0
        %v941 = vld [vmem:[#allocation8] sm:$0xff]
        %v942 = vld [vmem:[#allocation10] sm:$0x1]
        %v944 = vperm.slane %v942, 0
        %v947 = vsel %vm932, %v940, 0
        %949 = vmatpush.msra.mxu0 0.0
        %950 = vmatpush.msra.mxu0 0.0
        %951 = vmatpush.msra.mxu0 0.0
        %952 = vmatpush.msra.mxu0 0.0
        %953 = vmatpush.msra.mxu0 0.0
        %954 = vmatpush.msra.mxu0 0.0
        %955 = vmatpush.msra.mxu0 0.0
        %956 = vmatpush.msra.mxu0 0.0
        %957 = vmatpush.msra.mxu0 0.0
        %958 = vmatpush.msra.mxu0 0.0
        %959 = vmatpush.msra.mxu0 0.0
        %960 = vmatpush.msra.mxu0 0.0
        %961 = vmatpush.msra.mxu0 0.0
        %962 = vmatpush.msra.mxu0 0.0
        %963 = vmatpush.msra.mxu0 0.0
        %v964 = vand.u32 %v941, 4294901760
        %965 = vmatpush.msra.mxu0 %v964
        %v966 = vand.u32 %v947, 4294901760
        %v967 = vsub.f32 %v947, %v966
        %v968 = vand.u32 %v967, 4294901760
        %v969 = vsub.f32 %v967, %v968
        %v970 = vand.u32 %v969, 4294901760
        %971 = vmatmul.f32.gmra.mxu0 %v970
        %v972 = vpop.f32.mrf.mxu0
        %v973 = vadd.f32 %v944, %v972
        %974 = vdwg.mxu0
        %975 = vmatpush.msra.mxu0 0.0
        %976 = vmatpush.msra.mxu0 0.0
        %977 = vmatpush.msra.mxu0 0.0
        %978 = vmatpush.msra.mxu0 0.0
        %979 = vmatpush.msra.mxu0 0.0
        %980 = vmatpush.msra.mxu0 0.0
        %981 = vmatpush.msra.mxu0 0.0
        %982 = vmatpush.msra.mxu0 0.0
        %983 = vmatpush.msra.mxu0 0.0
        %984 = vmatpush.msra.mxu0 0.0
        %985 = vmatpush.msra.mxu0 0.0
        %986 = vmatpush.msra.mxu0 0.0
        %987 = vmatpush.msra.mxu0 0.0
        %988 = vmatpush.msra.mxu0 0.0
        %989 = vmatpush.msra.mxu0 0.0
        %v990 = vand.u32 %v941, 4294901760
        %v991 = vsub.f32 %v941, %v990
        %v992 = vand.u32 %v991, 4294901760
        %v993 = vsub.f32 %v991, %v992
        %v994 = vand.u32 %v993, 4294901760
        %995 = vmatpush.msra.mxu0 %v994
        %v996 = vand.u32 %v947, 4294901760
        %997 = vmatmul.f32.gmra.mxu0 %v996
        %v998 = vpop.f32.mrf.mxu0
        %v999 = vadd.f32 %v973, %v998
        %1000 = vdwg.mxu0
        %1001 = vmatpush.msra.mxu0 0.0
        %1002 = vmatpush.msra.mxu0 0.0
        %1003 = vmatpush.msra.mxu0 0.0
        %1004 = vmatpush.msra.mxu0 0.0
        %1005 = vmatpush.msra.mxu0 0.0
        %1006 = vmatpush.msra.mxu0 0.0
        %1007 = vmatpush.msra.mxu0 0.0
        %1008 = vmatpush.msra.mxu0 0.0
        %1009 = vmatpush.msra.mxu0 0.0
        %1010 = vmatpush.msra.mxu0 0.0
        %1011 = vmatpush.msra.mxu0 0.0
        %1012 = vmatpush.msra.mxu0 0.0
        %1013 = vmatpush.msra.mxu0 0.0
        %1014 = vmatpush.msra.mxu0 0.0
        %1015 = vmatpush.msra.mxu0 0.0
        %v1016 = vand.u32 %v941, 4294901760
        %v1017 = vsub.f32 %v941, %v1016
        %1018 = vmatpush.msra.mxu0 %v1017
        %v1019 = vand.u32 %v947, 4294901760
        %v1020 = vsub.f32 %v947, %v1019
        %1021 = vmatmul.f32.gmra.mxu0 %v1020
        %v1022 = vpop.f32.mrf.mxu0
        %v1023 = vadd.f32 %v999, %v1022
        %1024 = vdwg.mxu0
        %1025 = vmatpush.msra.mxu0 0.0
        %1026 = vmatpush.msra.mxu0 0.0
        %1027 = vmatpush.msra.mxu0 0.0
        %1028 = vmatpush.msra.mxu0 0.0
        %1029 = vmatpush.msra.mxu0 0.0
        %1030 = vmatpush.msra.mxu0 0.0
        %1031 = vmatpush.msra.mxu0 0.0
        %1032 = vmatpush.msra.mxu0 0.0
        %1033 = vmatpush.msra.mxu0 0.0
        %1034 = vmatpush.msra.mxu0 0.0
        %1035 = vmatpush.msra.mxu0 0.0
        %1036 = vmatpush.msra.mxu0 0.0
        %1037 = vmatpush.msra.mxu0 0.0
        %1038 = vmatpush.msra.mxu0 0.0
        %1039 = vmatpush.msra.mxu0 0.0
        %v1040 = vand.u32 %v941, 4294901760
        %1041 = vmatpush.msra.mxu0 %v1040
        %v1042 = vand.u32 %v947, 4294901760
        %v1043 = vsub.f32 %v947, %v1042
        %v1044 = vand.u32 %v1043, 4294901760
        %1045 = vmatmul.f32.gmra.mxu0 %v1044
        %v1046 = vpop.f32.mrf.mxu0
        %v1047 = vadd.f32 %v1023, %v1046
        %1048 = vdwg.mxu0
        %1049 = vmatpush.msra.mxu0 0.0
        %1050 = vmatpush.msra.mxu0 0.0
        %1051 = vmatpush.msra.mxu0 0.0
        %1052 = vmatpush.msra.mxu0 0.0
        %1053 = vmatpush.msra.mxu0 0.0
        %1054 = vmatpush.msra.mxu0 0.0
        %1055 = vmatpush.msra.mxu0 0.0
        %1056 = vmatpush.msra.mxu0 0.0
        %1057 = vmatpush.msra.mxu0 0.0
        %1058 = vmatpush.msra.mxu0 0.0
        %1059 = vmatpush.msra.mxu0 0.0
        %1060 = vmatpush.msra.mxu0 0.0
        %1061 = vmatpush.msra.mxu0 0.0
        %1062 = vmatpush.msra.mxu0 0.0
        %1063 = vmatpush.msra.mxu0 0.0
        %v1064 = vand.u32 %v941, 4294901760
        %v1065 = vsub.f32 %v941, %v1064
        %v1066 = vand.u32 %v1065, 4294901760
        %1067 = vmatpush.msra.mxu0 %v1066
        %v1068 = vand.u32 %v947, 4294901760
        %1069 = vmatmul.f32.gmra.mxu0 %v1068
        %v1070 = vpop.f32.mrf.mxu0
        %v1071 = vadd.f32 %v1047, %v1070
        %1072 = vdwg.mxu0
        %1073 = vmatpush.msra.mxu0 0.0
        %1074 = vmatpush.msra.mxu0 0.0
        %1075 = vmatpush.msra.mxu0 0.0
        %1076 = vmatpush.msra.mxu0 0.0
        %1077 = vmatpush.msra.mxu0 0.0
        %1078 = vmatpush.msra.mxu0 0.0
        %1079 = vmatpush.msra.mxu0 0.0
        %1080 = vmatpush.msra.mxu0 0.0
        %1081 = vmatpush.msra.mxu0 0.0
        %1082 = vmatpush.msra.mxu0 0.0
        %1083 = vmatpush.msra.mxu0 0.0
        %1084 = vmatpush.msra.mxu0 0.0
        %1085 = vmatpush.msra.mxu0 0.0
        %1086 = vmatpush.msra.mxu0 0.0
        %1087 = vmatpush.msra.mxu0 0.0
        %v1088 = vand.u32 %v941, 4294901760
        %1089 = vmatpush.msra.mxu0 %v1088
        %v1090 = vand.u32 %v947, 4294901760
        %1091 = vmatmul.f32.gmra.mxu0 %v1090
        %v1092 = vpop.f32.mrf.mxu0
        %v1093 = vadd.f32 %v1071, %v1092
        %1094 = vdwg.mxu0
        %v1095 = vsel %vm939, %v1093, 0.0
        %v1096 = vld [vmem:[#allocation11] sm:$0xff]
        %v1097 = vld [vmem:[#allocation11 + $0x8] sm:$0xff]
        %v1098 = vld [vmem:[#allocation11 + $0x10] sm:$0xff]
        %v1099 = vld [vmem:[#allocation11 + $0x18] sm:$0xff]
        %v1100 = vld [vmem:[#allocation2] sm:$0xff]
        %v1101 = vld [vmem:[#allocation13] sm:$0xff]
        %v1102 = vld [vmem:[#allocation13 + $0x8] sm:$0xff]
        %vm1103 = vcmask 130048
        %v1105 = vsel %vm1103, %v1100, 0
        %1107 = vmatpush.msra.mxu0 0.0
        %1108 = vmatpush.msra.mxu0 0.0
        %1109 = vmatpush.msra.mxu0 0.0
        %1110 = vmatpush.msra.mxu0 0.0
        %1111 = vmatpush.msra.mxu0 0.0
        %1112 = vmatpush.msra.mxu0 0.0
        %1113 = vmatpush.msra.mxu0 0.0
        %1114 = vmatpush.msra.mxu0 0.0
        %1115 = vmatpush.msra.mxu0 0.0
        %1116 = vmatpush.msra.mxu0 0.0
        %1117 = vmatpush.msra.mxu0 0.0
        %1118 = vmatpush.msra.mxu0 0.0
        %1119 = vmatpush.msra.mxu0 0.0
        %1120 = vmatpush.msra.mxu0 0.0
        %v1121 = vand.u32 %v1102, 4294901760
        %1122 = vmatpush.msra.mxu0 %v1121
        %v1123 = vand.u32 %v1101, 4294901760
        %1124 = vmatpush.msra.mxu0 %v1123
        %v1125 = vand.u32 %v1105, 4294901760
        %v1126 = vsub.f32 %v1105, %v1125
        %v1127 = vand.u32 %v1126, 4294901760
        %v1128 = vsub.f32 %v1126, %v1127
        %v1129 = vand.u32 %v1128, 4294901760
        %1130 = vmatmul.f32.gmra.mxu0 %v1129
        %v1131 = vpop.f32.mrf.mxu0
        %v1132 = vadd.f32 0.0, %v1131
        %1133 = vdwg.mxu0
        %1134 = vmatpush.msra.mxu0 0.0
        %1135 = vmatpush.msra.mxu0 0.0
        %1136 = vmatpush.msra.mxu0 0.0
        %1137 = vmatpush.msra.mxu0 0.0
        %1138 = vmatpush.msra.mxu0 0.0
        %1139 = vmatpush.msra.mxu0 0.0
        %1140 = vmatpush.msra.mxu0 0.0
        %1141 = vmatpush.msra.mxu0 0.0
        %1142 = vmatpush.msra.mxu0 0.0
        %1143 = vmatpush.msra.mxu0 0.0
        %1144 = vmatpush.msra.mxu0 0.0
        %1145 = vmatpush.msra.mxu0 0.0
        %1146 = vmatpush.msra.mxu0 0.0
        %1147 = vmatpush.msra.mxu0 0.0
        %v1148 = vand.u32 %v1102, 4294901760
        %v1149 = vsub.f32 %v1102, %v1148
        %v1150 = vand.u32 %v1149, 4294901760
        %v1151 = vsub.f32 %v1149, %v1150
        %v1152 = vand.u32 %v1151, 4294901760
        %1153 = vmatpush.msra.mxu0 %v1152
        %v1154 = vand.u32 %v1101, 4294901760
        %v1155 = vsub.f32 %v1101, %v1154
        %v1156 = vand.u32 %v1155, 4294901760
        %v1157 = vsub.f32 %v1155, %v1156
        %v1158 = vand.u32 %v1157, 4294901760
        %1159 = vmatpush.msra.mxu0 %v1158
        %v1160 = vand.u32 %v1105, 4294901760
        %1161 = vmatmul.f32.gmra.mxu0 %v1160
        %v1162 = vpop.f32.mrf.mxu0
        %v1163 = vadd.f32 %v1132, %v1162
        %1164 = vdwg.mxu0
        %1165 = vmatpush.msra.mxu0 0.0
        %1166 = vmatpush.msra.mxu0 0.0
        %1167 = vmatpush.msra.mxu0 0.0
        %1168 = vmatpush.msra.mxu0 0.0
        %1169 = vmatpush.msra.mxu0 0.0
        %1170 = vmatpush.msra.mxu0 0.0
        %1171 = vmatpush.msra.mxu0 0.0
        %1172 = vmatpush.msra.mxu0 0.0
        %1173 = vmatpush.msra.mxu0 0.0
        %1174 = vmatpush.msra.mxu0 0.0
        %1175 = vmatpush.msra.mxu0 0.0
        %1176 = vmatpush.msra.mxu0 0.0
        %1177 = vmatpush.msra.mxu0 0.0
        %1178 = vmatpush.msra.mxu0 0.0
        %v1179 = vand.u32 %v1102, 4294901760
        %v1180 = vsub.f32 %v1102, %v1179
        %1181 = vmatpush.msra.mxu0 %v1180
        %v1182 = vand.u32 %v1101, 4294901760
        %v1183 = vsub.f32 %v1101, %v1182
        %1184 = vmatpush.msra.mxu0 %v1183
        %v1185 = vand.u32 %v1105, 4294901760
        %v1186 = vsub.f32 %v1105, %v1185
        %1187 = vmatmul.f32.gmra.mxu0 %v1186
        %v1188 = vpop.f32.mrf.mxu0
        %v1189 = vadd.f32 %v1163, %v1188
        %1190 = vdwg.mxu0
        %1191 = vmatpush.msra.mxu0 0.0
        %1192 = vmatpush.msra.mxu0 0.0
        %1193 = vmatpush.msra.mxu0 0.0
        %1194 = vmatpush.msra.mxu0 0.0
        %1195 = vmatpush.msra.mxu0 0.0
        %1196 = vmatpush.msra.mxu0 0.0
        %1197 = vmatpush.msra.mxu0 0.0
        %1198 = vmatpush.msra.mxu0 0.0
        %1199 = vmatpush.msra.mxu0 0.0
        %1200 = vmatpush.msra.mxu0 0.0
        %1201 = vmatpush.msra.mxu0 0.0
        %1202 = vmatpush.msra.mxu0 0.0
        %1203 = vmatpush.msra.mxu0 0.0
        %1204 = vmatpush.msra.mxu0 0.0
        %v1205 = vand.u32 %v1102, 4294901760
        %1206 = vmatpush.msra.mxu0 %v1205
        %v1207 = vand.u32 %v1101, 4294901760
        %1208 = vmatpush.msra.mxu0 %v1207
        %v1209 = vand.u32 %v1105, 4294901760
        %v1210 = vsub.f32 %v1105, %v1209
        %v1211 = vand.u32 %v1210, 4294901760
        %1212 = vmatmul.f32.gmra.mxu0 %v1211
        %v1213 = vpop.f32.mrf.mxu0
        %v1214 = vadd.f32 %v1189, %v1213
        %1215 = vdwg.mxu0
        %1216 = vmatpush.msra.mxu0 0.0
        %1217 = vmatpush.msra.mxu0 0.0
        %1218 = vmatpush.msra.mxu0 0.0
        %1219 = vmatpush.msra.mxu0 0.0
        %1220 = vmatpush.msra.mxu0 0.0
        %1221 = vmatpush.msra.mxu0 0.0
        %1222 = vmatpush.msra.mxu0 0.0
        %1223 = vmatpush.msra.mxu0 0.0
        %1224 = vmatpush.msra.mxu0 0.0
        %1225 = vmatpush.msra.mxu0 0.0
        %1226 = vmatpush.msra.mxu0 0.0
        %1227 = vmatpush.msra.mxu0 0.0
        %1228 = vmatpush.msra.mxu0 0.0
        %1229 = vmatpush.msra.mxu0 0.0
        %v1230 = vand.u32 %v1102, 4294901760
        %v1231 = vsub.f32 %v1102, %v1230
        %v1232 = vand.u32 %v1231, 4294901760
        %1233 = vmatpush.msra.mxu0 %v1232
        %v1234 = vand.u32 %v1101, 4294901760
        %v1235 = vsub.f32 %v1101, %v1234
        %v1236 = vand.u32 %v1235, 4294901760
        %1237 = vmatpush.msra.mxu0 %v1236
        %v1238 = vand.u32 %v1105, 4294901760
        %1239 = vmatmul.f32.gmra.mxu0 %v1238
        %v1240 = vpop.f32.mrf.mxu0
        %v1241 = vadd.f32 %v1214, %v1240
        %1242 = vdwg.mxu0
        %1243 = vmatpush.msra.mxu0 0.0
        %1244 = vmatpush.msra.mxu0 0.0
        %1245 = vmatpush.msra.mxu0 0.0
        %1246 = vmatpush.msra.mxu0 0.0
        %1247 = vmatpush.msra.mxu0 0.0
        %1248 = vmatpush.msra.mxu0 0.0
        %1249 = vmatpush.msra.mxu0 0.0
        %1250 = vmatpush.msra.mxu0 0.0
        %1251 = vmatpush.msra.mxu0 0.0
        %1252 = vmatpush.msra.mxu0 0.0
        %1253 = vmatpush.msra.mxu0 0.0
        %1254 = vmatpush.msra.mxu0 0.0
        %1255 = vmatpush.msra.mxu0 0.0
        %1256 = vmatpush.msra.mxu0 0.0
        %v1257 = vand.u32 %v1102, 4294901760
        %1258 = vmatpush.msra.mxu0 %v1257
        %v1259 = vand.u32 %v1101, 4294901760
        %1260 = vmatpush.msra.mxu0 %v1259
        %v1261 = vand.u32 %v1105, 4294901760
        %1262 = vmatmul.f32.gmra.mxu0 %v1261
        %v1263 = vpop.f32.mrf.mxu0
        %v1264 = vadd.f32 %v1241, %v1263
        %1265 = vdwg.mxu0
        %vm1266 = vcmask 261120
        %v1268 = vsel %vm1266, %v1095, 0
        %1270 = vmatpush.msra.mxu0 0.0
        %1271 = vmatpush.msra.mxu0 0.0
        %1272 = vmatpush.msra.mxu0 0.0
        %1273 = vmatpush.msra.mxu0 0.0
        %1274 = vmatpush.msra.mxu0 0.0
        %1275 = vmatpush.msra.mxu0 0.0
        %1276 = vmatpush.msra.mxu0 0.0
        %1277 = vmatpush.msra.mxu0 0.0
        %1278 = vmatpush.msra.mxu0 0.0
        %1279 = vmatpush.msra.mxu0 0.0
        %1280 = vmatpush.msra.mxu0 0.0
        %1281 = vmatpush.msra.mxu0 0.0
        %v1282 = vand.u32 %v1099, 4294901760
        %1283 = vmatpush.msra.mxu0 %v1282
        %v1284 = vand.u32 %v1098, 4294901760
        %1285 = vmatpush.msra.mxu0 %v1284
        %v1286 = vand.u32 %v1097, 4294901760
        %1287 = vmatpush.msra.mxu0 %v1286
        %v1288 = vand.u32 %v1096, 4294901760
        %1289 = vmatpush.msra.mxu0 %v1288
        %v1290 = vand.u32 %v1268, 4294901760
        %v1291 = vsub.f32 %v1268, %v1290
        %v1292 = vand.u32 %v1291, 4294901760
        %v1293 = vsub.f32 %v1291, %v1292
        %v1294 = vand.u32 %v1293, 4294901760
        %1295 = vmatmul.f32.gmra.mxu0 %v1294
        %v1296 = vpop.f32.mrf.mxu0
        %v1297 = vadd.f32 %v1264, %v1296
        %1298 = vdwg.mxu0
        %1299 = vmatpush.msra.mxu0 0.0
        %1300 = vmatpush.msra.mxu0 0.0
        %1301 = vmatpush.msra.mxu0 0.0
        %1302 = vmatpush.msra.mxu0 0.0
        %1303 = vmatpush.msra.mxu0 0.0
        %1304 = vmatpush.msra.mxu0 0.0
        %1305 = vmatpush.msra.mxu0 0.0
        %1306 = vmatpush.msra.mxu0 0.0
        %1307 = vmatpush.msra.mxu0 0.0
        %1308 = vmatpush.msra.mxu0 0.0
        %1309 = vmatpush.msra.mxu0 0.0
        %1310 = vmatpush.msra.mxu0 0.0
        %v1311 = vand.u32 %v1099, 4294901760
        %v1312 = vsub.f32 %v1099, %v1311
        %v1313 = vand.u32 %v1312, 4294901760
        %v1314 = vsub.f32 %v1312, %v1313
        %v1315 = vand.u32 %v1314, 4294901760
        %1316 = vmatpush.msra.mxu0 %v1315
        %v1317 = vand.u32 %v1098, 4294901760
        %v1318 = vsub.f32 %v1098, %v1317
        %v1319 = vand.u32 %v1318, 4294901760
        %v1320 = vsub.f32 %v1318, %v1319
        %v1321 = vand.u32 %v1320, 4294901760
        %1322 = vmatpush.msra.mxu0 %v1321
        %v1323 = vand.u32 %v1097, 4294901760
        %v1324 = vsub.f32 %v1097, %v1323
        %v1325 = vand.u32 %v1324, 4294901760
        %v1326 = vsub.f32 %v1324, %v1325
        %v1327 = vand.u32 %v1326, 4294901760
        %1328 = vmatpush.msra.mxu0 %v1327
        %v1329 = vand.u32 %v1096, 4294901760
        %v1330 = vsub.f32 %v1096, %v1329
        %v1331 = vand.u32 %v1330, 4294901760
        %v1332 = vsub.f32 %v1330, %v1331
        %v1333 = vand.u32 %v1332, 4294901760
        %1334 = vmatpush.msra.mxu0 %v1333
        %v1335 = vand.u32 %v1268, 4294901760
        %1336 = vmatmul.f32.gmra.mxu0 %v1335
        %v1337 = vpop.f32.mrf.mxu0
        %v1338 = vadd.f32 %v1297, %v1337
        %1339 = vdwg.mxu0
        %1340 = vmatpush.msra.mxu0 0.0
        %1341 = vmatpush.msra.mxu0 0.0
        %1342 = vmatpush.msra.mxu0 0.0
        %1343 = vmatpush.msra.mxu0 0.0
        %1344 = vmatpush.msra.mxu0 0.0
        %1345 = vmatpush.msra.mxu0 0.0
        %1346 = vmatpush.msra.mxu0 0.0
        %1347 = vmatpush.msra.mxu0 0.0
        %1348 = vmatpush.msra.mxu0 0.0
        %1349 = vmatpush.msra.mxu0 0.0
        %1350 = vmatpush.msra.mxu0 0.0
        %1351 = vmatpush.msra.mxu0 0.0
        %v1352 = vand.u32 %v1099, 4294901760
        %v1353 = vsub.f32 %v1099, %v1352
        %1354 = vmatpush.msra.mxu0 %v1353
        %v1355 = vand.u32 %v1098, 4294901760
        %v1356 = vsub.f32 %v1098, %v1355
        %1357 = vmatpush.msra.mxu0 %v1356
        %v1358 = vand.u32 %v1097, 4294901760
        %v1359 = vsub.f32 %v1097, %v1358
        %1360 = vmatpush.msra.mxu0 %v1359
        %v1361 = vand.u32 %v1096, 4294901760
        %v1362 = vsub.f32 %v1096, %v1361
        %1363 = vmatpush.msra.mxu0 %v1362
        %v1364 = vand.u32 %v1268, 4294901760
        %v1365 = vsub.f32 %v1268, %v1364
        %1366 = vmatmul.f32.gmra.mxu0 %v1365
        %v1367 = vpop.f32.mrf.mxu0
        %v1368 = vadd.f32 %v1338, %v1367
        %1369 = vdwg.mxu0
        %1370 = vmatpush.msra.mxu0 0.0
        %1371 = vmatpush.msra.mxu0 0.0
        %1372 = vmatpush.msra.mxu0 0.0
        %1373 = vmatpush.msra.mxu0 0.0
        %1374 = vmatpush.msra.mxu0 0.0
        %1375 = vmatpush.msra.mxu0 0.0
        %1376 = vmatpush.msra.mxu0 0.0
        %1377 = vmatpush.msra.mxu0 0.0
        %1378 = vmatpush.msra.mxu0 0.0
        %1379 = vmatpush.msra.mxu0 0.0
        %1380 = vmatpush.msra.mxu0 0.0
        %1381 = vmatpush.msra.mxu0 0.0
        %v1382 = vand.u32 %v1099, 4294901760
        %1383 = vmatpush.msra.mxu0 %v1382
        %v1384 = vand.u32 %v1098, 4294901760
        %1385 = vmatpush.msra.mxu0 %v1384
        %v1386 = vand.u32 %v1097, 4294901760
        %1387 = vmatpush.msra.mxu0 %v1386
        %v1388 = vand.u32 %v1096, 4294901760
        %1389 = vmatpush.msra.mxu0 %v1388
        %v1390 = vand.u32 %v1268, 4294901760
        %v1391 = vsub.f32 %v1268, %v1390
        %v1392 = vand.u32 %v1391, 4294901760
        %1393 = vmatmul.f32.gmra.mxu0 %v1392
        %v1394 = vpop.f32.mrf.mxu0
        %v1395 = vadd.f32 %v1368, %v1394
        %1396 = vdwg.mxu0
        %1397 = vmatpush.msra.mxu0 0.0
        %1398 = vmatpush.msra.mxu0 0.0
        %1399 = vmatpush.msra.mxu0 0.0
        %1400 = vmatpush.msra.mxu0 0.0
        %1401 = vmatpush.msra.mxu0 0.0
        %1402 = vmatpush.msra.mxu0 0.0
        %1403 = vmatpush.msra.mxu0 0.0
        %1404 = vmatpush.msra.mxu0 0.0
        %1405 = vmatpush.msra.mxu0 0.0
        %1406 = vmatpush.msra.mxu0 0.0
        %1407 = vmatpush.msra.mxu0 0.0
        %1408 = vmatpush.msra.mxu0 0.0
        %v1409 = vand.u32 %v1099, 4294901760
        %v1410 = vsub.f32 %v1099, %v1409
        %v1411 = vand.u32 %v1410, 4294901760
        %1412 = vmatpush.msra.mxu0 %v1411
        %v1413 = vand.u32 %v1098, 4294901760
        %v1414 = vsub.f32 %v1098, %v1413
        %v1415 = vand.u32 %v1414, 4294901760
        %1416 = vmatpush.msra.mxu0 %v1415
        %v1417 = vand.u32 %v1097, 4294901760
        %v1418 = vsub.f32 %v1097, %v1417
        %v1419 = vand.u32 %v1418, 4294901760
        %1420 = vmatpush.msra.mxu0 %v1419
        %v1421 = vand.u32 %v1096, 4294901760
        %v1422 = vsub.f32 %v1096, %v1421
        %v1423 = vand.u32 %v1422, 4294901760
        %1424 = vmatpush.msra.mxu0 %v1423
        %v1425 = vand.u32 %v1268, 4294901760
        %1426 = vmatmul.f32.gmra.mxu0 %v1425
        %v1427 = vpop.f32.mrf.mxu0
        %v1428 = vadd.f32 %v1395, %v1427
        %1429 = vdwg.mxu0
        %1430 = vmatpush.msra.mxu0 0.0
        %1431 = vmatpush.msra.mxu0 0.0
        %1432 = vmatpush.msra.mxu0 0.0
        %1433 = vmatpush.msra.mxu0 0.0
        %1434 = vmatpush.msra.mxu0 0.0
        %1435 = vmatpush.msra.mxu0 0.0
        %1436 = vmatpush.msra.mxu0 0.0
        %1437 = vmatpush.msra.mxu0 0.0
        %1438 = vmatpush.msra.mxu0 0.0
        %1439 = vmatpush.msra.mxu0 0.0
        %1440 = vmatpush.msra.mxu0 0.0
        %1441 = vmatpush.msra.mxu0 0.0
        %v1442 = vand.u32 %v1099, 4294901760
        %1443 = vmatpush.msra.mxu0 %v1442
        %v1444 = vand.u32 %v1098, 4294901760
        %1445 = vmatpush.msra.mxu0 %v1444
        %v1446 = vand.u32 %v1097, 4294901760
        %1447 = vmatpush.msra.mxu0 %v1446
        %v1448 = vand.u32 %v1096, 4294901760
        %1449 = vmatpush.msra.mxu0 %v1448
        %v1450 = vand.u32 %v1268, 4294901760
        %1451 = vmatmul.f32.gmra.mxu0 %v1450
        %v1452 = vpop.f32.mrf.mxu0
        %v1453 = vadd.f32 %v1428, %v1452
        %1454 = vdwg.mxu0
        %v1455 = vld [vmem:[#allocation14] sm:$0x1]
        %v1457 = vperm.slane %v1455, 0
        %v1459 = vadd.f32 %v1453, %v1457
        %v1460 = vtanh.pop %v1459
        %v1461 = vld [vmem:[#allocation16] sm:$0xff]
        %v1462 = vld [vmem:[#allocation16 + $0x8] sm:$0xff]
        %v1463 = vld [vmem:[#allocation3] sm:$0xff]
        %v1464 = vld [vmem:[#allocation17] sm:$0xff]
        %v1465 = vld [vmem:[#allocation17 + $0x8] sm:$0xff]
        %v1467 = vsel %vm1103, %v1463, 0
        %1469 = vmatpush.msra.mxu0 0.0
        %1470 = vmatpush.msra.mxu0 0.0
        %1471 = vmatpush.msra.mxu0 0.0
        %1472 = vmatpush.msra.mxu0 0.0
        %1473 = vmatpush.msra.mxu0 0.0
        %1474 = vmatpush.msra.mxu0 0.0
        %1475 = vmatpush.msra.mxu0 0.0
        %1476 = vmatpush.msra.mxu0 0.0
        %1477 = vmatpush.msra.mxu0 0.0
        %1478 = vmatpush.msra.mxu0 0.0
        %1479 = vmatpush.msra.mxu0 0.0
        %1480 = vmatpush.msra.mxu0 0.0
        %1481 = vmatpush.msra.mxu0 0.0
        %1482 = vmatpush.msra.mxu0 0.0
        %v1483 = vand.u32 %v1465, 4294901760
        %1484 = vmatpush.msra.mxu0 %v1483
        %v1485 = vand.u32 %v1464, 4294901760
        %1486 = vmatpush.msra.mxu0 %v1485
        %v1487 = vand.u32 %v1467, 4294901760
        %v1488 = vsub.f32 %v1467, %v1487
        %v1489 = vand.u32 %v1488, 4294901760
        %v1490 = vsub.f32 %v1488, %v1489
        %v1491 = vand.u32 %v1490, 4294901760
        %1492 = vmatmul.f32.gmra.mxu0 %v1491
        %v1493 = vpop.f32.mrf.mxu0
        %v1494 = vadd.f32 0.0, %v1493
        %1495 = vdwg.mxu0
        %1496 = vmatpush.msra.mxu0 0.0
        %1497 = vmatpush.msra.mxu0 0.0
        %1498 = vmatpush.msra.mxu0 0.0
        %1499 = vmatpush.msra.mxu0 0.0
        %1500 = vmatpush.msra.mxu0 0.0
        %1501 = vmatpush.msra.mxu0 0.0
        %1502 = vmatpush.msra.mxu0 0.0
        %1503 = vmatpush.msra.mxu0 0.0
        %1504 = vmatpush.msra.mxu0 0.0
        %1505 = vmatpush.msra.mxu0 0.0
        %1506 = vmatpush.msra.mxu0 0.0
        %1507 = vmatpush.msra.mxu0 0.0
        %1508 = vmatpush.msra.mxu0 0.0
        %1509 = vmatpush.msra.mxu0 0.0
        %v1510 = vand.u32 %v1465, 4294901760
        %v1511 = vsub.f32 %v1465, %v1510
        %v1512 = vand.u32 %v1511, 4294901760
        %v1513 = vsub.f32 %v1511, %v1512
        %v1514 = vand.u32 %v1513, 4294901760
        %1515 = vmatpush.msra.mxu0 %v1514
        %v1516 = vand.u32 %v1464, 4294901760
        %v1517 = vsub.f32 %v1464, %v1516
        %v1518 = vand.u32 %v1517, 4294901760
        %v1519 = vsub.f32 %v1517, %v1518
        %v1520 = vand.u32 %v1519, 4294901760
        %1521 = vmatpush.msra.mxu0 %v1520
        %v1522 = vand.u32 %v1467, 4294901760
        %1523 = vmatmul.f32.gmra.mxu0 %v1522
        %v1524 = vpop.f32.mrf.mxu0
        %v1525 = vadd.f32 %v1494, %v1524
        %1526 = vdwg.mxu0
        %1527 = vmatpush.msra.mxu0 0.0
        %1528 = vmatpush.msra.mxu0 0.0
        %1529 = vmatpush.msra.mxu0 0.0
        %1530 = vmatpush.msra.mxu0 0.0
        %1531 = vmatpush.msra.mxu0 0.0
        %1532 = vmatpush.msra.mxu0 0.0
        %1533 = vmatpush.msra.mxu0 0.0
        %1534 = vmatpush.msra.mxu0 0.0
        %1535 = vmatpush.msra.mxu0 0.0
        %1536 = vmatpush.msra.mxu0 0.0
        %1537 = vmatpush.msra.mxu0 0.0
        %1538 = vmatpush.msra.mxu0 0.0
        %1539 = vmatpush.msra.mxu0 0.0
        %1540 = vmatpush.msra.mxu0 0.0
        %v1541 = vand.u32 %v1465, 4294901760
        %v1542 = vsub.f32 %v1465, %v1541
        %1543 = vmatpush.msra.mxu0 %v1542
        %v1544 = vand.u32 %v1464, 4294901760
        %v1545 = vsub.f32 %v1464, %v1544
        %1546 = vmatpush.msra.mxu0 %v1545
        %v1547 = vand.u32 %v1467, 4294901760
        %v1548 = vsub.f32 %v1467, %v1547
        %1549 = vmatmul.f32.gmra.mxu0 %v1548
        %v1550 = vpop.f32.mrf.mxu0
        %v1551 = vadd.f32 %v1525, %v1550
        %1552 = vdwg.mxu0
        %1553 = vmatpush.msra.mxu0 0.0
        %1554 = vmatpush.msra.mxu0 0.0
        %1555 = vmatpush.msra.mxu0 0.0
        %1556 = vmatpush.msra.mxu0 0.0
        %1557 = vmatpush.msra.mxu0 0.0
        %1558 = vmatpush.msra.mxu0 0.0
        %1559 = vmatpush.msra.mxu0 0.0
        %1560 = vmatpush.msra.mxu0 0.0
        %1561 = vmatpush.msra.mxu0 0.0
        %1562 = vmatpush.msra.mxu0 0.0
        %1563 = vmatpush.msra.mxu0 0.0
        %1564 = vmatpush.msra.mxu0 0.0
        %1565 = vmatpush.msra.mxu0 0.0
        %1566 = vmatpush.msra.mxu0 0.0
        %v1567 = vand.u32 %v1465, 4294901760
        %1568 = vmatpush.msra.mxu0 %v1567
        %v1569 = vand.u32 %v1464, 4294901760
        %1570 = vmatpush.msra.mxu0 %v1569
        %v1571 = vand.u32 %v1467, 4294901760
        %v1572 = vsub.f32 %v1467, %v1571
        %v1573 = vand.u32 %v1572, 4294901760
        %1574 = vmatmul.f32.gmra.mxu0 %v1573
        %v1575 = vpop.f32.mrf.mxu0
        %v1576 = vadd.f32 %v1551, %v1575
        %1577 = vdwg.mxu0
        %1578 = vmatpush.msra.mxu0 0.0
        %1579 = vmatpush.msra.mxu0 0.0
        %1580 = vmatpush.msra.mxu0 0.0
        %1581 = vmatpush.msra.mxu0 0.0
        %1582 = vmatpush.msra.mxu0 0.0
        %1583 = vmatpush.msra.mxu0 0.0
        %1584 = vmatpush.msra.mxu0 0.0
        %1585 = vmatpush.msra.mxu0 0.0
        %1586 = vmatpush.msra.mxu0 0.0
        %1587 = vmatpush.msra.mxu0 0.0
        %1588 = vmatpush.msra.mxu0 0.0
        %1589 = vmatpush.msra.mxu0 0.0
        %1590 = vmatpush.msra.mxu0 0.0
        %1591 = vmatpush.msra.mxu0 0.0
        %v1592 = vand.u32 %v1465, 4294901760
        %v1593 = vsub.f32 %v1465, %v1592
        %v1594 = vand.u32 %v1593, 4294901760
        %1595 = vmatpush.msra.mxu0 %v1594
        %v1596 = vand.u32 %v1464, 4294901760
        %v1597 = vsub.f32 %v1464, %v1596
        %v1598 = vand.u32 %v1597, 4294901760
        %1599 = vmatpush.msra.mxu0 %v1598
        %v1600 = vand.u32 %v1467, 4294901760
        %1601 = vmatmul.f32.gmra.mxu0 %v1600
        %v1602 = vpop.f32.mrf.mxu0
        %v1603 = vadd.f32 %v1576, %v1602
        %1604 = vdwg.mxu0
        %1605 = vmatpush.msra.mxu0 0.0
        %1606 = vmatpush.msra.mxu0 0.0
        %1607 = vmatpush.msra.mxu0 0.0
        %1608 = vmatpush.msra.mxu0 0.0
        %1609 = vmatpush.msra.mxu0 0.0
        %1610 = vmatpush.msra.mxu0 0.0
        %1611 = vmatpush.msra.mxu0 0.0
        %1612 = vmatpush.msra.mxu0 0.0
        %1613 = vmatpush.msra.mxu0 0.0
        %1614 = vmatpush.msra.mxu0 0.0
        %1615 = vmatpush.msra.mxu0 0.0
        %1616 = vmatpush.msra.mxu0 0.0
        %1617 = vmatpush.msra.mxu0 0.0
        %1618 = vmatpush.msra.mxu0 0.0
        %v1619 = vand.u32 %v1465, 4294901760
        %1620 = vmatpush.msra.mxu0 %v1619
        %v1621 = vand.u32 %v1464, 4294901760
        %1622 = vmatpush.msra.mxu0 %v1621
        %v1623 = vand.u32 %v1467, 4294901760
        %1624 = vmatmul.f32.gmra.mxu0 %v1623
        %v1625 = vpop.f32.mrf.mxu0
        %v1626 = vadd.f32 %v1603, %v1625
        %1627 = vdwg.mxu0
        %v1629 = vsel %vm1103, %v1460, 0
        %1631 = vmatpush.msra.mxu0 0.0
        %1632 = vmatpush.msra.mxu0 0.0
        %1633 = vmatpush.msra.mxu0 0.0
        %1634 = vmatpush.msra.mxu0 0.0
        %1635 = vmatpush.msra.mxu0 0.0
        %1636 = vmatpush.msra.mxu0 0.0
        %1637 = vmatpush.msra.mxu0 0.0
        %1638 = vmatpush.msra.mxu0 0.0
        %1639 = vmatpush.msra.mxu0 0.0
        %1640 = vmatpush.msra.mxu0 0.0
        %1641 = vmatpush.msra.mxu0 0.0
        %1642 = vmatpush.msra.mxu0 0.0
        %1643 = vmatpush.msra.mxu0 0.0
        %1644 = vmatpush.msra.mxu0 0.0
        %v1645 = vand.u32 %v1462, 4294901760
        %1646 = vmatpush.msra.mxu0 %v1645
        %v1647 = vand.u32 %v1461, 4294901760
        %1648 = vmatpush.msra.mxu0 %v1647
        %v1649 = vand.u32 %v1629, 4294901760
        %v1650 = vsub.f32 %v1629, %v1649
        %v1651 = vand.u32 %v1650, 4294901760
        %v1652 = vsub.f32 %v1650, %v1651
        %v1653 = vand.u32 %v1652, 4294901760
        %1654 = vmatmul.f32.gmra.mxu0 %v1653
        %v1655 = vpop.f32.mrf.mxu0
        %v1656 = vadd.f32 %v1626, %v1655
        %1657 = vdwg.mxu0
        %1658 = vmatpush.msra.mxu0 0.0
        %1659 = vmatpush.msra.mxu0 0.0
        %1660 = vmatpush.msra.mxu0 0.0
        %1661 = vmatpush.msra.mxu0 0.0
        %1662 = vmatpush.msra.mxu0 0.0
        %1663 = vmatpush.msra.mxu0 0.0
        %1664 = vmatpush.msra.mxu0 0.0
        %1665 = vmatpush.msra.mxu0 0.0
        %1666 = vmatpush.msra.mxu0 0.0
        %1667 = vmatpush.msra.mxu0 0.0
        %1668 = vmatpush.msra.mxu0 0.0
        %1669 = vmatpush.msra.mxu0 0.0
        %1670 = vmatpush.msra.mxu0 0.0
        %1671 = vmatpush.msra.mxu0 0.0
        %v1672 = vand.u32 %v1462, 4294901760
        %v1673 = vsub.f32 %v1462, %v1672
        %v1674 = vand.u32 %v1673, 4294901760
        %v1675 = vsub.f32 %v1673, %v1674
        %v1676 = vand.u32 %v1675, 4294901760
        %1677 = vmatpush.msra.mxu0 %v1676
        %v1678 = vand.u32 %v1461, 4294901760
        %v1679 = vsub.f32 %v1461, %v1678
        %v1680 = vand.u32 %v1679, 4294901760
        %v1681 = vsub.f32 %v1679, %v1680
        %v1682 = vand.u32 %v1681, 4294901760
        %1683 = vmatpush.msra.mxu0 %v1682
        %v1684 = vand.u32 %v1629, 4294901760
        %1685 = vmatmul.f32.gmra.mxu0 %v1684
        %v1686 = vpop.f32.mrf.mxu0
        %v1687 = vadd.f32 %v1656, %v1686
        %1688 = vdwg.mxu0
        %1689 = vmatpush.msra.mxu0 0.0
        %1690 = vmatpush.msra.mxu0 0.0
        %1691 = vmatpush.msra.mxu0 0.0
        %1692 = vmatpush.msra.mxu0 0.0
        %1693 = vmatpush.msra.mxu0 0.0
        %1694 = vmatpush.msra.mxu0 0.0
        %1695 = vmatpush.msra.mxu0 0.0
        %1696 = vmatpush.msra.mxu0 0.0
        %1697 = vmatpush.msra.mxu0 0.0
        %1698 = vmatpush.msra.mxu0 0.0
        %1699 = vmatpush.msra.mxu0 0.0
        %1700 = vmatpush.msra.mxu0 0.0
        %1701 = vmatpush.msra.mxu0 0.0
        %1702 = vmatpush.msra.mxu0 0.0
        %v1703 = vand.u32 %v1462, 4294901760
        %v1704 = vsub.f32 %v1462, %v1703
        %1705 = vmatpush.msra.mxu0 %v1704
        %v1706 = vand.u32 %v1461, 4294901760
        %v1707 = vsub.f32 %v1461, %v1706
        %1708 = vmatpush.msra.mxu0 %v1707
        %v1709 = vand.u32 %v1629, 4294901760
        %v1710 = vsub.f32 %v1629, %v1709
        %1711 = vmatmul.f32.gmra.mxu0 %v1710
        %v1712 = vpop.f32.mrf.mxu0
        %v1713 = vadd.f32 %v1687, %v1712
        %1714 = vdwg.mxu0
        %1715 = vmatpush.msra.mxu0 0.0
        %1716 = vmatpush.msra.mxu0 0.0
        %1717 = vmatpush.msra.mxu0 0.0
        %1718 = vmatpush.msra.mxu0 0.0
        %1719 = vmatpush.msra.mxu0 0.0
        %1720 = vmatpush.msra.mxu0 0.0
        %1721 = vmatpush.msra.mxu0 0.0
        %1722 = vmatpush.msra.mxu0 0.0
        %1723 = vmatpush.msra.mxu0 0.0
        %1724 = vmatpush.msra.mxu0 0.0
        %1725 = vmatpush.msra.mxu0 0.0
        %1726 = vmatpush.msra.mxu0 0.0
        %1727 = vmatpush.msra.mxu0 0.0
        %1728 = vmatpush.msra.mxu0 0.0
        %v1729 = vand.u32 %v1462, 4294901760
        %1730 = vmatpush.msra.mxu0 %v1729
        %v1731 = vand.u32 %v1461, 4294901760
        %1732 = vmatpush.msra.mxu0 %v1731
        %v1733 = vand.u32 %v1629, 4294901760
        %v1734 = vsub.f32 %v1629, %v1733
        %v1735 = vand.u32 %v1734, 4294901760
        %1736 = vmatmul.f32.gmra.mxu0 %v1735
        %v1737 = vpop.f32.mrf.mxu0
        %v1738 = vadd.f32 %v1713, %v1737
        %1739 = vdwg.mxu0
        %1740 = vmatpush.msra.mxu0 0.0
        %1741 = vmatpush.msra.mxu0 0.0
        %1742 = vmatpush.msra.mxu0 0.0
        %1743 = vmatpush.msra.mxu0 0.0
        %1744 = vmatpush.msra.mxu0 0.0
        %1745 = vmatpush.msra.mxu0 0.0
        %1746 = vmatpush.msra.mxu0 0.0
        %1747 = vmatpush.msra.mxu0 0.0
        %1748 = vmatpush.msra.mxu0 0.0
        %1749 = vmatpush.msra.mxu0 0.0
        %1750 = vmatpush.msra.mxu0 0.0
        %1751 = vmatpush.msra.mxu0 0.0
        %1752 = vmatpush.msra.mxu0 0.0
        %1753 = vmatpush.msra.mxu0 0.0
        %v1754 = vand.u32 %v1462, 4294901760
        %v1755 = vsub.f32 %v1462, %v1754
        %v1756 = vand.u32 %v1755, 4294901760
        %1757 = vmatpush.msra.mxu0 %v1756
        %v1758 = vand.u32 %v1461, 4294901760
        %v1759 = vsub.f32 %v1461, %v1758
        %v1760 = vand.u32 %v1759, 4294901760
        %1761 = vmatpush.msra.mxu0 %v1760
        %v1762 = vand.u32 %v1629, 4294901760
        %1763 = vmatmul.f32.gmra.mxu0 %v1762
        %v1764 = vpop.f32.mrf.mxu0
        %v1765 = vadd.f32 %v1738, %v1764
        %1766 = vdwg.mxu0
        %1767 = vmatpush.msra.mxu0 0.0
        %1768 = vmatpush.msra.mxu0 0.0
        %1769 = vmatpush.msra.mxu0 0.0
        %1770 = vmatpush.msra.mxu0 0.0
        %1771 = vmatpush.msra.mxu0 0.0
        %1772 = vmatpush.msra.mxu0 0.0
        %1773 = vmatpush.msra.mxu0 0.0
        %1774 = vmatpush.msra.mxu0 0.0
        %1775 = vmatpush.msra.mxu0 0.0
        %1776 = vmatpush.msra.mxu0 0.0
        %1777 = vmatpush.msra.mxu0 0.0
        %1778 = vmatpush.msra.mxu0 0.0
        %1779 = vmatpush.msra.mxu0 0.0
        %1780 = vmatpush.msra.mxu0 0.0
        %v1781 = vand.u32 %v1462, 4294901760
        %1782 = vmatpush.msra.mxu0 %v1781
        %v1783 = vand.u32 %v1461, 4294901760
        %1784 = vmatpush.msra.mxu0 %v1783
        %v1785 = vand.u32 %v1629, 4294901760
        %1786 = vmatmul.f32.gmra.mxu0 %v1785
        %v1787 = vpop.f32.mrf.mxu0
        %v1788 = vadd.f32 %v1765, %v1787
        %1789 = vdwg.mxu0
        %v1790 = vld [vmem:[#allocation19] sm:$0x1]
        %v1792 = vperm.slane %v1790, 0
        %v1794 = vadd.f32 %v1788, %v1792
        %v1795 = vtanh.pop %v1794
        %1796 = vst.msk [vmem:[#allocation2] sm:$0xff] %vm1103, %v1460
        %1797 = vst.msk [vmem:[#allocation3] sm:$0xff] %vm1103, %v1795
        %v1798 = vld [vmem:[%s9] sm:$0xff]
        %v1799 = vld [vmem:[%s9 + $0x8] sm:$0xff]
        %v1800 = vld [vmem:[#allocation4] sm:$0xff]
        %v1801 = vld [vmem:[#allocation20] sm:$0xff]
        %v1802 = vld [vmem:[#allocation20 + $0x8] sm:$0xff]
        %v1803 = vld [vmem:[#allocation20 + $0x10] sm:$0xff]
        %vm1804 = vcmask 195584
        %v1806 = vsel %vm1804, %v1800, 0
        %1808 = vmatpush.msra.mxu0 0.0
        %1809 = vmatpush.msra.mxu0 0.0
        %1810 = vmatpush.msra.mxu0 0.0
        %1811 = vmatpush.msra.mxu0 0.0
        %1812 = vmatpush.msra.mxu0 0.0
        %1813 = vmatpush.msra.mxu0 0.0
        %1814 = vmatpush.msra.mxu0 0.0
        %1815 = vmatpush.msra.mxu0 0.0
        %1816 = vmatpush.msra.mxu0 0.0
        %1817 = vmatpush.msra.mxu0 0.0
        %1818 = vmatpush.msra.mxu0 0.0
        %1819 = vmatpush.msra.mxu0 0.0
        %1820 = vmatpush.msra.mxu0 0.0
        %v1821 = vand.u32 %v1803, 4294901760
        %1822 = vmatpush.msra.mxu0 %v1821
        %v1823 = vand.u32 %v1802, 4294901760
        %1824 = vmatpush.msra.mxu0 %v1823
        %v1825 = vand.u32 %v1801, 4294901760
        %1826 = vmatpush.msra.mxu0 %v1825
        %v1827 = vand.u32 %v1806, 4294901760
        %v1828 = vsub.f32 %v1806, %v1827
        %v1829 = vand.u32 %v1828, 4294901760
        %v1830 = vsub.f32 %v1828, %v1829
        %v1831 = vand.u32 %v1830, 4294901760
        %1832 = vmatmul.f32.gmra.mxu0 %v1831
        %v1833 = vpop.f32.mrf.mxu0
        %v1834 = vadd.f32 0.0, %v1833
        %1835 = vdwg.mxu0
        %1836 = vmatpush.msra.mxu0 0.0
        %1837 = vmatpush.msra.mxu0 0.0
        %1838 = vmatpush.msra.mxu0 0.0
        %1839 = vmatpush.msra.mxu0 0.0
        %1840 = vmatpush.msra.mxu0 0.0
        %1841 = vmatpush.msra.mxu0 0.0
        %1842 = vmatpush.msra.mxu0 0.0
        %1843 = vmatpush.msra.mxu0 0.0
        %1844 = vmatpush.msra.mxu0 0.0
        %1845 = vmatpush.msra.mxu0 0.0
        %1846 = vmatpush.msra.mxu0 0.0
        %1847 = vmatpush.msra.mxu0 0.0
        %1848 = vmatpush.msra.mxu0 0.0
        %v1849 = vand.u32 %v1803, 4294901760
        %v1850 = vsub.f32 %v1803, %v1849
        %v1851 = vand.u32 %v1850, 4294901760
        %v1852 = vsub.f32 %v1850, %v1851
        %v1853 = vand.u32 %v1852, 4294901760
        %1854 = vmatpush.msra.mxu0 %v1853
        %v1855 = vand.u32 %v1802, 4294901760
        %v1856 = vsub.f32 %v1802, %v1855
        %v1857 = vand.u32 %v1856, 4294901760
        %v1858 = vsub.f32 %v1856, %v1857
        %v1859 = vand.u32 %v1858, 4294901760
        %1860 = vmatpush.msra.mxu0 %v1859
        %v1861 = vand.u32 %v1801, 4294901760
        %v1862 = vsub.f32 %v1801, %v1861
        %v1863 = vand.u32 %v1862, 4294901760
        %v1864 = vsub.f32 %v1862, %v1863
        %v1865 = vand.u32 %v1864, 4294901760
        %1866 = vmatpush.msra.mxu0 %v1865
        %v1867 = vand.u32 %v1806, 4294901760
        %1868 = vmatmul.f32.gmra.mxu0 %v1867
        %v1869 = vpop.f32.mrf.mxu0
        %v1870 = vadd.f32 %v1834, %v1869
        %1871 = vdwg.mxu0
        %1872 = vmatpush.msra.mxu0 0.0
        %1873 = vmatpush.msra.mxu0 0.0
        %1874 = vmatpush.msra.mxu0 0.0
        %1875 = vmatpush.msra.mxu0 0.0
        %1876 = vmatpush.msra.mxu0 0.0
        %1877 = vmatpush.msra.mxu0 0.0
        %1878 = vmatpush.msra.mxu0 0.0
        %1879 = vmatpush.msra.mxu0 0.0
        %1880 = vmatpush.msra.mxu0 0.0
        %1881 = vmatpush.msra.mxu0 0.0
        %1882 = vmatpush.msra.mxu0 0.0
        %1883 = vmatpush.msra.mxu0 0.0
        %1884 = vmatpush.msra.mxu0 0.0
        %v1885 = vand.u32 %v1803, 4294901760
        %v1886 = vsub.f32 %v1803, %v1885
        %1887 = vmatpush.msra.mxu0 %v1886
        %v1888 = vand.u32 %v1802, 4294901760
        %v1889 = vsub.f32 %v1802, %v1888
        %1890 = vmatpush.msra.mxu0 %v1889
        %v1891 = vand.u32 %v1801, 4294901760
        %v1892 = vsub.f32 %v1801, %v1891
        %1893 = vmatpush.msra.mxu0 %v1892
        %v1894 = vand.u32 %v1806, 4294901760
        %v1895 = vsub.f32 %v1806, %v1894
        %1896 = vmatmul.f32.gmra.mxu0 %v1895
        %v1897 = vpop.f32.mrf.mxu0
        %v1898 = vadd.f32 %v1870, %v1897
        %1899 = vdwg.mxu0
        %1900 = vmatpush.msra.mxu0 0.0
        %1901 = vmatpush.msra.mxu0 0.0
        %1902 = vmatpush.msra.mxu0 0.0
        %1903 = vmatpush.msra.mxu0 0.0
        %1904 = vmatpush.msra.mxu0 0.0
        %1905 = vmatpush.msra.mxu0 0.0
        %1906 = vmatpush.msra.mxu0 0.0
        %1907 = vmatpush.msra.mxu0 0.0
        %1908 = vmatpush.msra.mxu0 0.0
        %1909 = vmatpush.msra.mxu0 0.0
        %1910 = vmatpush.msra.mxu0 0.0
        %1911 = vmatpush.msra.mxu0 0.0
        %1912 = vmatpush.msra.mxu0 0.0
        %v1913 = vand.u32 %v1803, 4294901760
        %1914 = vmatpush.msra.mxu0 %v1913
        %v1915 = vand.u32 %v1802, 4294901760
        %1916 = vmatpush.msra.mxu0 %v1915
        %v1917 = vand.u32 %v1801, 4294901760
        %1918 = vmatpush.msra.mxu0 %v1917
        %v1919 = vand.u32 %v1806, 4294901760
        %v1920 = vsub.f32 %v1806, %v1919
        %v1921 = vand.u32 %v1920, 4294901760
        %1922 = vmatmul.f32.gmra.mxu0 %v1921
        %v1923 = vpop.f32.mrf.mxu0
        %v1924 = vadd.f32 %v1898, %v1923
        %1925 = vdwg.mxu0
        %1926 = vmatpush.msra.mxu0 0.0
        %1927 = vmatpush.msra.mxu0 0.0
        %1928 = vmatpush.msra.mxu0 0.0
        %1929 = vmatpush.msra.mxu0 0.0
        %1930 = vmatpush.msra.mxu0 0.0
        %1931 = vmatpush.msra.mxu0 0.0
        %1932 = vmatpush.msra.mxu0 0.0
        %1933 = vmatpush.msra.mxu0 0.0
        %1934 = vmatpush.msra.mxu0 0.0
        %1935 = vmatpush.msra.mxu0 0.0
        %1936 = vmatpush.msra.mxu0 0.0
        %1937 = vmatpush.msra.mxu0 0.0
        %1938 = vmatpush.msra.mxu0 0.0
        %v1939 = vand.u32 %v1803, 4294901760
        %v1940 = vsub.f32 %v1803, %v1939
        %v1941 = vand.u32 %v1940, 4294901760
        %1942 = vmatpush.msra.mxu0 %v1941
        %v1943 = vand.u32 %v1802, 4294901760
        %v1944 = vsub.f32 %v1802, %v1943
        %v1945 = vand.u32 %v1944, 4294901760
        %1946 = vmatpush.msra.mxu0 %v1945
        %v1947 = vand.u32 %v1801, 4294901760
        %v1948 = vsub.f32 %v1801, %v1947
        %v1949 = vand.u32 %v1948, 4294901760
        %1950 = vmatpush.msra.mxu0 %v1949
        %v1951 = vand.u32 %v1806, 4294901760
        %1952 = vmatmul.f32.gmra.mxu0 %v1951
        %v1953 = vpop.f32.mrf.mxu0
        %v1954 = vadd.f32 %v1924, %v1953
        %1955 = vdwg.mxu0
        %1956 = vmatpush.msra.mxu0 0.0
        %1957 = vmatpush.msra.mxu0 0.0
        %1958 = vmatpush.msra.mxu0 0.0
        %1959 = vmatpush.msra.mxu0 0.0
        %1960 = vmatpush.msra.mxu0 0.0
        %1961 = vmatpush.msra.mxu0 0.0
        %1962 = vmatpush.msra.mxu0 0.0
        %1963 = vmatpush.msra.mxu0 0.0
        %1964 = vmatpush.msra.mxu0 0.0
        %1965 = vmatpush.msra.mxu0 0.0
        %1966 = vmatpush.msra.mxu0 0.0
        %1967 = vmatpush.msra.mxu0 0.0
        %1968 = vmatpush.msra.mxu0 0.0
        %v1969 = vand.u32 %v1803, 4294901760
        %1970 = vmatpush.msra.mxu0 %v1969
        %v1971 = vand.u32 %v1802, 4294901760
        %1972 = vmatpush.msra.mxu0 %v1971
        %v1973 = vand.u32 %v1801, 4294901760
        %1974 = vmatpush.msra.mxu0 %v1973
        %v1975 = vand.u32 %v1806, 4294901760
        %1976 = vmatmul.f32.gmra.mxu0 %v1975
        %v1977 = vpop.f32.mrf.mxu0
        %v1978 = vadd.f32 %v1954, %v1977
        %1979 = vdwg.mxu0
        %v1981 = vsel %vm1103, %v1795, 0
        %1983 = vmatpush.msra.mxu0 0.0
        %1984 = vmatpush.msra.mxu0 0.0
        %1985 = vmatpush.msra.mxu0 0.0
        %1986 = vmatpush.msra.mxu0 0.0
        %1987 = vmatpush.msra.mxu0 0.0
        %1988 = vmatpush.msra.mxu0 0.0
        %1989 = vmatpush.msra.mxu0 0.0
        %1990 = vmatpush.msra.mxu0 0.0
        %1991 = vmatpush.msra.mxu0 0.0
        %1992 = vmatpush.msra.mxu0 0.0
        %1993 = vmatpush.msra.mxu0 0.0
        %1994 = vmatpush.msra.mxu0 0.0
        %1995 = vmatpush.msra.mxu0 0.0
        %1996 = vmatpush.msra.mxu0 0.0
        %v1997 = vand.u32 %v1799, 4294901760
        %1998 = vmatpush.msra.mxu0 %v1997
        %v1999 = vand.u32 %v1798, 4294901760
        %2000 = vmatpush.msra.mxu0 %v1999
        %v2001 = vand.u32 %v1981, 4294901760
        %v2002 = vsub.f32 %v1981, %v2001
        %v2003 = vand.u32 %v2002, 4294901760
        %v2004 = vsub.f32 %v2002, %v2003
        %v2005 = vand.u32 %v2004, 4294901760
        %2006 = vmatmul.f32.gmra.mxu0 %v2005
        %v2007 = vpop.f32.mrf.mxu0
        %v2008 = vadd.f32 %v1978, %v2007
        %2009 = vdwg.mxu0
        %2010 = vmatpush.msra.mxu0 0.0
        %2011 = vmatpush.msra.mxu0 0.0
        %2012 = vmatpush.msra.mxu0 0.0
        %2013 = vmatpush.msra.mxu0 0.0
        %2014 = vmatpush.msra.mxu0 0.0
        %2015 = vmatpush.msra.mxu0 0.0
        %2016 = vmatpush.msra.mxu0 0.0
        %2017 = vmatpush.msra.mxu0 0.0
        %2018 = vmatpush.msra.mxu0 0.0
        %2019 = vmatpush.msra.mxu0 0.0
        %2020 = vmatpush.msra.mxu0 0.0
        %2021 = vmatpush.msra.mxu0 0.0
        %2022 = vmatpush.msra.mxu0 0.0
        %2023 = vmatpush.msra.mxu0 0.0
        %v2024 = vand.u32 %v1799, 4294901760
        %v2025 = vsub.f32 %v1799, %v2024
        %v2026 = vand.u32 %v2025, 4294901760
        %v2027 = vsub.f32 %v2025, %v2026
        %v2028 = vand.u32 %v2027, 4294901760
        %2029 = vmatpush.msra.mxu0 %v2028
        %v2030 = vand.u32 %v1798, 4294901760
        %v2031 = vsub.f32 %v1798, %v2030
        %v2032 = vand.u32 %v2031, 4294901760
        %v2033 = vsub.f32 %v2031, %v2032
        %v2034 = vand.u32 %v2033, 4294901760
        %2035 = vmatpush.msra.mxu0 %v2034
        %v2036 = vand.u32 %v1981, 4294901760
        %2037 = vmatmul.f32.gmra.mxu0 %v2036
        %v2038 = vpop.f32.mrf.mxu0
        %v2039 = vadd.f32 %v2008, %v2038
        %2040 = vdwg.mxu0
        %2041 = vmatpush.msra.mxu0 0.0
        %2042 = vmatpush.msra.mxu0 0.0
        %2043 = vmatpush.msra.mxu0 0.0
        %2044 = vmatpush.msra.mxu0 0.0
        %2045 = vmatpush.msra.mxu0 0.0
        %2046 = vmatpush.msra.mxu0 0.0
        %2047 = vmatpush.msra.mxu0 0.0
        %2048 = vmatpush.msra.mxu0 0.0
        %2049 = vmatpush.msra.mxu0 0.0
        %2050 = vmatpush.msra.mxu0 0.0
        %2051 = vmatpush.msra.mxu0 0.0
        %2052 = vmatpush.msra.mxu0 0.0
        %2053 = vmatpush.msra.mxu0 0.0
        %2054 = vmatpush.msra.mxu0 0.0
        %v2055 = vand.u32 %v1799, 4294901760
        %v2056 = vsub.f32 %v1799, %v2055
        %2057 = vmatpush.msra.mxu0 %v2056
        %v2058 = vand.u32 %v1798, 4294901760
        %v2059 = vsub.f32 %v1798, %v2058
        %2060 = vmatpush.msra.mxu0 %v2059
        %v2061 = vand.u32 %v1981, 4294901760
        %v2062 = vsub.f32 %v1981, %v2061
        %2063 = vmatmul.f32.gmra.mxu0 %v2062
        %v2064 = vpop.f32.mrf.mxu0
        %v2065 = vadd.f32 %v2039, %v2064
        %2066 = vdwg.mxu0
        %2067 = vmatpush.msra.mxu0 0.0
        %2068 = vmatpush.msra.mxu0 0.0
        %2069 = vmatpush.msra.mxu0 0.0
        %2070 = vmatpush.msra.mxu0 0.0
        %2071 = vmatpush.msra.mxu0 0.0
        %2072 = vmatpush.msra.mxu0 0.0
        %2073 = vmatpush.msra.mxu0 0.0
        %2074 = vmatpush.msra.mxu0 0.0
        %2075 = vmatpush.msra.mxu0 0.0
        %2076 = vmatpush.msra.mxu0 0.0
        %2077 = vmatpush.msra.mxu0 0.0
        %2078 = vmatpush.msra.mxu0 0.0
        %2079 = vmatpush.msra.mxu0 0.0
        %2080 = vmatpush.msra.mxu0 0.0
        %v2081 = vand.u32 %v1799, 4294901760
        %2082 = vmatpush.msra.mxu0 %v2081
        %v2083 = vand.u32 %v1798, 4294901760
        %2084 = vmatpush.msra.mxu0 %v2083
        %v2085 = vand.u32 %v1981, 4294901760
        %v2086 = vsub.f32 %v1981, %v2085
        %v2087 = vand.u32 %v2086, 4294901760
        %2088 = vmatmul.f32.gmra.mxu0 %v2087
        %v2089 = vpop.f32.mrf.mxu0
        %v2090 = vadd.f32 %v2065, %v2089
        %2091 = vdwg.mxu0
        %2092 = vmatpush.msra.mxu0 0.0
        %2093 = vmatpush.msra.mxu0 0.0
        %2094 = vmatpush.msra.mxu0 0.0
        %2095 = vmatpush.msra.mxu0 0.0
        %2096 = vmatpush.msra.mxu0 0.0
        %2097 = vmatpush.msra.mxu0 0.0
        %2098 = vmatpush.msra.mxu0 0.0
        %2099 = vmatpush.msra.mxu0 0.0
        %2100 = vmatpush.msra.mxu0 0.0
        %2101 = vmatpush.msra.mxu0 0.0
        %2102 = vmatpush.msra.mxu0 0.0
        %2103 = vmatpush.msra.mxu0 0.0
        %2104 = vmatpush.msra.mxu0 0.0
        %2105 = vmatpush.msra.mxu0 0.0
        %v2106 = vand.u32 %v1799, 4294901760
        %v2107 = vsub.f32 %v1799, %v2106
        %v2108 = vand.u32 %v2107, 4294901760
        %2109 = vmatpush.msra.mxu0 %v2108
        %v2110 = vand.u32 %v1798, 4294901760
        %v2111 = vsub.f32 %v1798, %v2110
        %v2112 = vand.u32 %v2111, 4294901760
        %2113 = vmatpush.msra.mxu0 %v2112
        %v2114 = vand.u32 %v1981, 4294901760
        %2115 = vmatmul.f32.gmra.mxu0 %v2114
        %v2116 = vpop.f32.mrf.mxu0
        %v2117 = vadd.f32 %v2090, %v2116
        %2118 = vdwg.mxu0
        %2119 = vmatpush.msra.mxu0 0.0
        %2120 = vmatpush.msra.mxu0 0.0
        %2121 = vmatpush.msra.mxu0 0.0
        %2122 = vmatpush.msra.mxu0 0.0
        %2123 = vmatpush.msra.mxu0 0.0
        %2124 = vmatpush.msra.mxu0 0.0
        %2125 = vmatpush.msra.mxu0 0.0
        %2126 = vmatpush.msra.mxu0 0.0
        %2127 = vmatpush.msra.mxu0 0.0
        %2128 = vmatpush.msra.mxu0 0.0
        %2129 = vmatpush.msra.mxu0 0.0
        %2130 = vmatpush.msra.mxu0 0.0
        %2131 = vmatpush.msra.mxu0 0.0
        %2132 = vmatpush.msra.mxu0 0.0
        %v2133 = vand.u32 %v1799, 4294901760
        %2134 = vmatpush.msra.mxu0 %v2133
        %v2135 = vand.u32 %v1798, 4294901760
        %2136 = vmatpush.msra.mxu0 %v2135
        %v2137 = vand.u32 %v1981, 4294901760
        %2138 = vmatmul.f32.gmra.mxu0 %v2137
        %v2139 = vpop.f32.mrf.mxu0
        %v2140 = vadd.f32 %v2117, %v2139
        %2141 = vdwg.mxu0
        %v2142 = vtanh.pop %v2140
        %2143 = vst.msk [vmem:[#allocation4] sm:$0xff] %vm1804, %v2142
        %2145 = vrot.lane.b32.xlu0 %v2142, 120
        %v2146 = vpop.permute.xlu0 %2145
        %v2148 = vadd.f32 %v2142, %v2146
        %2149 = vrot.lane.b32.xlu0 %v2142, 112
        %v2150 = vpop.permute.xlu0 %2149
        %v2152 = vadd.f32 %v2148, %v2150
        %v2153 = vmul.f32 %v2152, 0.33333334
        %2154 = vst.msk [vmem:[%s911] sm:$0xff] %vm932, %v2153
        %v2155 = vld [vmem:[#allocation22] sm:$0x1f]
        %v2157 = vsel %vm932, %v2155, 0
        %2159 = vmatpush.msra.mxu0 0.0
        %2160 = vmatpush.msra.mxu0 0.0
        %2161 = vmatpush.msra.mxu0 0.0
        %2162 = vmatpush.msra.mxu0 0.0
        %2163 = vmatpush.msra.mxu0 0.0
        %2164 = vmatpush.msra.mxu0 0.0
        %2165 = vmatpush.msra.mxu0 0.0
        %2166 = vmatpush.msra.mxu0 0.0
        %2167 = vmatpush.msra.mxu0 0.0
        %2168 = vmatpush.msra.mxu0 0.0
        %2169 = vmatpush.msra.mxu0 0.0
        %2170 = vmatpush.msra.mxu0 0.0
        %2171 = vmatpush.msra.mxu0 0.0
        %2172 = vmatpush.msra.mxu0 0.0
        %2173 = vmatpush.msra.mxu0 0.0
        %v2174 = vand.u32 %v1795, 4294901760
        %2175 = vmatpush.msra.mxu0 %v2174
        %v2176 = vand.u32 %v2157, 4294901760
        %v2177 = vsub.f32 %v2157, %v2176
        %v2178 = vand.u32 %v2177, 4294901760
        %v2179 = vsub.f32 %v2177, %v2178
        %v2180 = vand.u32 %v2179, 4294901760
        %2181 = vmatmul.f32.gmra.mxu0 %v2180
        %v2182 = vpop.f32.mrf.mxu0
        %v2183 = vadd.f32 0.0, %v2182
        %2184 = vdwg.mxu0
        %2185 = vmatpush.msra.mxu0 0.0
        %2186 = vmatpush.msra.mxu0 0.0
        %2187 = vmatpush.msra.mxu0 0.0
        %2188 = vmatpush.msra.mxu0 0.0
        %2189 = vmatpush.msra.mxu0 0.0
        %2190 = vmatpush.msra.mxu0 0.0
        %2191 = vmatpush.msra.mxu0 0.0
        %2192 = vmatpush.msra.mxu0 0.0
        %2193 = vmatpush.msra.mxu0 0.0
        %2194 = vmatpush.msra.mxu0 0.0
        %2195 = vmatpush.msra.mxu0 0.0
        %2196 = vmatpush.msra.mxu0 0.0
        %2197 = vmatpush.msra.mxu0 0.0
        %2198 = vmatpush.msra.mxu0 0.0
        %2199 = vmatpush.msra.mxu0 0.0
        %v2200 = vand.u32 %v1795, 4294901760
        %v2201 = vsub.f32 %v1795, %v2200
        %v2202 = vand.u32 %v2201, 4294901760
        %v2203 = vsub.f32 %v2201, %v2202
        %v2204 = vand.u32 %v2203, 4294901760
        %2205 = vmatpush.msra.mxu0 %v2204
        %v2206 = vand.u32 %v2157, 4294901760
        %2207 = vmatmul.f32.gmra.mxu0 %v2206
        %v2208 = vpop.f32.mrf.mxu0
        %v2209 = vadd.f32 %v2183, %v2208
        %2210 = vdwg.mxu0
        %2211 = vmatpush.msra.mxu0 0.0
        %2212 = vmatpush.msra.mxu0 0.0
        %2213 = vmatpush.msra.mxu0 0.0
        %2214 = vmatpush.msra.mxu0 0.0
        %2215 = vmatpush.msra.mxu0 0.0
        %2216 = vmatpush.msra.mxu0 0.0
        %2217 = vmatpush.msra.mxu0 0.0
        %2218 = vmatpush.msra.mxu0 0.0
        %2219 = vmatpush.msra.mxu0 0.0
        %2220 = vmatpush.msra.mxu0 0.0
        %2221 = vmatpush.msra.mxu0 0.0
        %2222 = vmatpush.msra.mxu0 0.0
        %2223 = vmatpush.msra.mxu0 0.0
        %2224 = vmatpush.msra.mxu0 0.0
        %2225 = vmatpush.msra.mxu0 0.0
        %v2226 = vand.u32 %v1795, 4294901760
        %v2227 = vsub.f32 %v1795, %v2226
        %2228 = vmatpush.msra.mxu0 %v2227
        %v2229 = vand.u32 %v2157, 4294901760
        %v2230 = vsub.f32 %v2157, %v2229
        %2231 = vmatmul.f32.gmra.mxu0 %v2230
        %v2232 = vpop.f32.mrf.mxu0
        %v2233 = vadd.f32 %v2209, %v2232
        %2234 = vdwg.mxu0
        %2235 = vmatpush.msra.mxu0 0.0
        %2236 = vmatpush.msra.mxu0 0.0
        %2237 = vmatpush.msra.mxu0 0.0
        %2238 = vmatpush.msra.mxu0 0.0
        %2239 = vmatpush.msra.mxu0 0.0
        %2240 = vmatpush.msra.mxu0 0.0
        %2241 = vmatpush.msra.mxu0 0.0
        %2242 = vmatpush.msra.mxu0 0.0
        %2243 = vmatpush.msra.mxu0 0.0
        %2244 = vmatpush.msra.mxu0 0.0
        %2245 = vmatpush.msra.mxu0 0.0
        %2246 = vmatpush.msra.mxu0 0.0
        %2247 = vmatpush.msra.mxu0 0.0
        %2248 = vmatpush.msra.mxu0 0.0
        %2249 = vmatpush.msra.mxu0 0.0
        %v2250 = vand.u32 %v1795, 4294901760
        %2251 = vmatpush.msra.mxu0 %v2250
        %v2252 = vand.u32 %v2157, 4294901760
        %v2253 = vsub.f32 %v2157, %v2252
        %v2254 = vand.u32 %v2253, 4294901760
        %2255 = vmatmul.f32.gmra.mxu0 %v2254
        %v2256 = vpop.f32.mrf.mxu0
        %v2257 = vadd.f32 %v2233, %v2256
        %2258 = vdwg.mxu0
        %2259 = vmatpush.msra.mxu0 0.0
        %2260 = vmatpush.msra.mxu0 0.0
        %2261 = vmatpush.msra.mxu0 0.0
        %2262 = vmatpush.msra.mxu0 0.0
        %2263 = vmatpush.msra.mxu0 0.0
        %2264 = vmatpush.msra.mxu0 0.0
        %2265 = vmatpush.msra.mxu0 0.0
        %2266 = vmatpush.msra.mxu0 0.0
        %2267 = vmatpush.msra.mxu0 0.0
        %2268 = vmatpush.msra.mxu0 0.0
        %2269 = vmatpush.msra.mxu0 0.0
        %2270 = vmatpush.msra.mxu0 0.0
        %2271 = vmatpush.msra.mxu0 0.0
        %2272 = vmatpush.msra.mxu0 0.0
        %2273 = vmatpush.msra.mxu0 0.0
        %v2274 = vand.u32 %v1795, 4294901760
        %v2275 = vsub.f32 %v1795, %v2274
        %v2276 = vand.u32 %v2275, 4294901760
        %2277 = vmatpush.msra.mxu0 %v2276
        %v2278 = vand.u32 %v2157, 4294901760
        %2279 = vmatmul.f32.gmra.mxu0 %v2278
        %v2280 = vpop.f32.mrf.mxu0
        %v2281 = vadd.f32 %v2257, %v2280
        %2282 = vdwg.mxu0
        %2283 = vmatpush.msra.mxu0 0.0
        %2284 = vmatpush.msra.mxu0 0.0
        %2285 = vmatpush.msra.mxu0 0.0
        %2286 = vmatpush.msra.mxu0 0.0
        %2287 = vmatpush.msra.mxu0 0.0
        %2288 = vmatpush.msra.mxu0 0.0
        %2289 = vmatpush.msra.mxu0 0.0
        %2290 = vmatpush.msra.mxu0 0.0
        %2291 = vmatpush.msra.mxu0 0.0
        %2292 = vmatpush.msra.mxu0 0.0
        %2293 = vmatpush.msra.mxu0 0.0
        %2294 = vmatpush.msra.mxu0 0.0
        %2295 = vmatpush.msra.mxu0 0.0
        %2296 = vmatpush.msra.mxu0 0.0
        %2297 = vmatpush.msra.mxu0 0.0
        %v2298 = vand.u32 %v1795, 4294901760
        %2299 = vmatpush.msra.mxu0 %v2298
        %v2300 = vand.u32 %v2157, 4294901760
        %2301 = vmatmul.f32.gmra.mxu0 %v2300
        %v2302 = vpop.f32.mrf.mxu0
        %v2303 = vadd.f32 %v2281, %v2302
        %2304 = vdwg.mxu0
        %v2305 = vld [vmem:[#allocation23] sm:$0x1f]
        %v2307 = vsel %vm932, %v2305, 0
        %2309 = vmatpush.msra.mxu0 0.0
        %2310 = vmatpush.msra.mxu0 0.0
        %2311 = vmatpush.msra.mxu0 0.0
        %2312 = vmatpush.msra.mxu0 0.0
        %2313 = vmatpush.msra.mxu0 0.0
        %2314 = vmatpush.msra.mxu0 0.0
        %2315 = vmatpush.msra.mxu0 0.0
        %2316 = vmatpush.msra.mxu0 0.0
        %2317 = vmatpush.msra.mxu0 0.0
        %2318 = vmatpush.msra.mxu0 0.0
        %2319 = vmatpush.msra.mxu0 0.0
        %2320 = vmatpush.msra.mxu0 0.0
        %2321 = vmatpush.msra.mxu0 0.0
        %2322 = vmatpush.msra.mxu0 0.0
        %2323 = vmatpush.msra.mxu0 0.0
        %v2324 = vand.u32 %v1795, 4294901760
        %2325 = vmatpush.msra.mxu0 %v2324
        %v2326 = vand.u32 %v2307, 4294901760
        %v2327 = vsub.f32 %v2307, %v2326
        %v2328 = vand.u32 %v2327, 4294901760
        %v2329 = vsub.f32 %v2327, %v2328
        %v2330 = vand.u32 %v2329, 4294901760
        %2331 = vmatmul.f32.gmra.mxu0 %v2330
        %v2332 = vpop.f32.mrf.mxu0
        %v2333 = vadd.f32 0.0, %v2332
        %2334 = vdwg.mxu0
        %2335 = vmatpush.msra.mxu0 0.0
        %2336 = vmatpush.msra.mxu0 0.0
        %2337 = vmatpush.msra.mxu0 0.0
        %2338 = vmatpush.msra.mxu0 0.0
        %2339 = vmatpush.msra.mxu0 0.0
        %2340 = vmatpush.msra.mxu0 0.0
        %2341 = vmatpush.msra.mxu0 0.0
        %2342 = vmatpush.msra.mxu0 0.0
        %2343 = vmatpush.msra.mxu0 0.0
        %2344 = vmatpush.msra.mxu0 0.0
        %2345 = vmatpush.msra.mxu0 0.0
        %2346 = vmatpush.msra.mxu0 0.0
        %2347 = vmatpush.msra.mxu0 0.0
        %2348 = vmatpush.msra.mxu0 0.0
        %2349 = vmatpush.msra.mxu0 0.0
        %v2350 = vand.u32 %v1795, 4294901760
        %v2351 = vsub.f32 %v1795, %v2350
        %v2352 = vand.u32 %v2351, 4294901760
        %v2353 = vsub.f32 %v2351, %v2352
        %v2354 = vand.u32 %v2353, 4294901760
        %2355 = vmatpush.msra.mxu0 %v2354
        %v2356 = vand.u32 %v2307, 4294901760
        %2357 = vmatmul.f32.gmra.mxu0 %v2356
        %v2358 = vpop.f32.mrf.mxu0
        %v2359 = vadd.f32 %v2333, %v2358
        %2360 = vdwg.mxu0
        %2361 = vmatpush.msra.mxu0 0.0
        %2362 = vmatpush.msra.mxu0 0.0
        %2363 = vmatpush.msra.mxu0 0.0
        %2364 = vmatpush.msra.mxu0 0.0
        %2365 = vmatpush.msra.mxu0 0.0
        %2366 = vmatpush.msra.mxu0 0.0
        %2367 = vmatpush.msra.mxu0 0.0
        %2368 = vmatpush.msra.mxu0 0.0
        %2369 = vmatpush.msra.mxu0 0.0
        %2370 = vmatpush.msra.mxu0 0.0
        %2371 = vmatpush.msra.mxu0 0.0
        %2372 = vmatpush.msra.mxu0 0.0
        %2373 = vmatpush.msra.mxu0 0.0
        %2374 = vmatpush.msra.mxu0 0.0
        %2375 = vmatpush.msra.mxu0 0.0
        %v2376 = vand.u32 %v1795, 4294901760
        %v2377 = vsub.f32 %v1795, %v2376
        %2378 = vmatpush.msra.mxu0 %v2377
        %v2379 = vand.u32 %v2307, 4294901760
        %v2380 = vsub.f32 %v2307, %v2379
        %2381 = vmatmul.f32.gmra.mxu0 %v2380
        %v2382 = vpop.f32.mrf.mxu0
        %v2383 = vadd.f32 %v2359, %v2382
        %2384 = vdwg.mxu0
        %2385 = vmatpush.msra.mxu0 0.0
        %2386 = vmatpush.msra.mxu0 0.0
        %2387 = vmatpush.msra.mxu0 0.0
        %2388 = vmatpush.msra.mxu0 0.0
        %2389 = vmatpush.msra.mxu0 0.0
        %2390 = vmatpush.msra.mxu0 0.0
        %2391 = vmatpush.msra.mxu0 0.0
        %2392 = vmatpush.msra.mxu0 0.0
        %2393 = vmatpush.msra.mxu0 0.0
        %2394 = vmatpush.msra.mxu0 0.0
        %2395 = vmatpush.msra.mxu0 0.0
        %2396 = vmatpush.msra.mxu0 0.0
        %2397 = vmatpush.msra.mxu0 0.0
        %2398 = vmatpush.msra.mxu0 0.0
        %2399 = vmatpush.msra.mxu0 0.0
        %v2400 = vand.u32 %v1795, 4294901760
        %2401 = vmatpush.msra.mxu0 %v2400
        %v2402 = vand.u32 %v2307, 4294901760
        %v2403 = vsub.f32 %v2307, %v2402
        %v2404 = vand.u32 %v2403, 4294901760
        %2405 = vmatmul.f32.gmra.mxu0 %v2404
        %v2406 = vpop.f32.mrf.mxu0
        %v2407 = vadd.f32 %v2383, %v2406
        %2408 = vdwg.mxu0
        %2409 = vmatpush.msra.mxu0 0.0
        %2410 = vmatpush.msra.mxu0 0.0
        %2411 = vmatpush.msra.mxu0 0.0
        %2412 = vmatpush.msra.mxu0 0.0
        %2413 = vmatpush.msra.mxu0 0.0
        %2414 = vmatpush.msra.mxu0 0.0
        %2415 = vmatpush.msra.mxu0 0.0
        %2416 = vmatpush.msra.mxu0 0.0
        %2417 = vmatpush.msra.mxu0 0.0
        %2418 = vmatpush.msra.mxu0 0.0
        %2419 = vmatpush.msra.mxu0 0.0
        %2420 = vmatpush.msra.mxu0 0.0
        %2421 = vmatpush.msra.mxu0 0.0
        %2422 = vmatpush.msra.mxu0 0.0
        %2423 = vmatpush.msra.mxu0 0.0
        %v2424 = vand.u32 %v1795, 4294901760
        %v2425 = vsub.f32 %v1795, %v2424
        %v2426 = vand.u32 %v2425, 4294901760
        %2427 = vmatpush.msra.mxu0 %v2426
        %v2428 = vand.u32 %v2307, 4294901760
        %2429 = vmatmul.f32.gmra.mxu0 %v2428
        %v2430 = vpop.f32.mrf.mxu0
        %v2431 = vadd.f32 %v2407, %v2430
        %2432 = vdwg.mxu0
        %2433 = vmatpush.msra.mxu0 0.0
        %2434 = vmatpush.msra.mxu0 0.0
        %2435 = vmatpush.msra.mxu0 0.0
        %2436 = vmatpush.msra.mxu0 0.0
        %2437 = vmatpush.msra.mxu0 0.0
        %2438 = vmatpush.msra.mxu0 0.0
        %2439 = vmatpush.msra.mxu0 0.0
        %2440 = vmatpush.msra.mxu0 0.0
        %2441 = vmatpush.msra.mxu0 0.0
        %2442 = vmatpush.msra.mxu0 0.0
        %2443 = vmatpush.msra.mxu0 0.0
        %2444 = vmatpush.msra.mxu0 0.0
        %2445 = vmatpush.msra.mxu0 0.0
        %2446 = vmatpush.msra.mxu0 0.0
        %2447 = vmatpush.msra.mxu0 0.0
        %v2448 = vand.u32 %v1795, 4294901760
        %2449 = vmatpush.msra.mxu0 %v2448
        %v2450 = vand.u32 %v2307, 4294901760
        %2451 = vmatmul.f32.gmra.mxu0 %v2450
        %v2452 = vpop.f32.mrf.mxu0
        %v2453 = vadd.f32 %v2431, %v2452
        %2454 = vdwg.mxu0
        %v2456 = vrot.slane %v2303, 1
        %v2457 = vrot.slane %v2303, 2
        %v2458 = vrot.slane %v2303, 3
        %v2459 = vrot.slane %v2303, 4
        %v2460 = vld [vmem:[#allocation25] sm:$0xff]
        %v2461 = vld [vmem:[#allocation25 + $0x8] sm:$0xff]
        %v2462 = vld [vmem:[#allocation25 + $0x10] sm:$0xff]
        %v2463 = vld [vmem:[#allocation25 + $0x18] sm:$0xff]
        %v2464 = vld [vmem:[#allocation25 + $0x20] sm:$0xff]
        %v2465 = vperm.slane %v2303, 0
        %v2466 = vperm.slane %v2456, 0
        %v2467 = vperm.slane %v2457, 0
        %v2468 = vperm.slane %v2458, 0
        %v2469 = vperm.slane %v2459, 0
        %v2475 = vmul.f32 %v2465, %v2460
        %v2476 = vmul.f32 %v2466, %v2461
        %v2477 = vmul.f32 %v2467, %v2462
        %v2478 = vmul.f32 %v2468, %v2463
        %v2479 = vmul.f32 %v2469, %v2464
        %v2480 = vsel %vm1103, %v2475, 0.0
        %2481 = vadd.xlane.f32.xlu0 %v2480
        %v2482 = vpop.xlane.xlu0 %2481
        %v2483 = vsel %vm1103, %v2476, 0.0
        %2484 = vadd.xlane.f32.xlu0 %v2483
        %v2485 = vpop.xlane.xlu0 %2484
        %v2486 = vsel %vm1103, %v2477, 0.0
        %2487 = vadd.xlane.f32.xlu0 %v2486
        %v2488 = vpop.xlane.xlu0 %2487
        %v2489 = vsel %vm1103, %v2478, 0.0
        %2490 = vadd.xlane.f32.xlu0 %v2489
        %v2491 = vpop.xlane.xlu0 %2490
        %v2492 = vsel %vm1103, %v2479, 0.0
        %2493 = vadd.xlane.f32.xlu0 %v2492
        %v2494 = vpop.xlane.xlu0 %2493
        %v2496 = vrot.slane %v2453, 1
        %v2497 = vrot.slane %v2453, 2
        %v2498 = vrot.slane %v2453, 3
        %v2499 = vrot.slane %v2453, 4
        %v2500 = vld [vmem:[#allocation26] sm:$0xff]
        %v2501 = vld [vmem:[#allocation26 + $0x8] sm:$0xff]
        %v2502 = vld [vmem:[#allocation26 + $0x10] sm:$0xff]
        %v2503 = vld [vmem:[#allocation26 + $0x18] sm:$0xff]
        %v2504 = vld [vmem:[#allocation26 + $0x20] sm:$0xff]
        %v2505 = vperm.slane %v2453, 0
        %v2506 = vperm.slane %v2496, 0
        %v2507 = vperm.slane %v2497, 0
        %v2508 = vperm.slane %v2498, 0
        %v2509 = vperm.slane %v2499, 0
        %v2515 = vmul.f32 %v2505, %v2500
        %v2516 = vmul.f32 %v2506, %v2501
        %v2517 = vmul.f32 %v2507, %v2502
        %v2518 = vmul.f32 %v2508, %v2503
        %v2519 = vmul.f32 %v2509, %v2504
        %v2520 = vsel %vm1103, %v2515, 0.0
        %2521 = vadd.xlane.f32.xlu0 %v2520
        %v2522 = vpop.xlane.xlu0 %2521
        %v2523 = vsel %vm1103, %v2516, 0.0
        %2524 = vadd.xlane.f32.xlu0 %v2523
        %v2525 = vpop.xlane.xlu0 %2524
        %v2526 = vsel %vm1103, %v2517, 0.0
        %2527 = vadd.xlane.f32.xlu0 %v2526
        %v2528 = vpop.xlane.xlu0 %2527
        %v2529 = vsel %vm1103, %v2518, 0.0
        %2530 = vadd.xlane.f32.xlu0 %v2529
        %v2531 = vpop.xlane.xlu0 %2530
        %v2532 = vsel %vm1103, %v2519, 0.0
        %2533 = vadd.xlane.f32.xlu0 %v2532
        %v2534 = vpop.xlane.xlu0 %2533
        %v2535 = vsub.f32 %v2482, %v2522
        %v2536 = vsub.f32 %v2485, %v2525
        %v2537 = vsub.f32 %v2488, %v2528
        %v2538 = vsub.f32 %v2491, %v2531
        %v2539 = vsub.f32 %v2494, %v2534
        %v2540 = vld [vmem:[#allocation28] sm:$0x1f]
        %v2542 = vperm.slane %v2540, 0
        %v2543 = vlaneseq
        %v2544 = vshrl.u32 %v2543, 7
        %2546 = vset.pattern.permute.xlu0 %v2544
        %2547 = vperm.xlu0 %2546, %v2542
        %v2548 = vpop.permute.xlu0 %2547
        %v2549 = vperm.slane %v2540, 1
        %v2550 = vlaneseq
        %v2551 = vshrl.u32 %v2550, 7
        %2553 = vset.pattern.permute.xlu0 %v2551
        %2554 = vperm.xlu0 %2553, %v2549
        %v2555 = vpop.permute.xlu0 %2554
        %v2556 = vperm.slane %v2540, 2
        %v2557 = vlaneseq
        %v2558 = vshrl.u32 %v2557, 7
        %2560 = vset.pattern.permute.xlu0 %v2558
        %2561 = vperm.xlu0 %2560, %v2556
        %v2562 = vpop.permute.xlu0 %2561
        %v2563 = vperm.slane %v2540, 3
        %v2564 = vlaneseq
        %v2565 = vshrl.u32 %v2564, 7
        %2567 = vset.pattern.permute.xlu0 %v2565
        %2568 = vperm.xlu0 %2567, %v2563
        %v2569 = vpop.permute.xlu0 %2568
        %v2570 = vperm.slane %v2540, 4
        %v2571 = vlaneseq
        %v2572 = vshrl.u32 %v2571, 7
        %2574 = vset.pattern.permute.xlu0 %v2572
        %2575 = vperm.xlu0 %2574, %v2570
        %v2576 = vpop.permute.xlu0 %2575
        %v2582 = vadd.f32 %v2535, %v2548
        %v2583 = vadd.f32 %v2536, %v2555
        %v2584 = vadd.f32 %v2537, %v2562
        %v2585 = vadd.f32 %v2538, %v2569
        %v2586 = vadd.f32 %v2539, %v2576
        %v2587 = vmul.f32 %v2465, %v2500
        %v2588 = vmul.f32 %v2466, %v2501
        %v2589 = vmul.f32 %v2467, %v2502
        %v2590 = vmul.f32 %v2468, %v2503
        %v2591 = vmul.f32 %v2469, %v2504
        %v2592 = vsel %vm1103, %v2587, 0.0
        %2593 = vadd.xlane.f32.xlu0 %v2592
        %v2594 = vpop.xlane.xlu0 %2593
        %v2595 = vsel %vm1103, %v2588, 0.0
        %2596 = vadd.xlane.f32.xlu0 %v2595
        %v2597 = vpop.xlane.xlu0 %2596
        %v2598 = vsel %vm1103, %v2589, 0.0
        %2599 = vadd.xlane.f32.xlu0 %v2598
        %v2600 = vpop.xlane.xlu0 %2599
        %v2601 = vsel %vm1103, %v2590, 0.0
        %2602 = vadd.xlane.f32.xlu0 %v2601
        %v2603 = vpop.xlane.xlu0 %2602
        %v2604 = vsel %vm1103, %v2591, 0.0
        %2605 = vadd.xlane.f32.xlu0 %v2604
        %v2606 = vpop.xlane.xlu0 %2605
        %v2607 = vmul.f32 %v2505, %v2460
        %v2608 = vmul.f32 %v2506, %v2461
        %v2609 = vmul.f32 %v2507, %v2462
        %v2610 = vmul.f32 %v2508, %v2463
        %v2611 = vmul.f32 %v2509, %v2464
        %v2612 = vsel %vm1103, %v2607, 0.0
        %2613 = vadd.xlane.f32.xlu0 %v2612
        %v2614 = vpop.xlane.xlu0 %2613
        %v2615 = vsel %vm1103, %v2608, 0.0
        %2616 = vadd.xlane.f32.xlu0 %v2615
        %v2617 = vpop.xlane.xlu0 %2616
        %v2618 = vsel %vm1103, %v2609, 0.0
        %2619 = vadd.xlane.f32.xlu0 %v2618
        %v2620 = vpop.xlane.xlu0 %2619
        %v2621 = vsel %vm1103, %v2610, 0.0
        %2622 = vadd.xlane.f32.xlu0 %v2621
        %v2623 = vpop.xlane.xlu0 %2622
        %v2624 = vsel %vm1103, %v2611, 0.0
        %2625 = vadd.xlane.f32.xlu0 %v2624
        %v2626 = vpop.xlane.xlu0 %2625
        %v2627 = vadd.f32 %v2594, %v2614
        %v2628 = vadd.f32 %v2597, %v2617
        %v2629 = vadd.f32 %v2600, %v2620
        %v2630 = vadd.f32 %v2603, %v2623
        %v2631 = vadd.f32 %v2606, %v2626
        %v2632 = vld [vmem:[#allocation29] sm:$0x1f]
        %v2634 = vperm.slane %v2632, 0
        %v2635 = vlaneseq
        %v2636 = vshrl.u32 %v2635, 7
        %2638 = vset.pattern.permute.xlu0 %v2636
        %2639 = vperm.xlu0 %2638, %v2634
        %v2640 = vpop.permute.xlu0 %2639
        %v2641 = vperm.slane %v2632, 1
        %v2642 = vlaneseq
        %v2643 = vshrl.u32 %v2642, 7
        %2645 = vset.pattern.permute.xlu0 %v2643
        %2646 = vperm.xlu0 %2645, %v2641
        %v2647 = vpop.permute.xlu0 %2646
        %v2648 = vperm.slane %v2632, 2
        %v2649 = vlaneseq
        %v2650 = vshrl.u32 %v2649, 7
        %2652 = vset.pattern.permute.xlu0 %v2650
        %2653 = vperm.xlu0 %2652, %v2648
        %v2654 = vpop.permute.xlu0 %2653
        %v2655 = vperm.slane %v2632, 3
        %v2656 = vlaneseq
        %v2657 = vshrl.u32 %v2656, 7
        %2659 = vset.pattern.permute.xlu0 %v2657
        %2660 = vperm.xlu0 %2659, %v2655
        %v2661 = vpop.permute.xlu0 %2660
        %v2662 = vperm.slane %v2632, 4
        %v2663 = vlaneseq
        %v2664 = vshrl.u32 %v2663, 7
        %2666 = vset.pattern.permute.xlu0 %v2664
        %2667 = vperm.xlu0 %2666, %v2662
        %v2668 = vpop.permute.xlu0 %2667
        %v2674 = vadd.f32 %v2627, %v2640
        %v2675 = vadd.f32 %v2628, %v2647
        %v2676 = vadd.f32 %v2629, %v2654
        %v2677 = vadd.f32 %v2630, %v2661
        %v2678 = vadd.f32 %v2631, %v2668
        %v2679 = vld [vmem:[#allocation31] sm:$0xff]
        %v2680 = vld [vmem:[#allocation32] sm:$0xff]
        %2686 = vset.pattern.permute.xlu0 0
        %2687 = vperm.xlu0 %2686, %v2674
        %v2688 = vpop.permute.xlu0 %2687
        %2689 = vset.pattern.permute.xlu0 0
        %2690 = vperm.xlu0 %2689, %v2675
        %v2691 = vpop.permute.xlu0 %2690
        %2692 = vset.pattern.permute.xlu0 0
        %2693 = vperm.xlu0 %2692, %v2676
        %v2694 = vpop.permute.xlu0 %2693
        %2695 = vset.pattern.permute.xlu0 0
        %2696 = vperm.xlu0 %2695, %v2677
        %v2697 = vpop.permute.xlu0 %2696
        %2698 = vset.pattern.permute.xlu0 0
        %2699 = vperm.xlu0 %2698, %v2678
        %v2700 = vpop.permute.xlu0 %2699
        %v2701 = vlaneseq
        %v2702 = vand.u32 %v2701, 127
        %v2703 = vperm.slane %v2688, %v2702
        %v2704 = vperm.slane %v2691, %v2702
        %v2705 = vperm.slane %v2694, %v2702
        %v2706 = vperm.slane %v2697, %v2702
        %v2707 = vperm.slane %v2700, %v2702
        %vm2708 = vcmask 1041409
        %v2709 = vsel %vm2708, %v2704, %v2703
        %vm2710 = vcmask 1042434
        %v2711 = vsel %vm2710, %v2705, %v2709
        %vm2712 = vcmask 1043459
        %v2713 = vsel %vm2712, %v2706, %v2711
        %vm2714 = vcmask 1044484
        %v2715 = vsel %vm2714, %v2707, %v2713
        %vm2716 = vcmask 39936
        %v2718 = vsel %vm2716, %v2680, 0
        %vm2720 = vcmask 1044480
        %v2721 = vsel %vm2720, %v2715, 0
        %2723 = vmatpush.msra.mxu0 0.0
        %2724 = vmatpush.msra.mxu0 0.0
        %2725 = vmatpush.msra.mxu0 0.0
        %2726 = vmatpush.msra.mxu0 0.0
        %2727 = vmatpush.msra.mxu0 0.0
        %2728 = vmatpush.msra.mxu0 0.0
        %2729 = vmatpush.msra.mxu0 0.0
        %2730 = vmatpush.msra.mxu0 0.0
        %2731 = vmatpush.msra.mxu0 0.0
        %2732 = vmatpush.msra.mxu0 0.0
        %2733 = vmatpush.msra.mxu0 0.0
        %2734 = vmatpush.msra.mxu0 0.0
        %2735 = vmatpush.msra.mxu0 0.0
        %2736 = vmatpush.msra.mxu0 0.0
        %2737 = vmatpush.msra.mxu0 0.0
        %v2738 = vand.u32 %v2721, 4294901760
        %2739 = vmatpush.msra.mxu0 %v2738
        %v2740 = vand.u32 %v2718, 4294901760
        %v2741 = vsub.f32 %v2718, %v2740
        %v2742 = vand.u32 %v2741, 4294901760
        %v2743 = vsub.f32 %v2741, %v2742
        %v2744 = vand.u32 %v2743, 4294901760
        %2745 = vmatmul.f32.gmra.mxu0 %v2744
        %v2746 = vpop.f32.mrf.mxu0
        %v2747 = vadd.f32 0.0, %v2746
        %2748 = vdwg.mxu0
        %2749 = vmatpush.msra.mxu0 0.0
        %2750 = vmatpush.msra.mxu0 0.0
        %2751 = vmatpush.msra.mxu0 0.0
        %2752 = vmatpush.msra.mxu0 0.0
        %2753 = vmatpush.msra.mxu0 0.0
        %2754 = vmatpush.msra.mxu0 0.0
        %2755 = vmatpush.msra.mxu0 0.0
        %2756 = vmatpush.msra.mxu0 0.0
        %2757 = vmatpush.msra.mxu0 0.0
        %2758 = vmatpush.msra.mxu0 0.0
        %2759 = vmatpush.msra.mxu0 0.0
        %2760 = vmatpush.msra.mxu0 0.0
        %2761 = vmatpush.msra.mxu0 0.0
        %2762 = vmatpush.msra.mxu0 0.0
        %2763 = vmatpush.msra.mxu0 0.0
        %v2764 = vand.u32 %v2721, 4294901760
        %v2765 = vsub.f32 %v2721, %v2764
        %v2766 = vand.u32 %v2765, 4294901760
        %v2767 = vsub.f32 %v2765, %v2766
        %v2768 = vand.u32 %v2767, 4294901760
        %2769 = vmatpush.msra.mxu0 %v2768
        %v2770 = vand.u32 %v2718, 4294901760
        %2771 = vmatmul.f32.gmra.mxu0 %v2770
        %v2772 = vpop.f32.mrf.mxu0
        %v2773 = vadd.f32 %v2747, %v2772
        %2774 = vdwg.mxu0
        %2775 = vmatpush.msra.mxu0 0.0
        %2776 = vmatpush.msra.mxu0 0.0
        %2777 = vmatpush.msra.mxu0 0.0
        %2778 = vmatpush.msra.mxu0 0.0
        %2779 = vmatpush.msra.mxu0 0.0
        %2780 = vmatpush.msra.mxu0 0.0
        %2781 = vmatpush.msra.mxu0 0.0
        %2782 = vmatpush.msra.mxu0 0.0
        %2783 = vmatpush.msra.mxu0 0.0
        %2784 = vmatpush.msra.mxu0 0.0
        %2785 = vmatpush.msra.mxu0 0.0
        %2786 = vmatpush.msra.mxu0 0.0
        %2787 = vmatpush.msra.mxu0 0.0
        %2788 = vmatpush.msra.mxu0 0.0
        %2789 = vmatpush.msra.mxu0 0.0
        %v2790 = vand.u32 %v2721, 4294901760
        %v2791 = vsub.f32 %v2721, %v2790
        %2792 = vmatpush.msra.mxu0 %v2791
        %v2793 = vand.u32 %v2718, 4294901760
        %v2794 = vsub.f32 %v2718, %v2793
        %2795 = vmatmul.f32.gmra.mxu0 %v2794
        %v2796 = vpop.f32.mrf.mxu0
        %v2797 = vadd.f32 %v2773, %v2796
        %2798 = vdwg.mxu0
        %2799 = vmatpush.msra.mxu0 0.0
        %2800 = vmatpush.msra.mxu0 0.0
        %2801 = vmatpush.msra.mxu0 0.0
        %2802 = vmatpush.msra.mxu0 0.0
        %2803 = vmatpush.msra.mxu0 0.0
        %2804 = vmatpush.msra.mxu0 0.0
        %2805 = vmatpush.msra.mxu0 0.0
        %2806 = vmatpush.msra.mxu0 0.0
        %2807 = vmatpush.msra.mxu0 0.0
        %2808 = vmatpush.msra.mxu0 0.0
        %2809 = vmatpush.msra.mxu0 0.0
        %2810 = vmatpush.msra.mxu0 0.0
        %2811 = vmatpush.msra.mxu0 0.0
        %2812 = vmatpush.msra.mxu0 0.0
        %2813 = vmatpush.msra.mxu0 0.0
        %v2814 = vand.u32 %v2721, 4294901760
        %2815 = vmatpush.msra.mxu0 %v2814
        %v2816 = vand.u32 %v2718, 4294901760
        %v2817 = vsub.f32 %v2718, %v2816
        %v2818 = vand.u32 %v2817, 4294901760
        %2819 = vmatmul.f32.gmra.mxu0 %v2818
        %v2820 = vpop.f32.mrf.mxu0
        %v2821 = vadd.f32 %v2797, %v2820
        %2822 = vdwg.mxu0
        %2823 = vmatpush.msra.mxu0 0.0
        %2824 = vmatpush.msra.mxu0 0.0
        %2825 = vmatpush.msra.mxu0 0.0
        %2826 = vmatpush.msra.mxu0 0.0
        %2827 = vmatpush.msra.mxu0 0.0
        %2828 = vmatpush.msra.mxu0 0.0
        %2829 = vmatpush.msra.mxu0 0.0
        %2830 = vmatpush.msra.mxu0 0.0
        %2831 = vmatpush.msra.mxu0 0.0
        %2832 = vmatpush.msra.mxu0 0.0
        %2833 = vmatpush.msra.mxu0 0.0
        %2834 = vmatpush.msra.mxu0 0.0
        %2835 = vmatpush.msra.mxu0 0.0
        %2836 = vmatpush.msra.mxu0 0.0
        %2837 = vmatpush.msra.mxu0 0.0
        %v2838 = vand.u32 %v2721, 4294901760
        %v2839 = vsub.f32 %v2721, %v2838
        %v2840 = vand.u32 %v2839, 4294901760
        %2841 = vmatpush.msra.mxu0 %v2840
        %v2842 = vand.u32 %v2718, 4294901760
        %2843 = vmatmul.f32.gmra.mxu0 %v2842
        %v2844 = vpop.f32.mrf.mxu0
        %v2845 = vadd.f32 %v2821, %v2844
        %2846 = vdwg.mxu0
        %2847 = vmatpush.msra.mxu0 0.0
        %2848 = vmatpush.msra.mxu0 0.0
        %2849 = vmatpush.msra.mxu0 0.0
        %2850 = vmatpush.msra.mxu0 0.0
        %2851 = vmatpush.msra.mxu0 0.0
        %2852 = vmatpush.msra.mxu0 0.0
        %2853 = vmatpush.msra.mxu0 0.0
        %2854 = vmatpush.msra.mxu0 0.0
        %2855 = vmatpush.msra.mxu0 0.0
        %2856 = vmatpush.msra.mxu0 0.0
        %2857 = vmatpush.msra.mxu0 0.0
        %2858 = vmatpush.msra.mxu0 0.0
        %2859 = vmatpush.msra.mxu0 0.0
        %2860 = vmatpush.msra.mxu0 0.0
        %2861 = vmatpush.msra.mxu0 0.0
        %v2862 = vand.u32 %v2721, 4294901760
        %2863 = vmatpush.msra.mxu0 %v2862
        %v2864 = vand.u32 %v2718, 4294901760
        %2865 = vmatmul.f32.gmra.mxu0 %v2864
        %v2866 = vpop.f32.mrf.mxu0
        %v2867 = vadd.f32 %v2845, %v2866
        %2868 = vdwg.mxu0
        %2874 = vset.pattern.permute.xlu0 0
        %2875 = vperm.xlu0 %2874, %v2582
        %v2876 = vpop.permute.xlu0 %2875
        %2877 = vset.pattern.permute.xlu0 0
        %2878 = vperm.xlu0 %2877, %v2583
        %v2879 = vpop.permute.xlu0 %2878
        %2880 = vset.pattern.permute.xlu0 0
        %2881 = vperm.xlu0 %2880, %v2584
        %v2882 = vpop.permute.xlu0 %2881
        %2883 = vset.pattern.permute.xlu0 0
        %2884 = vperm.xlu0 %2883, %v2585
        %v2885 = vpop.permute.xlu0 %2884
        %2886 = vset.pattern.permute.xlu0 0
        %2887 = vperm.xlu0 %2886, %v2586
        %v2888 = vpop.permute.xlu0 %2887
        %v2889 = vperm.slane %v2876, %v2702
        %v2890 = vperm.slane %v2879, %v2702
        %v2891 = vperm.slane %v2882, %v2702
        %v2892 = vperm.slane %v2885, %v2702
        %v2893 = vperm.slane %v2888, %v2702
        %v2894 = vsel %vm2708, %v2890, %v2889
        %v2895 = vsel %vm2710, %v2891, %v2894
        %v2896 = vsel %vm2712, %v2892, %v2895
        %v2897 = vsel %vm2714, %v2893, %v2896
        %v2899 = vsel %vm2716, %v2679, 0
        %v2901 = vsel %vm2720, %v2897, 0
        %2903 = vmatpush.msra.mxu0 0.0
        %2904 = vmatpush.msra.mxu0 0.0
        %2905 = vmatpush.msra.mxu0 0.0
        %2906 = vmatpush.msra.mxu0 0.0
        %2907 = vmatpush.msra.mxu0 0.0
        %2908 = vmatpush.msra.mxu0 0.0
        %2909 = vmatpush.msra.mxu0 0.0
        %2910 = vmatpush.msra.mxu0 0.0
        %2911 = vmatpush.msra.mxu0 0.0
        %2912 = vmatpush.msra.mxu0 0.0
        %2913 = vmatpush.msra.mxu0 0.0
        %2914 = vmatpush.msra.mxu0 0.0
        %2915 = vmatpush.msra.mxu0 0.0
        %2916 = vmatpush.msra.mxu0 0.0
        %2917 = vmatpush.msra.mxu0 0.0
        %v2918 = vand.u32 %v2901, 4294901760
        %2919 = vmatpush.msra.mxu0 %v2918
        %v2920 = vand.u32 %v2899, 4294901760
        %v2921 = vsub.f32 %v2899, %v2920
        %v2922 = vand.u32 %v2921, 4294901760
        %v2923 = vsub.f32 %v2921, %v2922
        %v2924 = vand.u32 %v2923, 4294901760
        %2925 = vmatmul.f32.gmra.mxu0 %v2924
        %v2926 = vpop.f32.mrf.mxu0
        %v2927 = vadd.f32 %v2867, %v2926
        %2928 = vdwg.mxu0
        %2929 = vmatpush.msra.mxu0 0.0
        %2930 = vmatpush.msra.mxu0 0.0
        %2931 = vmatpush.msra.mxu0 0.0
        %2932 = vmatpush.msra.mxu0 0.0
        %2933 = vmatpush.msra.mxu0 0.0
        %2934 = vmatpush.msra.mxu0 0.0
        %2935 = vmatpush.msra.mxu0 0.0
        %2936 = vmatpush.msra.mxu0 0.0
        %2937 = vmatpush.msra.mxu0 0.0
        %2938 = vmatpush.msra.mxu0 0.0
        %2939 = vmatpush.msra.mxu0 0.0
        %2940 = vmatpush.msra.mxu0 0.0
        %2941 = vmatpush.msra.mxu0 0.0
        %2942 = vmatpush.msra.mxu0 0.0
        %2943 = vmatpush.msra.mxu0 0.0
        %v2944 = vand.u32 %v2901, 4294901760
        %v2945 = vsub.f32 %v2901, %v2944
        %v2946 = vand.u32 %v2945, 4294901760
        %v2947 = vsub.f32 %v2945, %v2946
        %v2948 = vand.u32 %v2947, 4294901760
        %2949 = vmatpush.msra.mxu0 %v2948
        %v2950 = vand.u32 %v2899, 4294901760
        %2951 = vmatmul.f32.gmra.mxu0 %v2950
        %v2952 = vpop.f32.mrf.mxu0
        %v2953 = vadd.f32 %v2927, %v2952
        %2954 = vdwg.mxu0
        %2955 = vmatpush.msra.mxu0 0.0
        %2956 = vmatpush.msra.mxu0 0.0
        %2957 = vmatpush.msra.mxu0 0.0
        %2958 = vmatpush.msra.mxu0 0.0
        %2959 = vmatpush.msra.mxu0 0.0
        %2960 = vmatpush.msra.mxu0 0.0
        %2961 = vmatpush.msra.mxu0 0.0
        %2962 = vmatpush.msra.mxu0 0.0
        %2963 = vmatpush.msra.mxu0 0.0
        %2964 = vmatpush.msra.mxu0 0.0
        %2965 = vmatpush.msra.mxu0 0.0
        %2966 = vmatpush.msra.mxu0 0.0
        %2967 = vmatpush.msra.mxu0 0.0
        %2968 = vmatpush.msra.mxu0 0.0
        %2969 = vmatpush.msra.mxu0 0.0
        %v2970 = vand.u32 %v2901, 4294901760
        %v2971 = vsub.f32 %v2901, %v2970
        %2972 = vmatpush.msra.mxu0 %v2971
        %v2973 = vand.u32 %v2899, 4294901760
        %v2974 = vsub.f32 %v2899, %v2973
        %2975 = vmatmul.f32.gmra.mxu0 %v2974
        %v2976 = vpop.f32.mrf.mxu0
        %v2977 = vadd.f32 %v2953, %v2976
        %2978 = vdwg.mxu0
        %2979 = vmatpush.msra.mxu0 0.0
        %2980 = vmatpush.msra.mxu0 0.0
        %2981 = vmatpush.msra.mxu0 0.0
        %2982 = vmatpush.msra.mxu0 0.0
        %2983 = vmatpush.msra.mxu0 0.0
        %2984 = vmatpush.msra.mxu0 0.0
        %2985 = vmatpush.msra.mxu0 0.0
        %2986 = vmatpush.msra.mxu0 0.0
        %2987 = vmatpush.msra.mxu0 0.0
        %2988 = vmatpush.msra.mxu0 0.0
        %2989 = vmatpush.msra.mxu0 0.0
        %2990 = vmatpush.msra.mxu0 0.0
        %2991 = vmatpush.msra.mxu0 0.0
        %2992 = vmatpush.msra.mxu0 0.0
        %2993 = vmatpush.msra.mxu0 0.0
        %v2994 = vand.u32 %v2901, 4294901760
        %2995 = vmatpush.msra.mxu0 %v2994
        %v2996 = vand.u32 %v2899, 4294901760
        %v2997 = vsub.f32 %v2899, %v2996
        %v2998 = vand.u32 %v2997, 4294901760
        %2999 = vmatmul.f32.gmra.mxu0 %v2998
        %v3000 = vpop.f32.mrf.mxu0
        %v3001 = vadd.f32 %v2977, %v3000
        %3002 = vdwg.mxu0
        %3003 = vmatpush.msra.mxu0 0.0
        %3004 = vmatpush.msra.mxu0 0.0
        %3005 = vmatpush.msra.mxu0 0.0
        %3006 = vmatpush.msra.mxu0 0.0
        %3007 = vmatpush.msra.mxu0 0.0
        %3008 = vmatpush.msra.mxu0 0.0
        %3009 = vmatpush.msra.mxu0 0.0
        %3010 = vmatpush.msra.mxu0 0.0
        %3011 = vmatpush.msra.mxu0 0.0
        %3012 = vmatpush.msra.mxu0 0.0
        %3013 = vmatpush.msra.mxu0 0.0
        %3014 = vmatpush.msra.mxu0 0.0
        %3015 = vmatpush.msra.mxu0 0.0
        %3016 = vmatpush.msra.mxu0 0.0
        %3017 = vmatpush.msra.mxu0 0.0
        %v3018 = vand.u32 %v2901, 4294901760
        %v3019 = vsub.f32 %v2901, %v3018
        %v3020 = vand.u32 %v3019, 4294901760
        %3021 = vmatpush.msra.mxu0 %v3020
        %v3022 = vand.u32 %v2899, 4294901760
        %3023 = vmatmul.f32.gmra.mxu0 %v3022
        %v3024 = vpop.f32.mrf.mxu0
        %v3025 = vadd.f32 %v3001, %v3024
        %3026 = vdwg.mxu0
        %3027 = vmatpush.msra.mxu0 0.0
        %3028 = vmatpush.msra.mxu0 0.0
        %3029 = vmatpush.msra.mxu0 0.0
        %3030 = vmatpush.msra.mxu0 0.0
        %3031 = vmatpush.msra.mxu0 0.0
        %3032 = vmatpush.msra.mxu0 0.0
        %3033 = vmatpush.msra.mxu0 0.0
        %3034 = vmatpush.msra.mxu0 0.0
        %3035 = vmatpush.msra.mxu0 0.0
        %3036 = vmatpush.msra.mxu0 0.0
        %3037 = vmatpush.msra.mxu0 0.0
        %3038 = vmatpush.msra.mxu0 0.0
        %3039 = vmatpush.msra.mxu0 0.0
        %3040 = vmatpush.msra.mxu0 0.0
        %3041 = vmatpush.msra.mxu0 0.0
        %v3042 = vand.u32 %v2901, 4294901760
        %3043 = vmatpush.msra.mxu0 %v3042
        %v3044 = vand.u32 %v2899, 4294901760
        %3045 = vmatmul.f32.gmra.mxu0 %v3044
        %v3046 = vpop.f32.mrf.mxu0
        %v3047 = vadd.f32 %v3025, %v3046
        %3048 = vdwg.mxu0
        %3049 = vst.msk [vmem:[%s918] sm:$0xff] %vm932, %v3047
        %s3050 = sand.u32 %s462, 1
        %s3051 = scalar_lea.sflag [#allocation7], %s3050
        %s3052 = sand.u32 %s462, 1
        %s3053 = smul.addr %s3052, 8
        %s3054 = scalar_lea.vmem [#allocation34], %s3053
        %s3055 = sand.u32 %s488, 1
        %s3056 = scalar_lea.sflag [#allocation36], %s3055
        %s3057 = sand.u32 %s488, 1
        %s3058 = smul.addr %s3057, 8
        %s3059 = scalar_lea.vmem [#allocation35], %s3058
        // Predicated region
        $region173: #{_lambda_.1} parent=95 // pred_check
          %p3060 = pneg %p472
        $region174: #{_lambda_.1} parent=95 // pred_check_branch
          %3062 = sbr.rel (%p3060) target = $region176
        $region175: #{_lambda_.1} parent=95 // pred_region
          %3064 = vsyncadd %s3051, 0
          %s3065 = smul.addr %s50, 8
          %s3066 = scalar_lea.hbm %s19, %s3065
          %s3068 = sshll.u32 %s3054, 4
          %s3069 = int_to_ptr.vmem [resolvable:$true] %s3068
          %s3070 = sshll.u32 %s3066, 4
          %s3071 = int_to_ptr.hbm [resolvable:$true] %s3070
          %3073 = dma.vmem_to_hbm [thread:$0]  %s3069, 128, %s3071, %s3051
        $region176: #{_lambda_.1} parent=95 // pred_fallthru
          _
        // Predicated region
        $region177: #{_lambda_.1} parent=95 // pred_check
          %p3074 = pneg %p498
        $region178: #{_lambda_.1} parent=95 // pred_check_branch
          %3076 = sbr.rel (%p3074) target = $region180
        $region179: #{_lambda_.1} parent=95 // pred_region
          %3078 = vsyncadd %s3056, 0
          %s3079 = smul.addr %s50, 8
          %s3080 = scalar_lea.hbm %s20, %s3079
          %s3082 = sshll.u32 %s3059, 4
          %s3083 = int_to_ptr.vmem [resolvable:$true] %s3082
          %s3084 = sshll.u32 %s3080, 4
          %s3085 = int_to_ptr.hbm [resolvable:$true] %s3084
          %3087 = dma.vmem_to_hbm [thread:$0]  %s3083, 128, %s3085, %s3056
        $region180: #{_lambda_.1} parent=95 // pred_fallthru
          _
      $region96: #{_lambda_.1} parent=5 // pred_fallthru
        _
      %p3088 = scmp.le.s32.totalorder 2, %s45
      // Predicated region
      $region181: #{_lambda_.1} parent=5 // pred_check
        %p3089 = pneg %p3088
      $region182: #{_lambda_.1} parent=5 // pred_check_branch
        %3091 = sbr.rel (%p3089) target = $region184
      $region183: #{_lambda_.1} parent=5 // pred_region
        %s3092 = ssub.s32 %s45, 2
        // Predicated region
        $region185: #{_lambda_.1} parent=183 // pred_check
          %p3093 = pneg %p478
        $region186: #{_lambda_.1} parent=183 // pred_check_branch
          %3095 = sbr.rel (%p3093) target = $region188
        $region187: #{_lambda_.1} parent=183 // pred_region
          %s3096 = sand.u32 %s463, 1
          %s3097 = scalar_lea.sflag [#allocation7], %s3096
          %s3098 = sand.u32 %s463, 1
          %s3099 = smul.addr %s3098, 8
          %s3100 = scalar_lea.vmem [#allocation34], %s3099
          %3102 = dma.done %s3097, 128
        $region188: #{_lambda_.1} parent=183 // pred_fallthru
          _
        // Predicated region
        $region189: #{_lambda_.1} parent=183 // pred_check
          %p3103 = pneg %p504
        $region190: #{_lambda_.1} parent=183 // pred_check_branch
          %3105 = sbr.rel (%p3103) target = $region192
        $region191: #{_lambda_.1} parent=183 // pred_region
          %s3106 = sand.u32 %s489, 1
          %s3107 = scalar_lea.sflag [#allocation36], %s3106
          %s3108 = sand.u32 %s489, 1
          %s3109 = smul.addr %s3108, 8
          %s3110 = scalar_lea.vmem [#allocation35], %s3109
          %3112 = dma.done %s3107, 128
        $region192: #{_lambda_.1} parent=183 // pred_fallthru
          _
      $region184: #{_lambda_.1} parent=5 // pred_fallthru
        _
    $region6: #{_lambda_.1} parent=1 // loop_footer
      %s49 = sadd.s32 1, %s45
    $region7: #{_lambda_.1} parent=1 // loop_footer_branch
      %44 = sbr.rel target = $region3
    $region8: #{_lambda_.1} parent=1 // loop_exit
      _
    %3113 = vsyncpa [#allocation6], 1
    %s3114 = scalar_lea.sflag [#allocation6], 1
    %3115 = vsyncpa %s3114, 1
    %3116 = vsyncpa [#allocation9], 1
    %3117 = vsyncpa [#allocation12], 1
    %3118 = vsyncpa [#allocation15], 1
    %3119 = vsyncpa [#allocation18], 1
    %3120 = vsyncpa [#allocation21], 1
    %3121 = vsyncpa [#allocation24], 1
    %3122 = vsyncpa [#allocation27], 1
    %3123 = vsyncpa [#allocation30], 1
    %3124 = vsyncpa [#allocation33], 1
    %3125 = vsyncpa [#allocation7], 1
    %s3126 = scalar_lea.sflag [#allocation7], 1
    %3127 = vsyncpa %s3126, 1
    %3128 = vsyncpa [#allocation36], 1
    %s3129 = scalar_lea.sflag [#allocation36], 1
    %3130 = vsyncpa %s3129, 1

</llo_original>
